<compile_context>
chip_gen: v7x
topology: tpu7x:2x2x1
jax: 0.10.0
libtpu: 0.0.40
codegen_flags: <defaults>
</compile_context>

<pallas_src>
import functools

import numpy as np
import jax
import jax.numpy as jnp
from jax import lax
from jax.experimental import pallas as pl
from jax.experimental.pallas import tpu as pltpu

EPS = 1e-5  # nn.LayerNorm default


def _round_up(n, m):
    return ((n + m - 1) // m) * m


@functools.lru_cache(maxsize=1)
def _tpu_vmem_capacity():
    try:
        return int(getattr(pltpu.get_tpu_info(), "vmem_capacity_bytes",
                           128 * 1024 * 1024))
    except Exception:
        return None


def _vmem_limit_bytes():
    cap = _tpu_vmem_capacity()
    if cap is None:
        return 64 * 1024 * 1024                 # conservative: fits every chip
    return min(100 * 1024 * 1024, (cap * 3) // 4)   # v7x: 48 MiB, v5e/v6e: 100 MiB


def _row_targets():
    cap = _tpu_vmem_capacity()
    big = cap is not None and cap >= 100 * 1024 * 1024
    return (512 if big else 256), (1024 if big else 256)   # (attn rows, mlp rows)


def _resident(shape, index_map):
    """Constant-index operand: resident across the grid -> single buffer (saves VMEM)."""
    try:
        return pl.BlockSpec(shape, index_map, pipeline_mode=pl.Buffered(1))
    except TypeError:          # older BlockSpec without pipeline_mode
        return pl.BlockSpec(shape, index_map)


def _pick_wr(n_wrows, rows_per_wrow, target_rows, batch):
    """Window-rows per grid step: biggest divisor of n_wrows under the row target,
    while keeping the total grid >= 2 so ('parallel', ...) can use both v7x cores."""
    divisors = [d for d in range(1, n_wrows + 1) if n_wrows % d == 0]
    fit = [d for d in divisors if d * rows_per_wrow <= max(target_rows, rows_per_wrow)]
    wr = max(fit)
    while wr > 1 and batch * (n_wrows // wr) < 2:
        wr = max(d for d in divisors if d < wr)
    return wr


# ------------------- Kernel 1: fused LN1 + window partition + cross-attn + residual ----------


def _attn_kernel(nh, scale, ws, WR, H, W, need_mask,
                 x_ref, y_ref,
                 g1x_ref, b1x_ref, g1y_ref, b1y_ref,
                 wq_ref, bq_ref, wkv_ref, bkv_ref, wp_ref, bp_ref, bias_ref,
                 o_ref):
    _, rows_h, Wp, C = x_ref.shape          # rows_h = WR * ws
    WC = Wp // ws
    WB = WR * WC                            # windows handled this step
    N = ws * ws
    rows = WB * N
    hd = C // nh
    bf = jnp.bfloat16

    def ln(t_ref, g_ref, b_ref):
        t = t_ref[0].astype(jnp.float32)    # (rows_h, Wp, C)
        mu = jnp.mean(t, axis=-1, keepdims=True)
        var = jnp.mean((t - mu) ** 2, axis=-1, keepdims=True)
        return (t - mu) * lax.rsqrt(var + EPS) * g_ref[...] + b_ref[...]

    xn = ln(x_ref, g1x_ref, b1x_ref)
    yn = ln(y_ref, g1y_ref, b1y_ref)

    if need_mask:
        # Reference zero-pads AFTER LayerNorm: padded tokens must enter the projections
        # as exact zeros (their k/v become pure bias), so re-zero them here.
        g = pl.program_id(1)
        hi = lax.broadcasted_iota(jnp.int32, (rows_h, Wp, 1), 0) + g * rows_h
        wi = lax.broadcasted_iota(jnp.int32, (rows_h, Wp, 1), 1)
        keep = (hi < H) & (wi < W)
        xn = jnp.where(keep, xn, 0.0)
        yn = jnp.where(keep, yn, 0.0)

    xn = xn.astype(bf)
    yn = yn.astype(bf)

    # ---- window partition entirely in VMEM/vregs (no HBM round-trip) ----
    def to_windows(z):                      # (rows_h, Wp, C) -> (rows, C), window-major
        parts = []
        for r in range(WR):
            zr = z[r * ws:(r + 1) * ws]     # (ws, Wp, C)
            for c in range(WC):
                parts.append(zr[:, c * ws:(c + 1) * ws, :].reshape(N, C))
        return jnp.concatenate(parts, axis=0)

    xw = to_windows(xn)
    yw = to_windows(yn)

    # Fused projections (bf16 in, f32 accumulate); K and V share one (C, 2C) matmul.
    q = jnp.dot(xw, wq_ref[...], preferred_element_type=jnp.float32) + bq_ref[...]
    kv = jnp.dot(yw, wkv_ref[...], preferred_element_type=jnp.float32) + bkv_ref[...]
    qb = q.reshape(WB, N, C).astype(bf)
    kb = kv[:, :C].reshape(WB, N, C).astype(bf)
    vb = kv[:, C:].reshape(WB, N, C).astype(bf)

    # Per-head, window-batched score / PV matmuls; merged with a single lane concat.
    # TODO(synk): fold heads into the matmul batch dim (2-batch-dim dot_general) once the
    # Mosaic lowering handles it without an explicit sublane transpose.
    outs = []
    for h in range(nh):
        sl = slice(h * hd, (h + 1) * hd)
        s = jnp.einsum('wqd,wkd->wqk', qb[..., sl], kb[..., sl],
                       preferred_element_type=jnp.float32) * scale
        s = s + bias_ref[h]                 # relative position bias, broadcast over WB
        s = s - jnp.max(s, axis=-1, keepdims=True)
        e = jnp.exp(s)
        p = e * pl.reciprocal(jnp.sum(e, axis=-1, keepdims=True), approx=True)
        outs.append(jnp.einsum('wqk,wkd->wqd', p.astype(bf), vb[..., sl],
                               preferred_element_type=jnp.float32))
    merged = jnp.concatenate(outs, axis=-1).reshape(rows, C).astype(bf)

    proj = jnp.dot(merged, wp_ref[...], preferred_element_type=jnp.float32) + bp_ref[...]

    # ---- window reverse in VMEM + fused residual (shortcut = the x block itself) ----
    ow = proj.astype(bf).reshape(WB, ws, ws, C)
    row_slabs = []
    for r in range(WR):
        row_slabs.append(jnp.concatenate([ow[r * WC + c] for c in range(WC)], axis=1))
    attn_sp = jnp.concatenate(row_slabs, axis=0)        # (rows_h, Wp, C)

    o_ref[0] = (x_ref[0].astype(jnp.float32)
                + attn_sp.astype(jnp.float32)).astype(o_ref.dtype)


def cross_window_attention(x4, y4, params, num_heads, ws, H, W, target_rows):
    B, Hp, Wp, C = x4.shape
    n_wrows = Hp // ws
    need_mask = (Hp != H) or (Wp != W)
    WR = _pick_wr(n_wrows, ws * Wp, target_rows, B)
    G = n_wrows // WR
    rows_h = WR * ws
    N = ws * ws
    scale = float((C // num_heads) ** -0.5)
    bf = jnp.bfloat16

    wkv = jnp.concatenate([params["wk_y"], params["wv_y"]], axis=1).astype(bf)
    bkv = jnp.concatenate([params["bk_y"], params["bv_y"]], axis=0).reshape(1, 2 * C)

    kern = functools.partial(_attn_kernel, num_heads, scale, ws, WR, H, W, need_mask)
    blk = lambda b, g: (b, g, 0, 0)
    c2 = lambda b, g: (0, 0)
    c3 = lambda b, g: (0, 0, 0)

    return pl.pallas_call(
        kern,
        out_shape=jax.ShapeDtypeStruct((B, Hp, Wp, C), jnp.bfloat16),
        grid=(B, G),
        in_specs=[
            pl.BlockSpec((1, rows_h, Wp, C), blk),                 # x (shortcut + LN input)
            pl.BlockSpec((1, rows_h, Wp, C), blk),                 # y
            _resident((1, C), c2), _resident((1, C), c2),          # g1x, b1x
            _resident((1, C), c2), _resident((1, C), c2),          # g1y, b1y
            _resident((C, C), c2), _resident((1, C), c2),          # wq, bq
            _resident((C, 2 * C), c2), _resident((1, 2 * C), c2),  # wkv, bkv
            _resident((C, C), c2), _resident((1, C), c2),          # wp, bp
            _resident((num_heads, N, N), c3),                      # rel pos bias
        ],
        out_specs=pl.BlockSpec((1, rows_h, Wp, C), blk),
        compiler_params=pltpu.CompilerParams(
            dimension_semantics=("parallel", "parallel"),
            vmem_limit_bytes=_vmem_limit_bytes()),
    )(x4, y4,
      params["g1x"].reshape(1, C), params["b1x"].reshape(1, C),
      params["g1y"].reshape(1, C), params["b1y"].reshape(1, C),
      params["wq_x"].astype(bf), params["bq_x"].reshape(1, C),
      wkv, bkv,
      params["wp"].astype(bf), params["bp"].reshape(1, C),
      params["rel_bias"])


# ------------------- Kernel 2: LayerNorm2 + MLP + residual (single bf16 activation input) ----


def _mlp_kernel(x1_ref, g2_ref, b2_ref, w1_ref, b1_ref, w2_ref, b2m_ref, o_ref):
    x1 = x1_ref[...].astype(jnp.float32)                 # x1 = shortcut + attn (bf16 in)
    mu = jnp.mean(x1, axis=-1, keepdims=True)
    var = jnp.mean((x1 - mu) ** 2, axis=-1, keepdims=True)
    xn = ((x1 - mu) * lax.rsqrt(var + EPS) * g2_ref[...] + b2_ref[...]).astype(jnp.bfloat16)
    h = jnp.dot(xn, w1_ref[...], preferred_element_type=jnp.float32) + b1_ref[...]
    # nn.GELU default is exact erf; approximate='tanh' would free VALU via EUP but breaks
    # strict parity with the PyTorch reference, so keep exact.
    h = jax.nn.gelu(h, approximate=False).astype(jnp.bfloat16)
    y = jnp.dot(h, w2_ref[...], preferred_element_type=jnp.float32) + b2m_ref[...]
    o_ref[...] = (x1 + y).astype(o_ref.dtype)


def mlp_residual(x1_2d, params, target_rows):
    R, C = x1_2d.shape
    hidden = params["w1"].shape[1]
    br = min(target_rows, _round_up(R, 8))
    if R > 8 and _round_up(R, br) // br < 2:          # keep >= 2 grid steps (v7x dual TC)
        br = max(8, _round_up(pl.cdiv(R, 2), 8))
    Rp = _round_up(R, br)
    xp = jnp.pad(x1_2d, ((0, Rp - R), (0, 0))) if Rp != R else x1_2d
    c2 = lambda i: (0, 0)
    out = pl.pallas_call(
        _mlp_kernel,
        out_shape=jax.ShapeDtypeStruct((Rp, C), jnp.float32),
        grid=(Rp // br,),
        in_specs=[
            pl.BlockSpec((br, C), lambda i: (i, 0)),
            _resident((1, C), c2), _resident((1, C), c2),          # g2, b2
            _resident((C, hidden), c2), _resident((1, hidden), c2),  # w1, b1
            _resident((hidden, C), c2), _resident((1, C), c2),     # w2, b2mlp
        ],
        out_specs=pl.BlockSpec((br, C), lambda i: (i, 0)),
        compiler_params=pltpu.CompilerParams(
            dimension_semantics=("parallel",),
            vmem_limit_bytes=_vmem_limit_bytes()),
    )(xp,
      params["g2"].reshape(1, C), params["b2"].reshape(1, C),
      params["w1"].astype(jnp.bfloat16), params["b1"].reshape(1, hidden),
      params["w2"].astype(jnp.bfloat16), params["b2mlp"].reshape(1, C))
    return out[:R] if Rp != R else out


# ------------------- block wrapper ------------------------------------------------------------


def cross_swin_block(x, y, params, H, W, window_size, num_heads):
    B, L, C = x.shape
    assert x.shape == y.shape and L == H * W
    ws = window_size
    pad_r = (ws - W % ws) % ws
    pad_b = (ws - H % ws) % ws
    Hp, Wp = H + pad_b, W + pad_r
    attn_rows, mlp_rows = _row_targets()

    x4 = x.reshape(B, H, W, C)
    y4 = y.reshape(B, H, W, C)
    if pad_r or pad_b:
        # pad + downcast in one XLA pass; padded tokens are re-zeroed after the in-kernel
        # LayerNorm so semantics match the reference (which pads AFTER norm).
        x4 = jnp.pad(x4.astype(jnp.bfloat16), ((0, 0), (0, pad_b), (0, pad_r), (0, 0)))
        y4 = jnp.pad(y4.astype(jnp.bfloat16), ((0, 0), (0, pad_b), (0, pad_r), (0, 0)))

    # Kernel 1: x1 = x + attn(LN(x), LN(y)) directly in (B, Hp, Wp, C) layout (bf16).
    x1 = cross_window_attention(x4, y4, params, num_heads, ws, H, W, attn_rows)
    if pad_r or pad_b:
        x1 = x1[:, :H, :W, :]

    # Kernel 2: out = x1 + MLP(LN(x1)).
    out = mlp_residual(x1.reshape(B * L, C), params, mlp_rows)
    return out.reshape(B, L, C)


# ------------------- deterministic parameter init ---------------------------------------------


def init_params(key, dim, num_heads, window_size, mlp_ratio):
    ws = window_size
    hidden = int(dim * mlp_ratio)
    keys = jax.random.split(key, 17)
    nrm = lambda k, shape, s=0.02: jax.random.normal(k, shape, jnp.float32) * s

    # Linear weights stored pre-transposed so out = x @ W + b  (torch: x @ weight.T + bias)
    wqkv_x = nrm(keys[0], (dim, 3 * dim)); bqkv_x = nrm(keys[1], (3 * dim,))
    wqkv_y = nrm(keys[2], (dim, 3 * dim)); bqkv_y = nrm(keys[3], (3 * dim,))
    wp = nrm(keys[4], (dim, dim));         bp = nrm(keys[5], (dim,))
    w1 = nrm(keys[6], (dim, hidden));      b1 = nrm(keys[7], (hidden,))
    w2 = nrm(keys[8], (hidden, dim));      b2mlp = nrm(keys[9], (dim,))
    table = nrm(keys[10], ((2 * ws - 1) ** 2, num_heads))

    # relative_position_index (static, same construction as Swin WindowAttention)
    coords = np.stack(np.meshgrid(np.arange(ws), np.arange(ws), indexing="ij"))
    cf = coords.reshape(2, -1)
    rel = (cf[:, :, None] - cf[:, None, :]).transpose(1, 2, 0).astype(np.int64)
    rel[:, :, 0] += ws - 1
    rel[:, :, 1] += ws - 1
    rel[:, :, 0] *= 2 * ws - 1
    idx = rel.sum(-1)                                            # (N, N)
    N = ws * ws
    rel_bias = table[idx.reshape(-1)].reshape(N, N, num_heads).transpose(2, 0, 1)  # (nh,N,N)

    return dict(
        g1x=1.0 + nrm(keys[11], (dim,), 0.1), b1x=nrm(keys[12], (dim,), 0.1),
        g1y=1.0 + nrm(keys[13], (dim,), 0.1), b1y=nrm(keys[14], (dim,), 0.1),
        g2=1.0 + nrm(keys[15], (dim,), 0.1),  b2=nrm(keys[16], (dim,), 0.1),
        # only q(x), k(y), v(y) are actually used by the forward pass
        wq_x=wqkv_x[:, :dim],           bq_x=bqkv_x[:dim],
        wk_y=wqkv_y[:, dim:2 * dim],    bk_y=bqkv_y[dim:2 * dim],
        wv_y=wqkv_y[:, 2 * dim:],       bv_y=bqkv_y[2 * dim:],
        wp=wp, bp=bp, w1=w1, b1=b1, w2=w2, b2mlp=b2mlp,
        rel_bias=jnp.asarray(rel_bias),
    )


# ------------------- pure-JAX reference (for verification) ------------------------------------


def window_partition(x, ws):
    B, H, W, C = x.shape
    x = x.reshape(B, H // ws, ws, W // ws, ws, C)
    return x.transpose(0, 1, 3, 2, 4, 5).reshape(-1, ws, ws, C)


def window_reverse(windows, ws, H, W):
    B = windows.shape[0] // (H * W // ws // ws)
    x = windows.reshape(B, H // ws, W // ws, ws, ws, -1)
    return x.transpose(0, 1, 3, 2, 4, 5).reshape(B, H, W, -1)


def reference_forward(x, y, params, H, W, ws, num_heads):
    B, L, C = x.shape

    def ln(t, g, b):
        mu = t.mean(-1, keepdims=True)
        var = ((t - mu) ** 2).mean(-1, keepdims=True)
        return (t - mu) / jnp.sqrt(var + EPS) * g + b

    shortcut = x
    xn = ln(x, params["g1x"], params["b1x"]).reshape(B, H, W, C)
    yn = ln(y, params["g1y"], params["b1y"]).reshape(B, H, W, C)
    pad_r = (ws - W % ws) % ws
    pad_b = (ws - H % ws) % ws
    xn = jnp.pad(xn, ((0, 0), (0, pad_b), (0, pad_r), (0, 0)))
    yn = jnp.pad(yn, ((0, 0), (0, pad_b), (0, pad_r), (0, 0)))
    Hp, Wp = H + pad_b, W + pad_r
    N = ws * ws
    xw = window_partition(xn, ws).reshape(-1, N, C)
    yw = window_partition(yn, ws).reshape(-1, N, C)
    hd = C // num_heads
    scale = hd ** -0.5
    q = xw @ params["wq_x"] + params["bq_x"]
    k = yw @ params["wk_y"] + params["bk_y"]
    v = yw @ params["wv_y"] + params["bv_y"]
    Bn = xw.shape[0]
    q = q.reshape(Bn, N, num_heads, hd).transpose(0, 2, 1, 3) * scale
    k = k.reshape(Bn, N, num_heads, hd).transpose(0, 2, 1, 3)
    v = v.reshape(Bn, N, num_heads, hd).transpose(0, 2, 1, 3)
    attn = q @ jnp.swapaxes(k, -2, -1) + params["rel_bias"][None]
    attn = jax.nn.softmax(attn, axis=-1)
    o = (attn @ v).transpose(0, 2, 1, 3).reshape(Bn, N, C)
    o = o @ params["wp"] + params["bp"]
    full = window_reverse(o.reshape(-1, ws, ws, C), ws, Hp, Wp)[:, :H, :W, :].reshape(B, L, C)
    x1 = shortcut + full
    x2 = ln(x1, params["g2"], params["b2"])
    h = jax.nn.gelu(x2 @ params["w1"] + params["b1"], approximate=False)
    return x1 + (h @ params["w2"] + params["b2mlp"])


# ------------------- main ----------------------------------------------------------------------


if __name__ == "__main__":
    B, H, W, C = 2, 8, 8, 32
    num_heads, window_size, mlp_ratio = 4, 4, 4.0
    L = H * W

    key = jax.random.PRNGKey(0)
    kx, ky, kp = jax.random.split(key, 3)
    x = jax.random.normal(kx, (B, L, C), jnp.float32)
    y = jax.random.normal(ky, (B, L, C), jnp.float32)
    params = init_params(kp, C, num_heads, window_size, mlp_ratio)

    out = cross_swin_block(x, y, params, H, W, window_size, num_heads)
    out = jax.block_until_ready(out)

    ref = reference_forward(x, y, params, H, W, window_size, num_heads)
    assert out.shape == (B, L, C)
    # bf16 MXU matmuls, bf16 inter-kernel activations and approx-reciprocal softmax ->
    # compare against the f32 reference with a bf16-appropriate tolerance.
    np.testing.assert_allclose(np.asarray(out), np.asarray(ref), rtol=2e-2, atol=2e-2)
    print("KERNEL_OK")
</pallas_src>

<mosaic_0001>
module attributes {stable_mosaic.version = 11 : i64} {
  func.func @_attn_kernel(%arg0: i32, %arg1: i32, %arg2: memref<1x8x8x32xf32, #tpu.memory_space<vmem>>, %arg3: memref<1x8x8x32xf32, #tpu.memory_space<vmem>>, %arg4: memref<1x32xf32, #tpu.memory_space<vmem>>, %arg5: memref<1x32xf32, #tpu.memory_space<vmem>>, %arg6: memref<1x32xf32, #tpu.memory_space<vmem>>, %arg7: memref<1x32xf32, #tpu.memory_space<vmem>>, %arg8: memref<32x32xbf16, #tpu.memory_space<vmem>>, %arg9: memref<1x32xf32, #tpu.memory_space<vmem>>, %arg10: memref<32x64xbf16, #tpu.memory_space<vmem>>, %arg11: memref<1x64xf32, #tpu.memory_space<vmem>>, %arg12: memref<32x32xbf16, #tpu.memory_space<vmem>>, %arg13: memref<1x32xf32, #tpu.memory_space<vmem>>, %arg14: memref<4x16x16xf32, #tpu.memory_space<vmem>>, %arg15: memref<1x8x8x32xbf16, #tpu.memory_space<vmem>>) attributes {dimension_semantics = [#tpu.dimension_semantics<parallel>, #tpu.dimension_semantics<parallel>], iteration_bounds = array<i64: 2, 1>, scalar_prefetch = 0 : i64, scratch_operands = 0 : i64, tpu.core_type = #tpu.core_type<tc>, window_params = [{transform_indices = @transform_0, window_bounds = array<i64: 1, 8, 8, 32>}, {transform_indices = @transform_1, window_bounds = array<i64: 1, 8, 8, 32>}, {pipeline_mode = #tpu.pipeline_mode<synchronous>, transform_indices = @transform_2, window_bounds = array<i64: 1, 32>}, {pipeline_mode = #tpu.pipeline_mode<synchronous>, transform_indices = @transform_3, window_bounds = array<i64: 1, 32>}, {pipeline_mode = #tpu.pipeline_mode<synchronous>, transform_indices = @transform_4, window_bounds = array<i64: 1, 32>}, {pipeline_mode = #tpu.pipeline_mode<synchronous>, transform_indices = @transform_5, window_bounds = array<i64: 1, 32>}, {pipeline_mode = #tpu.pipeline_mode<synchronous>, transform_indices = @transform_6, window_bounds = array<i64: 32, 32>}, {pipeline_mode = #tpu.pipeline_mode<synchronous>, transform_indices = @transform_7, window_bounds = array<i64: 1, 32>}, {pipeline_mode = #tpu.pipeline_mode<synchronous>, transform_indices = @transform_8, window_bounds = array<i64: 32, 64>}, {pipeline_mode = #tpu.pipeline_mode<synchronous>, transform_indices = @transform_9, window_bounds = array<i64: 1, 64>}, {pipeline_mode = #tpu.pipeline_mode<synchronous>, transform_indices = @transform_10, window_bounds = array<i64: 32, 32>}, {pipeline_mode = #tpu.pipeline_mode<synchronous>, transform_indices = @transform_11, window_bounds = array<i64: 1, 32>}, {pipeline_mode = #tpu.pipeline_mode<synchronous>, transform_indices = @transform_12, window_bounds = array<i64: 4, 16, 16>}, {transform_indices = @transform_13, window_bounds = array<i64: 1, 8, 8, 32>}]} {
    %c0 = arith.constant 0 : index
    %c0_0 = arith.constant 0 : index
    %c0_1 = arith.constant 0 : index
    %c0_2 = arith.constant 0 : index
    %0 = vector.load %arg2[%c0, %c0_0, %c0_1, %c0_2] : memref<1x8x8x32xf32, #tpu.memory_space<vmem>>, vector<1x8x8x32xf32>
    %1 = vector.shape_cast %0 : vector<1x8x8x32xf32> to vector<8x8x32xf32>
    %cst = arith.constant dense<0.000000e+00> : vector<8x8xf32>
    %2 = vector.multi_reduction <add>, %1, %cst [2] : vector<8x8x32xf32> to vector<8x8xf32>
    %3 = vector.shape_cast %2 : vector<8x8xf32> to vector<8x8x1xf32>
    %cst_3 = arith.constant 3.200000e+01 : f32
    %4 = vector.broadcast %cst_3 : f32 to vector<8x8x1xf32>
    %5 = arith.divf %3, %4 : vector<8x8x1xf32>
    %6 = vector.broadcast %5 : vector<8x8x1xf32> to vector<8x8x32xf32>
    %7 = arith.subf %1, %6 : vector<8x8x32xf32>
    %8 = arith.mulf %7, %7 : vector<8x8x32xf32>
    %cst_4 = arith.constant dense<0.000000e+00> : vector<8x8xf32>
    %9 = vector.multi_reduction <add>, %8, %cst_4 [2] : vector<8x8x32xf32> to vector<8x8xf32>
    %10 = vector.shape_cast %9 : vector<8x8xf32> to vector<8x8x1xf32>
    %cst_5 = arith.constant 3.200000e+01 : f32
    %11 = vector.broadcast %cst_5 : f32 to vector<8x8x1xf32>
    %12 = arith.divf %10, %11 : vector<8x8x1xf32>
    %13 = vector.broadcast %5 : vector<8x8x1xf32> to vector<8x8x32xf32>
    %14 = arith.subf %1, %13 : vector<8x8x32xf32>
    %cst_6 = arith.constant 9.99999974E-6 : f32
    %15 = vector.broadcast %cst_6 : f32 to vector<8x8x1xf32>
    %16 = arith.addf %12, %15 : vector<8x8x1xf32>
    %17 = math.rsqrt %16 : vector<8x8x1xf32>
    %18 = vector.broadcast %17 : vector<8x8x1xf32> to vector<8x8x32xf32>
    %19 = arith.mulf %14, %18 : vector<8x8x32xf32>
    %c0_7 = arith.constant 0 : index
    %c0_8 = arith.constant 0 : index
    %20 = vector.load %arg4[%c0_7, %c0_8] : memref<1x32xf32, #tpu.memory_space<vmem>>, vector<1x32xf32>
    %21 = vector.shape_cast %20 : vector<1x32xf32> to vector<1x1x32xf32>
    %22 = vector.broadcast %21 : vector<1x1x32xf32> to vector<8x8x32xf32>
    %23 = arith.mulf %19, %22 : vector<8x8x32xf32>
    %c0_9 = arith.constant 0 : index
    %c0_10 = arith.constant 0 : index
    %24 = vector.load %arg5[%c0_9, %c0_10] : memref<1x32xf32, #tpu.memory_space<vmem>>, vector<1x32xf32>
    %25 = vector.shape_cast %24 : vector<1x32xf32> to vector<1x1x32xf32>
    %26 = vector.broadcast %25 : vector<1x1x32xf32> to vector<8x8x32xf32>
    %27 = arith.addf %23, %26 : vector<8x8x32xf32>
    %c0_11 = arith.constant 0 : index
    %c0_12 = arith.constant 0 : index
    %c0_13 = arith.constant 0 : index
    %c0_14 = arith.constant 0 : index
    %28 = vector.load %arg3[%c0_11, %c0_12, %c0_13, %c0_14] : memref<1x8x8x32xf32, #tpu.memory_space<vmem>>, vector<1x8x8x32xf32>
    %29 = vector.shape_cast %28 : vector<1x8x8x32xf32> to vector<8x8x32xf32>
    %cst_15 = arith.constant dense<0.000000e+00> : vector<8x8xf32>
    %30 = vector.multi_reduction <add>, %29, %cst_15 [2] : vector<8x8x32xf32> to vector<8x8xf32>
    %31 = vector.shape_cast %30 : vector<8x8xf32> to vector<8x8x1xf32>
    %cst_16 = arith.constant 3.200000e+01 : f32
    %32 = vector.broadcast %cst_16 : f32 to vector<8x8x1xf32>
    %33 = arith.divf %31, %32 : vector<8x8x1xf32>
    %34 = vector.broadcast %33 : vector<8x8x1xf32> to vector<8x8x32xf32>
    %35 = arith.subf %29, %34 : vector<8x8x32xf32>
    %36 = arith.mulf %35, %35 : vector<8x8x32xf32>
    %cst_17 = arith.constant dense<0.000000e+00> : vector<8x8xf32>
    %37 = vector.multi_reduction <add>, %36, %cst_17 [2] : vector<8x8x32xf32> to vector<8x8xf32>
    %38 = vector.shape_cast %37 : vector<8x8xf32> to vector<8x8x1xf32>
    %cst_18 = arith.constant 3.200000e+01 : f32
    %39 = vector.broadcast %cst_18 : f32 to vector<8x8x1xf32>
    %40 = arith.divf %38, %39 : vector<8x8x1xf32>
    %41 = vector.broadcast %33 : vector<8x8x1xf32> to vector<8x8x32xf32>
    %42 = arith.subf %29, %41 : vector<8x8x32xf32>
    %cst_19 = arith.constant 9.99999974E-6 : f32
    %43 = vector.broadcast %cst_19 : f32 to vector<8x8x1xf32>
    %44 = arith.addf %40, %43 : vector<8x8x1xf32>
    %45 = math.rsqrt %44 : vector<8x8x1xf32>
    %46 = vector.broadcast %45 : vector<8x8x1xf32> to vector<8x8x32xf32>
    %47 = arith.mulf %42, %46 : vector<8x8x32xf32>
    %c0_20 = arith.constant 0 : index
    %c0_21 = arith.constant 0 : index
    %48 = vector.load %arg6[%c0_20, %c0_21] : memref<1x32xf32, #tpu.memory_space<vmem>>, vector<1x32xf32>
    %49 = vector.shape_cast %48 : vector<1x32xf32> to vector<1x1x32xf32>
    %50 = vector.broadcast %49 : vector<1x1x32xf32> to vector<8x8x32xf32>
    %51 = arith.mulf %47, %50 : vector<8x8x32xf32>
    %c0_22 = arith.constant 0 : index
    %c0_23 = arith.constant 0 : index
    %52 = vector.load %arg7[%c0_22, %c0_23] : memref<1x32xf32, #tpu.memory_space<vmem>>, vector<1x32xf32>
    %53 = vector.shape_cast %52 : vector<1x32xf32> to vector<1x1x32xf32>
    %54 = vector.broadcast %53 : vector<1x1x32xf32> to vector<8x8x32xf32>
    %55 = arith.addf %51, %54 : vector<8x8x32xf32>
    %56 = arith.truncf %27 : vector<8x8x32xf32> to vector<8x8x32xbf16>
    %57 = arith.truncf %55 : vector<8x8x32xf32> to vector<8x8x32xbf16>
    %58 = vector.extract_strided_slice %56 {offsets = [0, 0, 0], sizes = [4, 8, 32], strides = [1, 1, 1]} : vector<8x8x32xbf16> to vector<4x8x32xbf16>
    %59 = vector.extract_strided_slice %58 {offsets = [0, 0, 0], sizes = [4, 4, 32], strides = [1, 1, 1]} : vector<4x8x32xbf16> to vector<4x4x32xbf16>
    %60 = vector.shape_cast %59 : vector<4x4x32xbf16> to vector<16x32xbf16>
    %61 = vector.extract_strided_slice %58 {offsets = [0, 4, 0], sizes = [4, 4, 32], strides = [1, 1, 1]} : vector<4x8x32xbf16> to vector<4x4x32xbf16>
    %62 = vector.shape_cast %61 : vector<4x4x32xbf16> to vector<16x32xbf16>
    %63 = vector.extract_strided_slice %56 {offsets = [4, 0, 0], sizes = [4, 8, 32], strides = [1, 1, 1]} : vector<8x8x32xbf16> to vector<4x8x32xbf16>
    %64 = vector.extract_strided_slice %63 {offsets = [0, 0, 0], sizes = [4, 4, 32], strides = [1, 1, 1]} : vector<4x8x32xbf16> to vector<4x4x32xbf16>
    %65 = vector.shape_cast %64 : vector<4x4x32xbf16> to vector<16x32xbf16>
    %66 = vector.extract_strided_slice %63 {offsets = [0, 4, 0], sizes = [4, 4, 32], strides = [1, 1, 1]} : vector<4x8x32xbf16> to vector<4x4x32xbf16>
    %67 = vector.shape_cast %66 : vector<4x4x32xbf16> to vector<16x32xbf16>
    %68 = tpu.concatenate %60, %62, %65, %67 in 0 : vector<16x32xbf16>, vector<16x32xbf16>, vector<16x32xbf16>, vector<16x32xbf16> -> vector<64x32xbf16>
    %69 = vector.extract_strided_slice %57 {offsets = [0, 0, 0], sizes = [4, 8, 32], strides = [1, 1, 1]} : vector<8x8x32xbf16> to vector<4x8x32xbf16>
    %70 = vector.extract_strided_slice %69 {offsets = [0, 0, 0], sizes = [4, 4, 32], strides = [1, 1, 1]} : vector<4x8x32xbf16> to vector<4x4x32xbf16>
    %71 = vector.shape_cast %70 : vector<4x4x32xbf16> to vector<16x32xbf16>
    %72 = vector.extract_strided_slice %69 {offsets = [0, 4, 0], sizes = [4, 4, 32], strides = [1, 1, 1]} : vector<4x8x32xbf16> to vector<4x4x32xbf16>
    %73 = vector.shape_cast %72 : vector<4x4x32xbf16> to vector<16x32xbf16>
    %74 = vector.extract_strided_slice %57 {offsets = [4, 0, 0], sizes = [4, 8, 32], strides = [1, 1, 1]} : vector<8x8x32xbf16> to vector<4x8x32xbf16>
    %75 = vector.extract_strided_slice %74 {offsets = [0, 0, 0], sizes = [4, 4, 32], strides = [1, 1, 1]} : vector<4x8x32xbf16> to vector<4x4x32xbf16>
    %76 = vector.shape_cast %75 : vector<4x4x32xbf16> to vector<16x32xbf16>
    %77 = vector.extract_strided_slice %74 {offsets = [0, 4, 0], sizes = [4, 4, 32], strides = [1, 1, 1]} : vector<4x8x32xbf16> to vector<4x4x32xbf16>
    %78 = vector.shape_cast %77 : vector<4x4x32xbf16> to vector<16x32xbf16>
    %79 = tpu.concatenate %71, %73, %76, %78 in 0 : vector<16x32xbf16>, vector<16x32xbf16>, vector<16x32xbf16>, vector<16x32xbf16> -> vector<64x32xbf16>
    %c0_24 = arith.constant 0 : index
    %c0_25 = arith.constant 0 : index
    %80 = vector.load %arg8[%c0_24, %c0_25] : memref<32x32xbf16, #tpu.memory_space<vmem>>, vector<32x32xbf16>
    %cst_26 = arith.constant dense<0.000000e+00> : vector<64x32xf32>
    %81 = tpu.matmul %68, %80, %cst_26 {dimension_numbers = #tpu.dot_dimension_numbers<[1], [0], [0], [1], [0, 0, 1, 1], [], []>} : vector<64x32xbf16>, vector<32x32xbf16>, vector<64x32xf32> -> vector<64x32xf32>
    %c0_27 = arith.constant 0 : index
    %c0_28 = arith.constant 0 : index
    %82 = vector.load %arg9[%c0_27, %c0_28] : memref<1x32xf32, #tpu.memory_space<vmem>>, vector<1x32xf32>
    %83 = vector.broadcast %82 : vector<1x32xf32> to vector<64x32xf32>
    %84 = arith.addf %81, %83 : vector<64x32xf32>
    %c0_29 = arith.constant 0 : index
    %c0_30 = arith.constant 0 : index
    %85 = vector.load %arg10[%c0_29, %c0_30] : memref<32x64xbf16, #tpu.memory_space<vmem>>, vector<32x64xbf16>
    %cst_31 = arith.constant dense<0.000000e+00> : vector<64x64xf32>
    %86 = tpu.matmul %79, %85, %cst_31 {dimension_numbers = #tpu.dot_dimension_numbers<[1], [0], [0], [1], [0, 0, 1, 1], [], []>} : vector<64x32xbf16>, vector<32x64xbf16>, vector<64x64xf32> -> vector<64x64xf32>
    %c0_32 = arith.constant 0 : index
    %c0_33 = arith.constant 0 : index
    %87 = vector.load %arg11[%c0_32, %c0_33] : memref<1x64xf32, #tpu.memory_space<vmem>>, vector<1x64xf32>
    %88 = vector.broadcast %87 : vector<1x64xf32> to vector<64x64xf32>
    %89 = arith.addf %86, %88 : vector<64x64xf32>
    %90 = vector.shape_cast %84 : vector<64x32xf32> to vector<4x16x32xf32>
    %91 = arith.truncf %90 : vector<4x16x32xf32> to vector<4x16x32xbf16>
    %92 = vector.extract_strided_slice %89 {offsets = [0, 0], sizes = [64, 32], strides = [1, 1]} : vector<64x64xf32> to vector<64x32xf32>
    %93 = vector.shape_cast %92 : vector<64x32xf32> to vector<4x16x32xf32>
    %94 = arith.truncf %93 : vector<4x16x32xf32> to vector<4x16x32xbf16>
    %95 = vector.extract_strided_slice %89 {offsets = [0, 32], sizes = [64, 32], strides = [1, 1]} : vector<64x64xf32> to vector<64x32xf32>
    %96 = vector.shape_cast %95 : vector<64x32xf32> to vector<4x16x32xf32>
    %97 = arith.truncf %96 : vector<4x16x32xf32> to vector<4x16x32xbf16>
    %98 = vector.extract_strided_slice %91 {offsets = [0, 0, 0], sizes = [4, 16, 8], strides = [1, 1, 1]} : vector<4x16x32xbf16> to vector<4x16x8xbf16>
    %99 = vector.extract_strided_slice %94 {offsets = [0, 0, 0], sizes = [4, 16, 8], strides = [1, 1, 1]} : vector<4x16x32xbf16> to vector<4x16x8xbf16>
    "tpu.trace_start"() <{level = 10 : i32, message = "wqd,wkd->wqk"}> : () -> ()
    %cst_34 = arith.constant dense<0.000000e+00> : vector<4x16x16xf32>
    %100 = tpu.matmul %98, %99, %cst_34 {dimension_numbers = #tpu.dot_dimension_numbers<[2], [2], [1], [1], [0, 0, 0, 1, 1, 1], [0], [0]>} : vector<4x16x8xbf16>, vector<4x16x8xbf16>, vector<4x16x16xf32> -> vector<4x16x16xf32>
    "tpu.trace_stop"() : () -> ()
    %cst_35 = arith.constant 0.353553385 : f32
    %101 = vector.broadcast %cst_35 : f32 to vector<4x16x16xf32>
    %102 = arith.mulf %100, %101 : vector<4x16x16xf32>
    %c0_36 = arith.constant 0 : index
    %c0_37 = arith.constant 0 : index
    %c0_38 = arith.constant 0 : index
    %103 = vector.load %arg14[%c0_36, %c0_37, %c0_38] : memref<4x16x16xf32, #tpu.memory_space<vmem>>, vector<1x16x16xf32>
    %104 = vector.shape_cast %103 : vector<1x16x16xf32> to vector<16x16xf32>
    %105 = vector.shape_cast %104 : vector<16x16xf32> to vector<1x16x16xf32>
    %106 = vector.broadcast %105 : vector<1x16x16xf32> to vector<4x16x16xf32>
    %107 = arith.addf %102, %106 : vector<4x16x16xf32>
    %cst_39 = arith.constant dense<0xFF800000> : vector<4x16xf32>
    %108 = vector.multi_reduction <maximumf>, %107, %cst_39 [2] : vector<4x16x16xf32> to vector<4x16xf32>
    %109 = vector.shape_cast %108 : vector<4x16xf32> to vector<4x16x1xf32>
    %110 = vector.broadcast %109 : vector<4x16x1xf32> to vector<4x16x16xf32>
    %111 = arith.subf %107, %110 : vector<4x16x16xf32>
    %112 = math.exp %111 : vector<4x16x16xf32>
    %cst_40 = arith.constant dense<0.000000e+00> : vector<4x16xf32>
    %113 = vector.multi_reduction <add>, %112, %cst_40 [2] : vector<4x16x16xf32> to vector<4x16xf32>
    %114 = vector.shape_cast %113 : vector<4x16xf32> to vector<4x16x1xf32>
    %115 = tpu.reciprocal %114 {approx = true} : vector<4x16x1xf32> -> vector<4x16x1xf32>
    %116 = vector.broadcast %115 : vector<4x16x1xf32> to vector<4x16x16xf32>
    %117 = arith.mulf %112, %116 : vector<4x16x16xf32>
    %118 = arith.truncf %117 : vector<4x16x16xf32> to vector<4x16x16xbf16>
    %119 = vector.extract_strided_slice %97 {offsets = [0, 0, 0], sizes = [4, 16, 8], strides = [1, 1, 1]} : vector<4x16x32xbf16> to vector<4x16x8xbf16>
    "tpu.trace_start"() <{level = 10 : i32, message = "wqk,wkd->wqd"}> : () -> ()
    %cst_41 = arith.constant dense<0.000000e+00> : vector<4x16x8xf32>
    %120 = tpu.matmul %118, %119, %cst_41 {dimension_numbers = #tpu.dot_dimension_numbers<[2], [1], [1], [2], [0, 0, 0, 1, 1, 2], [0], [0]>} : vector<4x16x16xbf16>, vector<4x16x8xbf16>, vector<4x16x8xf32> -> vector<4x16x8xf32>
    "tpu.trace_stop"() : () -> ()
    %121 = vector.extract_strided_slice %91 {offsets = [0, 0, 8], sizes = [4, 16, 8], strides = [1, 1, 1]} : vector<4x16x32xbf16> to vector<4x16x8xbf16>
    %122 = vector.extract_strided_slice %94 {offsets = [0, 0, 8], sizes = [4, 16, 8], strides = [1, 1, 1]} : vector<4x16x32xbf16> to vector<4x16x8xbf16>
    "tpu.trace_start"() <{level = 10 : i32, message = "wqd,wkd->wqk"}> : () -> ()
    %cst_42 = arith.constant dense<0.000000e+00> : vector<4x16x16xf32>
    %123 = tpu.matmul %121, %122, %cst_42 {dimension_numbers = #tpu.dot_dimension_numbers<[2], [2], [1], [1], [0, 0, 0, 1, 1, 1], [0], [0]>} : vector<4x16x8xbf16>, vector<4x16x8xbf16>, vector<4x16x16xf32> -> vector<4x16x16xf32>
    "tpu.trace_stop"() : () -> ()
    %cst_43 = arith.constant 0.353553385 : f32
    %124 = vector.broadcast %cst_43 : f32 to vector<4x16x16xf32>
    %125 = arith.mulf %123, %124 : vector<4x16x16xf32>
    %c1 = arith.constant 1 : index
    %c0_44 = arith.constant 0 : index
    %c0_45 = arith.constant 0 : index
    %126 = vector.load %arg14[%c1, %c0_44, %c0_45] : memref<4x16x16xf32, #tpu.memory_space<vmem>>, vector<1x16x16xf32>
    %127 = vector.shape_cast %126 : vector<1x16x16xf32> to vector<16x16xf32>
    %128 = vector.shape_cast %127 : vector<16x16xf32> to vector<1x16x16xf32>
    %129 = vector.broadcast %128 : vector<1x16x16xf32> to vector<4x16x16xf32>
    %130 = arith.addf %125, %129 : vector<4x16x16xf32>
    %cst_46 = arith.constant dense<0xFF800000> : vector<4x16xf32>
    %131 = vector.multi_reduction <maximumf>, %130, %cst_46 [2] : vector<4x16x16xf32> to vector<4x16xf32>
    %132 = vector.shape_cast %131 : vector<4x16xf32> to vector<4x16x1xf32>
    %133 = vector.broadcast %132 : vector<4x16x1xf32> to vector<4x16x16xf32>
    %134 = arith.subf %130, %133 : vector<4x16x16xf32>
    %135 = math.exp %134 : vector<4x16x16xf32>
    %cst_47 = arith.constant dense<0.000000e+00> : vector<4x16xf32>
    %136 = vector.multi_reduction <add>, %135, %cst_47 [2] : vector<4x16x16xf32> to vector<4x16xf32>
    %137 = vector.shape_cast %136 : vector<4x16xf32> to vector<4x16x1xf32>
    %138 = tpu.reciprocal %137 {approx = true} : vector<4x16x1xf32> -> vector<4x16x1xf32>
    %139 = vector.broadcast %138 : vector<4x16x1xf32> to vector<4x16x16xf32>
    %140 = arith.mulf %135, %139 : vector<4x16x16xf32>
    %141 = arith.truncf %140 : vector<4x16x16xf32> to vector<4x16x16xbf16>
    %142 = vector.extract_strided_slice %97 {offsets = [0, 0, 8], sizes = [4, 16, 8], strides = [1, 1, 1]} : vector<4x16x32xbf16> to vector<4x16x8xbf16>
    "tpu.trace_start"() <{level = 10 : i32, message = "wqk,wkd->wqd"}> : () -> ()
    %cst_48 = arith.constant dense<0.000000e+00> : vector<4x16x8xf32>
    %143 = tpu.matmul %141, %142, %cst_48 {dimension_numbers = #tpu.dot_dimension_numbers<[2], [1], [1], [2], [0, 0, 0, 1, 1, 2], [0], [0]>} : vector<4x16x16xbf16>, vector<4x16x8xbf16>, vector<4x16x8xf32> -> vector<4x16x8xf32>
    "tpu.trace_stop"() : () -> ()
    %144 = vector.extract_strided_slice %91 {offsets = [0, 0, 16], sizes = [4, 16, 8], strides = [1, 1, 1]} : vector<4x16x32xbf16> to vector<4x16x8xbf16>
    %145 = vector.extract_strided_slice %94 {offsets = [0, 0, 16], sizes = [4, 16, 8], strides = [1, 1, 1]} : vector<4x16x32xbf16> to vector<4x16x8xbf16>
    "tpu.trace_start"() <{level = 10 : i32, message = "wqd,wkd->wqk"}> : () -> ()
    %cst_49 = arith.constant dense<0.000000e+00> : vector<4x16x16xf32>
    %146 = tpu.matmul %144, %145, %cst_49 {dimension_numbers = #tpu.dot_dimension_numbers<[2], [2], [1], [1], [0, 0, 0, 1, 1, 1], [0], [0]>} : vector<4x16x8xbf16>, vector<4x16x8xbf16>, vector<4x16x16xf32> -> vector<4x16x16xf32>
    "tpu.trace_stop"() : () -> ()
    %cst_50 = arith.constant 0.353553385 : f32
    %147 = vector.broadcast %cst_50 : f32 to vector<4x16x16xf32>
    %148 = arith.mulf %146, %147 : vector<4x16x16xf32>
    %c2 = arith.constant 2 : index
    %c0_51 = arith.constant 0 : index
    %c0_52 = arith.constant 0 : index
    %149 = vector.load %arg14[%c2, %c0_51, %c0_52] : memref<4x16x16xf32, #tpu.memory_space<vmem>>, vector<1x16x16xf32>
    %150 = vector.shape_cast %149 : vector<1x16x16xf32> to vector<16x16xf32>
    %151 = vector.shape_cast %150 : vector<16x16xf32> to vector<1x16x16xf32>
    %152 = vector.broadcast %151 : vector<1x16x16xf32> to vector<4x16x16xf32>
    %153 = arith.addf %148, %152 : vector<4x16x16xf32>
    %cst_53 = arith.constant dense<0xFF800000> : vector<4x16xf32>
    %154 = vector.multi_reduction <maximumf>, %153, %cst_53 [2] : vector<4x16x16xf32> to vector<4x16xf32>
    %155 = vector.shape_cast %154 : vector<4x16xf32> to vector<4x16x1xf32>
    %156 = vector.broadcast %155 : vector<4x16x1xf32> to vector<4x16x16xf32>
    %157 = arith.subf %153, %156 : vector<4x16x16xf32>
    %158 = math.exp %157 : vector<4x16x16xf32>
    %cst_54 = arith.constant dense<0.000000e+00> : vector<4x16xf32>
    %159 = vector.multi_reduction <add>, %158, %cst_54 [2] : vector<4x16x16xf32> to vector<4x16xf32>
    %160 = vector.shape_cast %159 : vector<4x16xf32> to vector<4x16x1xf32>
    %161 = tpu.reciprocal %160 {approx = true} : vector<4x16x1xf32> -> vector<4x16x1xf32>
    %162 = vector.broadcast %161 : vector<4x16x1xf32> to vector<4x16x16xf32>
    %163 = arith.mulf %158, %162 : vector<4x16x16xf32>
    %164 = arith.truncf %163 : vector<4x16x16xf32> to vector<4x16x16xbf16>
    %165 = vector.extract_strided_slice %97 {offsets = [0, 0, 16], sizes = [4, 16, 8], strides = [1, 1, 1]} : vector<4x16x32xbf16> to vector<4x16x8xbf16>
    "tpu.trace_start"() <{level = 10 : i32, message = "wqk,wkd->wqd"}> : () -> ()
    %cst_55 = arith.constant dense<0.000000e+00> : vector<4x16x8xf32>
    %166 = tpu.matmul %164, %165, %cst_55 {dimension_numbers = #tpu.dot_dimension_numbers<[2], [1], [1], [2], [0, 0, 0, 1, 1, 2], [0], [0]>} : vector<4x16x16xbf16>, vector<4x16x8xbf16>, vector<4x16x8xf32> -> vector<4x16x8xf32>
    "tpu.trace_stop"() : () -> ()
    %167 = vector.extract_strided_slice %91 {offsets = [0, 0, 24], sizes = [4, 16, 8], strides = [1, 1, 1]} : vector<4x16x32xbf16> to vector<4x16x8xbf16>
    %168 = vector.extract_strided_slice %94 {offsets = [0, 0, 24], sizes = [4, 16, 8], strides = [1, 1, 1]} : vector<4x16x32xbf16> to vector<4x16x8xbf16>
    "tpu.trace_start"() <{level = 10 : i32, message = "wqd,wkd->wqk"}> : () -> ()
    %cst_56 = arith.constant dense<0.000000e+00> : vector<4x16x16xf32>
    %169 = tpu.matmul %167, %168, %cst_56 {dimension_numbers = #tpu.dot_dimension_numbers<[2], [2], [1], [1], [0, 0, 0, 1, 1, 1], [0], [0]>} : vector<4x16x8xbf16>, vector<4x16x8xbf16>, vector<4x16x16xf32> -> vector<4x16x16xf32>
    "tpu.trace_stop"() : () -> ()
    %cst_57 = arith.constant 0.353553385 : f32
    %170 = vector.broadcast %cst_57 : f32 to vector<4x16x16xf32>
    %171 = arith.mulf %169, %170 : vector<4x16x16xf32>
    %c3 = arith.constant 3 : index
    %c0_58 = arith.constant 0 : index
    %c0_59 = arith.constant 0 : index
    %172 = vector.load %arg14[%c3, %c0_58, %c0_59] : memref<4x16x16xf32, #tpu.memory_space<vmem>>, vector<1x16x16xf32>
    %173 = vector.shape_cast %172 : vector<1x16x16xf32> to vector<16x16xf32>
    %174 = vector.shape_cast %173 : vector<16x16xf32> to vector<1x16x16xf32>
    %175 = vector.broadcast %174 : vector<1x16x16xf32> to vector<4x16x16xf32>
    %176 = arith.addf %171, %175 : vector<4x16x16xf32>
    %cst_60 = arith.constant dense<0xFF800000> : vector<4x16xf32>
    %177 = vector.multi_reduction <maximumf>, %176, %cst_60 [2] : vector<4x16x16xf32> to vector<4x16xf32>
    %178 = vector.shape_cast %177 : vector<4x16xf32> to vector<4x16x1xf32>
    %179 = vector.broadcast %178 : vector<4x16x1xf32> to vector<4x16x16xf32>
    %180 = arith.subf %176, %179 : vector<4x16x16xf32>
    %181 = math.exp %180 : vector<4x16x16xf32>
    %cst_61 = arith.constant dense<0.000000e+00> : vector<4x16xf32>
    %182 = vector.multi_reduction <add>, %181, %cst_61 [2] : vector<4x16x16xf32> to vector<4x16xf32>
    %183 = vector.shape_cast %182 : vector<4x16xf32> to vector<4x16x1xf32>
    %184 = tpu.reciprocal %183 {approx = true} : vector<4x16x1xf32> -> vector<4x16x1xf32>
    %185 = vector.broadcast %184 : vector<4x16x1xf32> to vector<4x16x16xf32>
    %186 = arith.mulf %181, %185 : vector<4x16x16xf32>
    %187 = arith.truncf %186 : vector<4x16x16xf32> to vector<4x16x16xbf16>
    %188 = vector.extract_strided_slice %97 {offsets = [0, 0, 24], sizes = [4, 16, 8], strides = [1, 1, 1]} : vector<4x16x32xbf16> to vector<4x16x8xbf16>
    "tpu.trace_start"() <{level = 10 : i32, message = "wqk,wkd->wqd"}> : () -> ()
    %cst_62 = arith.constant dense<0.000000e+00> : vector<4x16x8xf32>
    %189 = tpu.matmul %187, %188, %cst_62 {dimension_numbers = #tpu.dot_dimension_numbers<[2], [1], [1], [2], [0, 0, 0, 1, 1, 2], [0], [0]>} : vector<4x16x16xbf16>, vector<4x16x8xbf16>, vector<4x16x8xf32> -> vector<4x16x8xf32>
    "tpu.trace_stop"() : () -> ()
    %190 = tpu.concatenate %120, %143, %166, %189 in 2 : vector<4x16x8xf32>, vector<4x16x8xf32>, vector<4x16x8xf32>, vector<4x16x8xf32> -> vector<4x16x32xf32>
    %191 = vector.shape_cast %190 : vector<4x16x32xf32> to vector<64x32xf32>
    %192 = arith.truncf %191 : vector<64x32xf32> to vector<64x32xbf16>
    %c0_63 = arith.constant 0 : index
    %c0_64 = arith.constant 0 : index
    %193 = vector.load %arg12[%c0_63, %c0_64] : memref<32x32xbf16, #tpu.memory_space<vmem>>, vector<32x32xbf16>
    %cst_65 = arith.constant dense<0.000000e+00> : vector<64x32xf32>
    %194 = tpu.matmul %192, %193, %cst_65 {dimension_numbers = #tpu.dot_dimension_numbers<[1], [0], [0], [1], [0, 0, 1, 1], [], []>} : vector<64x32xbf16>, vector<32x32xbf16>, vector<64x32xf32> -> vector<64x32xf32>
    %c0_66 = arith.constant 0 : index
    %c0_67 = arith.constant 0 : index
    %195 = vector.load %arg13[%c0_66, %c0_67] : memref<1x32xf32, #tpu.memory_space<vmem>>, vector<1x32xf32>
    %196 = vector.broadcast %195 : vector<1x32xf32> to vector<64x32xf32>
    %197 = arith.addf %194, %196 : vector<64x32xf32>
    %198 = arith.truncf %197 : vector<64x32xf32> to vector<64x32xbf16>
    %199 = vector.shape_cast %198 : vector<64x32xbf16> to vector<4x4x4x32xbf16>
    %200 = vector.extract_strided_slice %199 {offsets = [0, 0, 0, 0], sizes = [1, 4, 4, 32], strides = [1, 1, 1, 1]} : vector<4x4x4x32xbf16> to vector<1x4x4x32xbf16>
    %201 = vector.shape_cast %200 : vector<1x4x4x32xbf16> to vector<4x4x32xbf16>
    %202 = vector.extract_strided_slice %199 {offsets = [1, 0, 0, 0], sizes = [1, 4, 4, 32], strides = [1, 1, 1, 1]} : vector<4x4x4x32xbf16> to vector<1x4x4x32xbf16>
    %203 = vector.shape_cast %202 : vector<1x4x4x32xbf16> to vector<4x4x32xbf16>
    %204 = tpu.concatenate %201, %203 in 1 : vector<4x4x32xbf16>, vector<4x4x32xbf16> -> vector<4x8x32xbf16>
    %205 = vector.extract_strided_slice %199 {offsets = [2, 0, 0, 0], sizes = [1, 4, 4, 32], strides = [1, 1, 1, 1]} : vector<4x4x4x32xbf16> to vector<1x4x4x32xbf16>
    %206 = vector.shape_cast %205 : vector<1x4x4x32xbf16> to vector<4x4x32xbf16>
    %207 = vector.extract_strided_slice %199 {offsets = [3, 0, 0, 0], sizes = [1, 4, 4, 32], strides = [1, 1, 1, 1]} : vector<4x4x4x32xbf16> to vector<1x4x4x32xbf16>
    %208 = vector.shape_cast %207 : vector<1x4x4x32xbf16> to vector<4x4x32xbf16>
    %209 = tpu.concatenate %206, %208 in 1 : vector<4x4x32xbf16>, vector<4x4x32xbf16> -> vector<4x8x32xbf16>
    %210 = tpu.concatenate %204, %209 in 0 : vector<4x8x32xbf16>, vector<4x8x32xbf16> -> vector<8x8x32xbf16>
    %c0_68 = arith.constant 0 : index
    %c0_69 = arith.constant 0 : index
    %c0_70 = arith.constant 0 : index
    %c0_71 = arith.constant 0 : index
    %211 = vector.load %arg2[%c0_68, %c0_69, %c0_70, %c0_71] : memref<1x8x8x32xf32, #tpu.memory_space<vmem>>, vector<1x8x8x32xf32>
    %212 = vector.shape_cast %211 : vector<1x8x8x32xf32> to vector<8x8x32xf32>
    %213 = arith.extf %210 : vector<8x8x32xbf16> to vector<8x8x32xf32>
    %214 = arith.addf %212, %213 : vector<8x8x32xf32>
    %215 = arith.truncf %214 : vector<8x8x32xf32> to vector<8x8x32xbf16>
    %c0_72 = arith.constant 0 : index
    %c0_73 = arith.constant 0 : index
    %c0_74 = arith.constant 0 : index
    %c0_75 = arith.constant 0 : index
    %216 = vector.load %arg15[%c0_72, %c0_73, %c0_74, %c0_75] : memref<1x8x8x32xbf16, #tpu.memory_space<vmem>>, vector<1x8x8x32xbf16>
    %217 = vector.shape_cast %216 : vector<1x8x8x32xbf16> to vector<8x8x32xbf16>
    %218 = vector.shape_cast %215 : vector<8x8x32xbf16> to vector<1x8x8x32xbf16>
    tpu.vector_store %arg15[%c0_72, %c0_73, %c0_74, %c0_75], %218 {strides = array<i32>} : memref<1x8x8x32xbf16, #tpu.memory_space<vmem>>, vector<1x8x8x32xbf16>,
    return
  }
  func.func @transform_0(%arg0: i32, %arg1: i32) -> (i32, i32, i32, i32) {
    %c0_i32 = arith.constant 0 : i32
    %c0_i32_0 = arith.constant 0 : i32
    %c0_i32_1 = arith.constant 0 : i32
    return %arg0, %arg1, %c0_i32, %c0_i32_0 : i32, i32, i32, i32
  }
  func.func @transform_1(%arg0: i32, %arg1: i32) -> (i32, i32, i32, i32) {
    %c0_i32 = arith.constant 0 : i32
    %c0_i32_0 = arith.constant 0 : i32
    %c0_i32_1 = arith.constant 0 : i32
    return %arg0, %arg1, %c0_i32, %c0_i32_0 : i32, i32, i32, i32
  }
  func.func @transform_2(%arg0: i32, %arg1: i32) -> (i32, i32) {
    %c0_i32 = arith.constant 0 : i32
    %c0_i32_0 = arith.constant 0 : i32
    %c0_i32_1 = arith.constant 0 : i32
    return %c0_i32, %c0_i32_0 : i32, i32
  }
  func.func @transform_3(%arg0: i32, %arg1: i32) -> (i32, i32) {
    %c0_i32 = arith.constant 0 : i32
    %c0_i32_0 = arith.constant 0 : i32
    %c0_i32_1 = arith.constant 0 : i32
    return %c0_i32, %c0_i32_0 : i32, i32
  }
  func.func @transform_4(%arg0: i32, %arg1: i32) -> (i32, i32) {
    %c0_i32 = arith.constant 0 : i32
    %c0_i32_0 = arith.constant 0 : i32
    %c0_i32_1 = arith.constant 0 : i32
    return %c0_i32, %c0_i32_0 : i32, i32
  }
  func.func @transform_5(%arg0: i32, %arg1: i32) -> (i32, i32) {
    %c0_i32 = arith.constant 0 : i32
    %c0_i32_0 = arith.constant 0 : i32
    %c0_i32_1 = arith.constant 0 : i32
    return %c0_i32, %c0_i32_0 : i32, i32
  }
  func.func @transform_6(%arg0: i32, %arg1: i32) -> (i32, i32) {
    %c0_i32 = arith.constant 0 : i32
    %c0_i32_0 = arith.constant 0 : i32
    %c0_i32_1 = arith.constant 0 : i32
    return %c0_i32, %c0_i32_0 : i32, i32
  }
  func.func @transform_7(%arg0: i32, %arg1: i32) -> (i32, i32) {
    %c0_i32 = arith.constant 0 : i32
    %c0_i32_0 = arith.constant 0 : i32
    %c0_i32_1 = arith.constant 0 : i32
    return %c0_i32, %c0_i32_0 : i32, i32
  }
  func.func @transform_8(%arg0: i32, %arg1: i32) -> (i32, i32) {
    %c0_i32 = arith.constant 0 : i32
    %c0_i32_0 = arith.constant 0 : i32
    %c0_i32_1 = arith.constant 0 : i32
    return %c0_i32, %c0_i32_0 : i32, i32
  }
  func.func @transform_9(%arg0: i32, %arg1: i32) -> (i32, i32) {
    %c0_i32 = arith.constant 0 : i32
    %c0_i32_0 = arith.constant 0 : i32
    %c0_i32_1 = arith.constant 0 : i32
    return %c0_i32, %c0_i32_0 : i32, i32
  }
  func.func @transform_10(%arg0: i32, %arg1: i32) -> (i32, i32) {
    %c0_i32 = arith.constant 0 : i32
    %c0_i32_0 = arith.constant 0 : i32
    %c0_i32_1 = arith.constant 0 : i32
    return %c0_i32, %c0_i32_0 : i32, i32
  }
  func.func @transform_11(%arg0: i32, %arg1: i32) -> (i32, i32) {
    %c0_i32 = arith.constant 0 : i32
    %c0_i32_0 = arith.constant 0 : i32
    %c0_i32_1 = arith.constant 0 : i32
    return %c0_i32, %c0_i32_0 : i32, i32
  }
  func.func @transform_12(%arg0: i32, %arg1: i32) -> (i32, i32, i32) {
    %c0_i32 = arith.constant 0 : i32
    %c0_i32_0 = arith.constant 0 : i32
    %c0_i32_1 = arith.constant 0 : i32
    %c0_i32_2 = arith.constant 0 : i32
    return %c0_i32, %c0_i32_0, %c0_i32_1 : i32, i32, i32
  }
  func.func @transform_13(%arg0: i32, %arg1: i32) -> (i32, i32, i32, i32) {
    %c0_i32 = arith.constant 0 : i32
    %c0_i32_0 = arith.constant 0 : i32
    %c0_i32_1 = arith.constant 0 : i32
    return %arg0, %arg1, %c0_i32, %c0_i32_0 : i32, i32, i32, i32
  }
}

</mosaic_0001>

<llo_original>
// kernel: tpu_custom_call.1
$region0: #{tpu_custom_call.1}
  #allocation0 [shape = 'u32[]', space=smem, size = 0x4, offset = 0x4, fixed_abs, tag = 'smem constant byte address 0x4 - core index']
  #allocation1 [shape = 'u32[144,128]{1,0:T(1,128)}', space=vmem, size = 0x12000, scoped, tag = 'internal scratch']
  %s0 = inlined_call_operand.hbm [shape: f32[2,8,8,32], index: 0, kind: input, shape index: {}]
  %s1 = inlined_call_operand.hbm [shape: f32[2,8,8,32], index: 1, kind: input, shape index: {}]
  %s2 = inlined_call_operand.hbm [shape: f32[1,32], index: 2, kind: input, shape index: {}]
  %s3 = inlined_call_operand.hbm [shape: f32[1,32], index: 3, kind: input, shape index: {}]
  %s4 = inlined_call_operand.hbm [shape: f32[1,32], index: 4, kind: input, shape index: {}]
  %s5 = inlined_call_operand.hbm [shape: f32[1,32], index: 5, kind: input, shape index: {}]
  %s6 = inlined_call_operand.hbm [shape: bf16[32,32], index: 6, kind: input, shape index: {}]
  %s7 = inlined_call_operand.hbm [shape: f32[1,32], index: 7, kind: input, shape index: {}]
  %s8 = inlined_call_operand.hbm [shape: bf16[32,64], index: 8, kind: input, shape index: {}]
  %s9 = inlined_call_operand.hbm [shape: f32[1,64], index: 9, kind: input, shape index: {}]
  %s10 = inlined_call_operand.hbm [shape: bf16[32,32], index: 10, kind: input, shape index: {}]
  %s11 = inlined_call_operand.hbm [shape: f32[1,32], index: 11, kind: input, shape index: {}]
  %s12 = inlined_call_operand.hbm [shape: f32[4,16,16], index: 12, kind: input, shape index: {}]
  %s13 = inlined_call_operand.hbm [shape: bf16[2,8,8,32], index: 13, kind: output, shape index: {}]
  %s14 = sld [smem:[#allocation0]]
  $region137: #{tpu_custom_call.1} parent=0
    _
  %s16 = ssub.s32 1, %s14
  %s17 = scalar_select 0, %s16, %s14
  $region1: #{tpu_custom_call.1} parent=0
    #allocation2 [shape = 'u8[65536]{0}', space=vmem, size = 0x10000, scoped, tag = 'input window, operand 0']
    #allocation3 [shape = 's32[2]{0}', space=sflag, size = 0x8, scoped, tag = 'scoped memory for tpu_custom_call.1']
    #allocation4 [shape = 's32[2]{0}', space=sflag, size = 0x8, scoped, tag = 'scoped memory for tpu_custom_call.1']
    #allocation5 [shape = 'u8[65536]{0}', space=vmem, size = 0x10000, scoped, tag = 'input window, operand 1']
    #allocation6 [shape = 's32[2]{0}', space=sflag, size = 0x8, scoped, tag = 'scoped memory for tpu_custom_call.1']
    #allocation7 [shape = 'u8[512]{0}', space=vmem, size = 0x400, scoped, tag = 'input window, operand 2, single buffered']
    #allocation8 [shape = 'u8[512]{0}', space=vmem, size = 0x400, scoped, tag = 'input window, operand 3, single buffered']
    #allocation9 [shape = 's32[1]{0}', space=sflag, size = 0x4, scoped, tag = 'scoped memory for tpu_custom_call.1']
    #allocation10 [shape = 'u8[512]{0}', space=vmem, size = 0x400, scoped, tag = 'input window, operand 4, single buffered']
    #allocation11 [shape = 'u8[512]{0}', space=vmem, size = 0x400, scoped, tag = 'input window, operand 5, single buffered']
    #allocation12 [shape = 's32[1]{0}', space=sflag, size = 0x4, scoped, tag = 'scoped memory for tpu_custom_call.1']
    #allocation13 [shape = 'u8[8192]{0}', space=vmem, size = 0x2000, scoped, tag = 'input window, operand 6, single buffered']
    #allocation14 [shape = 'u8[512]{0}', space=vmem, size = 0x400, scoped, tag = 'input window, operand 7, single buffered']
    #allocation15 [shape = 's32[1]{0}', space=sflag, size = 0x4, scoped, tag = 'scoped memory for tpu_custom_call.1']
    #allocation16 [shape = 'u8[8192]{0}', space=vmem, size = 0x2000, scoped, tag = 'input window, operand 8, single buffered']
    #allocation17 [shape = 'u8[512]{0}', space=vmem, size = 0x400, scoped, tag = 'input window, operand 9, single buffered']
    #allocation18 [shape = 's32[1]{0}', space=sflag, size = 0x4, scoped, tag = 'scoped memory for tpu_custom_call.1']
    #allocation19 [shape = 'u8[8192]{0}', space=vmem, size = 0x2000, scoped, tag = 'input window, operand 10, single buffered']
    #allocation20 [shape = 'u8[512]{0}', space=vmem, size = 0x400, scoped, tag = 'input window, operand 11, single buffered']
    #allocation21 [shape = 's32[1]{0}', space=sflag, size = 0x4, scoped, tag = 'scoped memory for tpu_custom_call.1']
    #allocation22 [shape = 'u8[32768]{0}', space=vmem, size = 0x8000, scoped, tag = 'input window, operand 12, single buffered']
    #allocation23 [shape = 'u8[32768]{0}', space=vmem, size = 0x8000, scoped, tag = 'output window, operand 0']
    %18 = vsyncpa [#allocation3], 0
    %s19 = scalar_lea.sflag [#allocation3], 1
    %20 = vsyncpa %s19, 0
    %21 = vsyncpa [#allocation6], 0
    %s22 = scalar_lea.sflag [#allocation6], 1
    %23 = vsyncpa %s22, 0
    %24 = vsyncpa [#allocation9], 0
    %25 = vsyncpa [#allocation12], 0
    %26 = vsyncpa [#allocation15], 0
    %27 = vsyncpa [#allocation18], 0
    %28 = vsyncpa [#allocation21], 0
    %29 = vsyncpa [#allocation4], 0
    %s30 = scalar_lea.sflag [#allocation4], 1
    %31 = vsyncpa %s30, 0
    loop: start=0, step=1, limit=4
    $region2: #{tpu_custom_call.1} parent=1 // loop_pre_header
      _
    $region3: #{tpu_custom_call.1} parent=1 // loop_header
      %s33 = sphi 0, %s37
      %p34 = scmp.ge.s32.totalorder %s33, 4
      %s40 = sphi 0, %s52
      %s41 = sphi 0, %s48
      %s42 = sphi 0, %s40
      %s43 = sphi 0, %s41
      %s44 = sphi 0, %s42
      %s45 = sphi 0, %s43
      %s57 = sphi 0, %s59
      %s60 = sphi 0, %s57
      %s61 = sphi 0, %s60
      %s77 = sphi 0, %s61
      %s85 = sphi 0, %s87
      %s88 = sphi 0, %s85
      %s89 = sphi 0, %s88
      %s105 = sphi 0, %s89
      %s109 = sphi 0, %s109
      %s111 = sphi 0, %s109
      %s112 = sphi 0, %s111
      %s126 = sphi 0, %s112
      %s130 = sphi 0, %s130
      %s132 = sphi 0, %s130
      %s133 = sphi 0, %s132
      %s147 = sphi 0, %s133
      %s151 = sphi 0, %s151
      %s153 = sphi 0, %s151
      %s154 = sphi 0, %s153
      %s168 = sphi 0, %s154
      %s172 = sphi 0, %s172
      %s174 = sphi 0, %s172
      %s175 = sphi 0, %s174
      %s189 = sphi 0, %s175
      %s193 = sphi 0, %s193
      %s195 = sphi 0, %s193
      %s196 = sphi 0, %s195
      %s210 = sphi 0, %s196
      %s214 = sphi 0, %s214
      %s216 = sphi 0, %s214
      %s217 = sphi 0, %s216
      %s231 = sphi 0, %s217
      %s235 = sphi 0, %s235
      %s237 = sphi 0, %s235
      %s238 = sphi 0, %s237
      %s252 = sphi 0, %s238
      %s256 = sphi 0, %s256
      %s258 = sphi 0, %s256
      %s259 = sphi 0, %s258
      %s273 = sphi 0, %s259
      %s277 = sphi 0, %s277
      %s279 = sphi 0, %s277
      %s280 = sphi 0, %s279
      %s294 = sphi 0, %s280
      %s298 = sphi 0, %s298
      %s300 = sphi 0, %s298
      %s301 = sphi 0, %s300
      %s315 = sphi 0, %s301
      %s319 = sphi 0, %s319
      %s321 = sphi 0, %s319
      %s322 = sphi 0, %s321
      %s336 = sphi 0, %s322
      %s344 = sphi 0, %s346
      %s347 = sphi 0, %s344
      %s348 = sphi 0, %s347
      %s364 = sphi 0, %s348
    $region4: #{tpu_custom_call.1} parent=1 // loop_header_branch
      %36 = sbr.rel (%p34) target = $region8
    $region5: #{tpu_custom_call.1} parent=1 // loop_body
      %s38 = ssub.s32 %s33, 1
      %s39 = ssub.s32 %s33, 2
      %s46 = sadd.s32 1, %s41
      %p47 = scmp.ge.s32.totalorder %s46, 1
      %s48 = scalar_select %p47, 0, %s46
      %s49 = sadd.s32 1, %s40
      %s50 = scalar_select %p47, %s49, %s40
      %p51 = scmp.ge.s32.totalorder %s50, 2
      %s52 = scalar_select %p51, 0, %s50
      %s53 = ssub.s32 %s40, %s52
      %s54 = ssub.s32 %s41, %s48
      %s55 = sor.u32 %s53, %s54
      %p56 = scmp.eq.s32.totalorder %s55, 0
      %s58 = sadd.s32 %s57, 1
      %s59 = scalar_select %p56, %s57, %s58
      %p62 = pneg %p56
      %p63 = scmp.eq.s32.totalorder %s33, 1
      %p64 = por %p62, %p63
      %p65 = scmp.ne.s32.totalorder %s57, %s60
      %p66 = scmp.eq.s32.totalorder %s33, 0
      %p67 = por %p65, %p66
      %p68 = scmp.ne.s32.totalorder %s57, %s60
      %p69 = scmp.eq.s32.totalorder %s38, 1
      %p70 = por %p68, %p69
      %p71 = scmp.ne.s32.totalorder %s60, %s61
      %p72 = scmp.eq.s32.totalorder %s38, 0
      %p73 = por %p71, %p72
      %p74 = scmp.ne.s32.totalorder %s60, %s61
      %p75 = scmp.eq.s32.totalorder %s39, 1
      %p76 = por %p74, %p75
      %p78 = scmp.ne.s32.totalorder %s61, %s77
      %p79 = scmp.eq.s32.totalorder %s39, 0
      %p80 = por %p78, %p79
      %s81 = ssub.s32 %s40, %s52
      %s82 = ssub.s32 %s41, %s48
      %s83 = sor.u32 %s81, %s82
      %p84 = scmp.eq.s32.totalorder %s83, 0
      %s86 = sadd.s32 %s85, 1
      %s87 = scalar_select %p84, %s85, %s86
      %p90 = pneg %p84
      %p91 = scmp.eq.s32.totalorder %s33, 1
      %p92 = por %p90, %p91
      %p93 = scmp.ne.s32.totalorder %s85, %s88
      %p94 = scmp.eq.s32.totalorder %s33, 0
      %p95 = por %p93, %p94
      %p96 = scmp.ne.s32.totalorder %s85, %s88
      %p97 = scmp.eq.s32.totalorder %s38, 1
      %p98 = por %p96, %p97
      %p99 = scmp.ne.s32.totalorder %s88, %s89
      %p100 = scmp.eq.s32.totalorder %s38, 0
      %p101 = por %p99, %p100
      %p102 = scmp.ne.s32.totalorder %s88, %s89
      %p103 = scmp.eq.s32.totalorder %s39, 1
      %p104 = por %p102, %p103
      %p106 = scmp.ne.s32.totalorder %s89, %s105
      %p107 = scmp.eq.s32.totalorder %s39, 0
      %p108 = por %p106, %p107
      %s110 = sadd.s32 %s109, 1
      %p113 = scmp.eq.s32.totalorder %s33, 1
      %p114 = scmp.ne.s32.totalorder %s109, %s111
      %p115 = scmp.eq.s32.totalorder %s33, 0
      %p116 = por %p114, %p115
      %p117 = scmp.ne.s32.totalorder %s109, %s111
      %p118 = scmp.eq.s32.totalorder %s38, 1
      %p119 = por %p117, %p118
      %p120 = scmp.ne.s32.totalorder %s111, %s112
      %p121 = scmp.eq.s32.totalorder %s38, 0
      %p122 = por %p120, %p121
      %p123 = scmp.ne.s32.totalorder %s111, %s112
      %p124 = scmp.eq.s32.totalorder %s39, 1
      %p125 = por %p123, %p124
      %p127 = scmp.ne.s32.totalorder %s112, %s126
      %p128 = scmp.eq.s32.totalorder %s39, 0
      %p129 = por %p127, %p128
      %s131 = sadd.s32 %s130, 1
      %p134 = scmp.eq.s32.totalorder %s33, 1
      %p135 = scmp.ne.s32.totalorder %s130, %s132
      %p136 = scmp.eq.s32.totalorder %s33, 0
      %p137 = por %p135, %p136
      %p138 = scmp.ne.s32.totalorder %s130, %s132
      %p139 = scmp.eq.s32.totalorder %s38, 1
      %p140 = por %p138, %p139
      %p141 = scmp.ne.s32.totalorder %s132, %s133
      %p142 = scmp.eq.s32.totalorder %s38, 0
      %p143 = por %p141, %p142
      %p144 = scmp.ne.s32.totalorder %s132, %s133
      %p145 = scmp.eq.s32.totalorder %s39, 1
      %p146 = por %p144, %p145
      %p148 = scmp.ne.s32.totalorder %s133, %s147
      %p149 = scmp.eq.s32.totalorder %s39, 0
      %p150 = por %p148, %p149
      %s152 = sadd.s32 %s151, 1
      %p155 = scmp.eq.s32.totalorder %s33, 1
      %p156 = scmp.ne.s32.totalorder %s151, %s153
      %p157 = scmp.eq.s32.totalorder %s33, 0
      %p158 = por %p156, %p157
      %p159 = scmp.ne.s32.totalorder %s151, %s153
      %p160 = scmp.eq.s32.totalorder %s38, 1
      %p161 = por %p159, %p160
      %p162 = scmp.ne.s32.totalorder %s153, %s154
      %p163 = scmp.eq.s32.totalorder %s38, 0
      %p164 = por %p162, %p163
      %p165 = scmp.ne.s32.totalorder %s153, %s154
      %p166 = scmp.eq.s32.totalorder %s39, 1
      %p167 = por %p165, %p166
      %p169 = scmp.ne.s32.totalorder %s154, %s168
      %p170 = scmp.eq.s32.totalorder %s39, 0
      %p171 = por %p169, %p170
      %s173 = sadd.s32 %s172, 1
      %p176 = scmp.eq.s32.totalorder %s33, 1
      %p177 = scmp.ne.s32.totalorder %s172, %s174
      %p178 = scmp.eq.s32.totalorder %s33, 0
      %p179 = por %p177, %p178
      %p180 = scmp.ne.s32.totalorder %s172, %s174
      %p181 = scmp.eq.s32.totalorder %s38, 1
      %p182 = por %p180, %p181
      %p183 = scmp.ne.s32.totalorder %s174, %s175
      %p184 = scmp.eq.s32.totalorder %s38, 0
      %p185 = por %p183, %p184
      %p186 = scmp.ne.s32.totalorder %s174, %s175
      %p187 = scmp.eq.s32.totalorder %s39, 1
      %p188 = por %p186, %p187
      %p190 = scmp.ne.s32.totalorder %s175, %s189
      %p191 = scmp.eq.s32.totalorder %s39, 0
      %p192 = por %p190, %p191
      %s194 = sadd.s32 %s193, 1
      %p197 = scmp.eq.s32.totalorder %s33, 1
      %p198 = scmp.ne.s32.totalorder %s193, %s195
      %p199 = scmp.eq.s32.totalorder %s33, 0
      %p200 = por %p198, %p199
      %p201 = scmp.ne.s32.totalorder %s193, %s195
      %p202 = scmp.eq.s32.totalorder %s38, 1
      %p203 = por %p201, %p202
      %p204 = scmp.ne.s32.totalorder %s195, %s196
      %p205 = scmp.eq.s32.totalorder %s38, 0
      %p206 = por %p204, %p205
      %p207 = scmp.ne.s32.totalorder %s195, %s196
      %p208 = scmp.eq.s32.totalorder %s39, 1
      %p209 = por %p207, %p208
      %p211 = scmp.ne.s32.totalorder %s196, %s210
      %p212 = scmp.eq.s32.totalorder %s39, 0
      %p213 = por %p211, %p212
      %s215 = sadd.s32 %s214, 1
      %p218 = scmp.eq.s32.totalorder %s33, 1
      %p219 = scmp.ne.s32.totalorder %s214, %s216
      %p220 = scmp.eq.s32.totalorder %s33, 0
      %p221 = por %p219, %p220
      %p222 = scmp.ne.s32.totalorder %s214, %s216
      %p223 = scmp.eq.s32.totalorder %s38, 1
      %p224 = por %p222, %p223
      %p225 = scmp.ne.s32.totalorder %s216, %s217
      %p226 = scmp.eq.s32.totalorder %s38, 0
      %p227 = por %p225, %p226
      %p228 = scmp.ne.s32.totalorder %s216, %s217
      %p229 = scmp.eq.s32.totalorder %s39, 1
      %p230 = por %p228, %p229
      %p232 = scmp.ne.s32.totalorder %s217, %s231
      %p233 = scmp.eq.s32.totalorder %s39, 0
      %p234 = por %p232, %p233
      %s236 = sadd.s32 %s235, 1
      %p239 = scmp.eq.s32.totalorder %s33, 1
      %p240 = scmp.ne.s32.totalorder %s235, %s237
      %p241 = scmp.eq.s32.totalorder %s33, 0
      %p242 = por %p240, %p241
      %p243 = scmp.ne.s32.totalorder %s235, %s237
      %p244 = scmp.eq.s32.totalorder %s38, 1
      %p245 = por %p243, %p244
      %p246 = scmp.ne.s32.totalorder %s237, %s238
      %p247 = scmp.eq.s32.totalorder %s38, 0
      %p248 = por %p246, %p247
      %p249 = scmp.ne.s32.totalorder %s237, %s238
      %p250 = scmp.eq.s32.totalorder %s39, 1
      %p251 = por %p249, %p250
      %p253 = scmp.ne.s32.totalorder %s238, %s252
      %p254 = scmp.eq.s32.totalorder %s39, 0
      %p255 = por %p253, %p254
      %s257 = sadd.s32 %s256, 1
      %p260 = scmp.eq.s32.totalorder %s33, 1
      %p261 = scmp.ne.s32.totalorder %s256, %s258
      %p262 = scmp.eq.s32.totalorder %s33, 0
      %p263 = por %p261, %p262
      %p264 = scmp.ne.s32.totalorder %s256, %s258
      %p265 = scmp.eq.s32.totalorder %s38, 1
      %p266 = por %p264, %p265
      %p267 = scmp.ne.s32.totalorder %s258, %s259
      %p268 = scmp.eq.s32.totalorder %s38, 0
      %p269 = por %p267, %p268
      %p270 = scmp.ne.s32.totalorder %s258, %s259
      %p271 = scmp.eq.s32.totalorder %s39, 1
      %p272 = por %p270, %p271
      %p274 = scmp.ne.s32.totalorder %s259, %s273
      %p275 = scmp.eq.s32.totalorder %s39, 0
      %p276 = por %p274, %p275
      %s278 = sadd.s32 %s277, 1
      %p281 = scmp.eq.s32.totalorder %s33, 1
      %p282 = scmp.ne.s32.totalorder %s277, %s279
      %p283 = scmp.eq.s32.totalorder %s33, 0
      %p284 = por %p282, %p283
      %p285 = scmp.ne.s32.totalorder %s277, %s279
      %p286 = scmp.eq.s32.totalorder %s38, 1
      %p287 = por %p285, %p286
      %p288 = scmp.ne.s32.totalorder %s279, %s280
      %p289 = scmp.eq.s32.totalorder %s38, 0
      %p290 = por %p288, %p289
      %p291 = scmp.ne.s32.totalorder %s279, %s280
      %p292 = scmp.eq.s32.totalorder %s39, 1
      %p293 = por %p291, %p292
      %p295 = scmp.ne.s32.totalorder %s280, %s294
      %p296 = scmp.eq.s32.totalorder %s39, 0
      %p297 = por %p295, %p296
      %s299 = sadd.s32 %s298, 1
      %p302 = scmp.eq.s32.totalorder %s33, 1
      %p303 = scmp.ne.s32.totalorder %s298, %s300
      %p304 = scmp.eq.s32.totalorder %s33, 0
      %p305 = por %p303, %p304
      %p306 = scmp.ne.s32.totalorder %s298, %s300
      %p307 = scmp.eq.s32.totalorder %s38, 1
      %p308 = por %p306, %p307
      %p309 = scmp.ne.s32.totalorder %s300, %s301
      %p310 = scmp.eq.s32.totalorder %s38, 0
      %p311 = por %p309, %p310
      %p312 = scmp.ne.s32.totalorder %s300, %s301
      %p313 = scmp.eq.s32.totalorder %s39, 1
      %p314 = por %p312, %p313
      %p316 = scmp.ne.s32.totalorder %s301, %s315
      %p317 = scmp.eq.s32.totalorder %s39, 0
      %p318 = por %p316, %p317
      %s320 = sadd.s32 %s319, 1
      %p323 = scmp.eq.s32.totalorder %s33, 1
      %p324 = scmp.ne.s32.totalorder %s319, %s321
      %p325 = scmp.eq.s32.totalorder %s33, 0
      %p326 = por %p324, %p325
      %p327 = scmp.ne.s32.totalorder %s319, %s321
      %p328 = scmp.eq.s32.totalorder %s38, 1
      %p329 = por %p327, %p328
      %p330 = scmp.ne.s32.totalorder %s321, %s322
      %p331 = scmp.eq.s32.totalorder %s38, 0
      %p332 = por %p330, %p331
      %p333 = scmp.ne.s32.totalorder %s321, %s322
      %p334 = scmp.eq.s32.totalorder %s39, 1
      %p335 = por %p333, %p334
      %p337 = scmp.ne.s32.totalorder %s322, %s336
      %p338 = scmp.eq.s32.totalorder %s39, 0
      %p339 = por %p337, %p338
      %s340 = ssub.s32 %s40, %s52
      %s341 = ssub.s32 %s41, %s48
      %s342 = sor.u32 %s340, %s341
      %p343 = scmp.eq.s32.totalorder %s342, 0
      %s345 = sadd.s32 %s344, 1
      %s346 = scalar_select %p343, %s344, %s345
      %p349 = pneg %p343
      %p350 = scmp.eq.s32.totalorder %s33, 1
      %p351 = por %p349, %p350
      %p352 = scmp.ne.s32.totalorder %s344, %s347
      %p353 = scmp.eq.s32.totalorder %s33, 0
      %p354 = por %p352, %p353
      %p355 = scmp.ne.s32.totalorder %s344, %s347
      %p356 = scmp.eq.s32.totalorder %s38, 1
      %p357 = por %p355, %p356
      %p358 = scmp.ne.s32.totalorder %s347, %s348
      %p359 = scmp.eq.s32.totalorder %s38, 0
      %p360 = por %p358, %p359
      %p361 = scmp.ne.s32.totalorder %s347, %s348
      %p362 = scmp.eq.s32.totalorder %s39, 1
      %p363 = por %p361, %p362
      %p365 = scmp.ne.s32.totalorder %s348, %s364
      %p366 = scmp.eq.s32.totalorder %s39, 0
      %p367 = por %p365, %p366
      %p368 = scmp.le.s32.totalorder 1, %s33
      %p369 = scmp.lt.s32.totalorder %s33, 3
      %p370 = pnand %p368, %p369
      %p371 = pneg %p370
      // Predicated region
      $region9: #{tpu_custom_call.1} parent=5 // pred_check
        _
      $region10: #{tpu_custom_call.1} parent=5 // pred_check_branch
        %373 = sbr.rel (%p370) target = $region12
      $region11: #{tpu_custom_call.1} parent=5 // pred_region
        %s374 = ssub.s32 %s33, 1
        // Predicated region
        $region13: #{tpu_custom_call.1} parent=11 // pred_check
          %p375 = pneg %p122
        $region14: #{tpu_custom_call.1} parent=11 // pred_check_branch
          %377 = sbr.rel (%p375) target = $region16
        $region15: #{tpu_custom_call.1} parent=11 // pred_region
          %s379 = ssub.s32 16, 16
          %380 = vsyncadd [#allocation6], %s379
          %s382 = sshll.u32 [#allocation7], 4
          %s383 = int_to_ptr.vmem [resolvable:$true] %s382
          %385 = dma.hbm_to_vmem [thread:$0]  %s2, 16, %s383, [#allocation6]
        $region16: #{tpu_custom_call.1} parent=11 // pred_fallthru
          _
        // Predicated region
        $region17: #{tpu_custom_call.1} parent=11 // pred_check
          %p386 = pneg %p143
        $region18: #{tpu_custom_call.1} parent=11 // pred_check_branch
          %388 = sbr.rel (%p386) target = $region20
        $region19: #{tpu_custom_call.1} parent=11 // pred_region
          %s390 = ssub.s32 16, 16
          %391 = vsyncadd [#allocation9], %s390
          %s393 = sshll.u32 [#allocation8], 4
          %s394 = int_to_ptr.vmem [resolvable:$true] %s393
          %396 = dma.hbm_to_vmem [thread:$0]  %s3, 16, %s394, [#allocation9]
        $region20: #{tpu_custom_call.1} parent=11 // pred_fallthru
          _
        // Predicated region
        $region21: #{tpu_custom_call.1} parent=11 // pred_check
          %p397 = pneg %p164
        $region22: #{tpu_custom_call.1} parent=11 // pred_check_branch
          %399 = sbr.rel (%p397) target = $region24
        $region23: #{tpu_custom_call.1} parent=11 // pred_region
          %s401 = ssub.s32 16, 16
          %402 = vsyncadd [#allocation9], %s401
          %s404 = sshll.u32 [#allocation10], 4
          %s405 = int_to_ptr.vmem [resolvable:$true] %s404
          %407 = dma.hbm_to_vmem [thread:$0]  %s4, 16, %s405, [#allocation9]
        $region24: #{tpu_custom_call.1} parent=11 // pred_fallthru
          _
        // Predicated region
        $region25: #{tpu_custom_call.1} parent=11 // pred_check
          %p408 = pneg %p185
        $region26: #{tpu_custom_call.1} parent=11 // pred_check_branch
          %410 = sbr.rel (%p408) target = $region28
        $region27: #{tpu_custom_call.1} parent=11 // pred_region
          %s412 = ssub.s32 16, 16
          %413 = vsyncadd [#allocation12], %s412
          %s415 = sshll.u32 [#allocation11], 4
          %s416 = int_to_ptr.vmem [resolvable:$true] %s415
          %418 = dma.hbm_to_vmem [thread:$0]  %s5, 16, %s416, [#allocation12]
        $region28: #{tpu_custom_call.1} parent=11 // pred_fallthru
          _
        // Predicated region
        $region29: #{tpu_custom_call.1} parent=11 // pred_check
          %p419 = pneg %p206
        $region30: #{tpu_custom_call.1} parent=11 // pred_check_branch
          %421 = sbr.rel (%p419) target = $region32
        $region31: #{tpu_custom_call.1} parent=11 // pred_region
          %s423 = ssub.s32 256, 256
          %424 = vsyncadd [#allocation12], %s423
          %s425 = sshll.u32 [#allocation13], 4
          %s426 = int_to_ptr.vmem [resolvable:$true] %s425
          %431 = dma.hbm_to_vmem [thread:$0]  %s6, 256, %s426, [#allocation12], 64, 64, 4
        $region32: #{tpu_custom_call.1} parent=11 // pred_fallthru
          _
        // Predicated region
        $region33: #{tpu_custom_call.1} parent=11 // pred_check
          %p432 = pneg %p227
        $region34: #{tpu_custom_call.1} parent=11 // pred_check_branch
          %434 = sbr.rel (%p432) target = $region36
        $region35: #{tpu_custom_call.1} parent=11 // pred_region
          %s436 = ssub.s32 16, 16
          %437 = vsyncadd [#allocation15], %s436
          %s439 = sshll.u32 [#allocation14], 4
          %s440 = int_to_ptr.vmem [resolvable:$true] %s439
          %442 = dma.hbm_to_vmem [thread:$0]  %s7, 16, %s440, [#allocation15]
        $region36: #{tpu_custom_call.1} parent=11 // pred_fallthru
          _
        // Predicated region
        $region37: #{tpu_custom_call.1} parent=11 // pred_check
          %p443 = pneg %p248
        $region38: #{tpu_custom_call.1} parent=11 // pred_check_branch
          %445 = sbr.rel (%p443) target = $region40
        $region39: #{tpu_custom_call.1} parent=11 // pred_region
          %s447 = ssub.s32 256, 256
          %448 = vsyncadd [#allocation15], %s447
          %s449 = sshll.u32 [#allocation16], 4
          %s450 = int_to_ptr.vmem [resolvable:$true] %s449
          %455 = dma.hbm_to_vmem [thread:$0]  %s8, 256, %s450, [#allocation15], 64, 64, 4
        $region40: #{tpu_custom_call.1} parent=11 // pred_fallthru
          _
        // Predicated region
        $region41: #{tpu_custom_call.1} parent=11 // pred_check
          %p456 = pneg %p269
        $region42: #{tpu_custom_call.1} parent=11 // pred_check_branch
          %458 = sbr.rel (%p456) target = $region44
        $region43: #{tpu_custom_call.1} parent=11 // pred_region
          %s460 = ssub.s32 16, 16
          %461 = vsyncadd [#allocation18], %s460
          %s463 = sshll.u32 [#allocation17], 4
          %s464 = int_to_ptr.vmem [resolvable:$true] %s463
          %466 = dma.hbm_to_vmem [thread:$0]  %s9, 16, %s464, [#allocation18]
        $region44: #{tpu_custom_call.1} parent=11 // pred_fallthru
          _
        // Predicated region
        $region45: #{tpu_custom_call.1} parent=11 // pred_check
          %p467 = pneg %p290
        $region46: #{tpu_custom_call.1} parent=11 // pred_check_branch
          %469 = sbr.rel (%p467) target = $region48
        $region47: #{tpu_custom_call.1} parent=11 // pred_region
          %s471 = ssub.s32 256, 256
          %472 = vsyncadd [#allocation18], %s471
          %s473 = sshll.u32 [#allocation19], 4
          %s474 = int_to_ptr.vmem [resolvable:$true] %s473
          %479 = dma.hbm_to_vmem [thread:$0]  %s10, 256, %s474, [#allocation18], 64, 64, 4
        $region48: #{tpu_custom_call.1} parent=11 // pred_fallthru
          _
        // Predicated region
        $region49: #{tpu_custom_call.1} parent=11 // pred_check
          %p480 = pneg %p311
        $region50: #{tpu_custom_call.1} parent=11 // pred_check_branch
          %482 = sbr.rel (%p480) target = $region52
        $region51: #{tpu_custom_call.1} parent=11 // pred_region
          %s484 = ssub.s32 16, 16
          %485 = vsyncadd [#allocation21], %s484
          %s487 = sshll.u32 [#allocation20], 4
          %s488 = int_to_ptr.vmem [resolvable:$true] %s487
          %490 = dma.hbm_to_vmem [thread:$0]  %s11, 16, %s488, [#allocation21]
        $region52: #{tpu_custom_call.1} parent=11 // pred_fallthru
          _
        // Predicated region
        $region53: #{tpu_custom_call.1} parent=11 // pred_check
          %p491 = pneg %p332
        $region54: #{tpu_custom_call.1} parent=11 // pred_check_branch
          %493 = sbr.rel (%p491) target = $region56
        $region55: #{tpu_custom_call.1} parent=11 // pred_region
          %s495 = ssub.s32 1024, 1024
          %496 = vsyncadd [#allocation21], %s495
          %s497 = sshll.u32 [#allocation22], 4
          %s498 = int_to_ptr.vmem [resolvable:$true] %s497
          %503 = dma.hbm_to_vmem [thread:$0]  %s12, 1024, %s498, [#allocation21], 128, 128, 8
        $region56: #{tpu_custom_call.1} parent=11 // pred_fallthru
          _
      $region12: #{tpu_custom_call.1} parent=5 // pred_fallthru
        _
      %p504 = scmp.lt.s32.totalorder %s33, 2
      // Predicated region
      $region57: #{tpu_custom_call.1} parent=5 // pred_check
        %p505 = pneg %p504
      $region58: #{tpu_custom_call.1} parent=5 // pred_check_branch
        %507 = sbr.rel (%p505) target = $region60
      $region59: #{tpu_custom_call.1} parent=5 // pred_region
        // Predicated region
        $region61: #{tpu_custom_call.1} parent=59 // pred_check
          %p508 = pneg %p67
        $region62: #{tpu_custom_call.1} parent=59 // pred_check_branch
          %510 = sbr.rel (%p508) target = $region64
        $region63: #{tpu_custom_call.1} parent=59 // pred_region
          %s511 = sand.u32 %s57, 1
          %s512 = scalar_lea.sflag [#allocation3], %s511
          %s513 = sand.u32 %s57, 1
          %s514 = smul.addr %s513, 64
          %s515 = scalar_lea.vmem [#allocation2], %s514
          %s516 = smul.u32 8, %s41
          %s518 = ssub.s32 1024, 1024
          %519 = vsyncadd %s512, %s518
          %s520 = smul.addr %s40, 8
          %s521 = sadd.s32 %s516, %s520
          %s522 = smul.addr %s521, 128
          %s523 = scalar_lea.hbm %s0, %s522
          %s524 = sshll.u32 %s515, 4
          %s525 = int_to_ptr.vmem [resolvable:$true] %s524
          %530 = dma.hbm_to_vmem [thread:$0]  %s523, 1024, %s525, %s512, 128, 128, 8
        $region64: #{tpu_custom_call.1} parent=59 // pred_fallthru
          _
        // Predicated region
        $region65: #{tpu_custom_call.1} parent=59 // pred_check
          %p531 = pneg %p95
        $region66: #{tpu_custom_call.1} parent=59 // pred_check_branch
          %533 = sbr.rel (%p531) target = $region68
        $region67: #{tpu_custom_call.1} parent=59 // pred_region
          %s534 = sand.u32 %s33, 1
          %s535 = scalar_lea.sflag [#allocation6], %s534
          %s536 = sand.u32 %s85, 1
          %s537 = smul.addr %s536, 64
          %s538 = scalar_lea.vmem [#allocation5], %s537
          %s539 = smul.u32 8, %s41
          %s541 = ssub.s32 1024, 1024
          %542 = vsyncadd %s535, %s541
          %s543 = smul.addr %s40, 8
          %s544 = sadd.s32 %s539, %s543
          %s545 = smul.addr %s544, 128
          %s546 = scalar_lea.hbm %s1, %s545
          %s547 = sshll.u32 %s538, 4
          %s548 = int_to_ptr.vmem [resolvable:$true] %s547
          %553 = dma.hbm_to_vmem [thread:$0]  %s546, 1024, %s548, %s535, 128, 128, 8
        $region68: #{tpu_custom_call.1} parent=59 // pred_fallthru
          _
      $region60: #{tpu_custom_call.1} parent=5 // pred_fallthru
        _
      %p554 = scmp.le.s32.totalorder 1, %s33
      %p555 = scmp.lt.s32.totalorder %s33, 3
      %p556 = pnand %p554, %p555
      %p557 = pneg %p556
      // Predicated region
      $region69: #{tpu_custom_call.1} parent=5 // pred_check
        _
      $region70: #{tpu_custom_call.1} parent=5 // pred_check_branch
        %559 = sbr.rel (%p556) target = $region72
      $region71: #{tpu_custom_call.1} parent=5 // pred_region
        %s560 = ssub.s32 %s33, 1
        %s561 = sand.u32 %s60, 1
        %s562 = scalar_lea.sflag [#allocation3], %s561
        %s563 = sand.u32 %s60, 1
        %s564 = smul.addr %s563, 64
        %s565 = scalar_lea.vmem [#allocation2], %s564
        // Predicated region
        $region73: #{tpu_custom_call.1} parent=71 // pred_check
          %p566 = pneg %p73
        $region74: #{tpu_custom_call.1} parent=71 // pred_check_branch
          %568 = sbr.rel (%p566) target = $region76
        $region75: #{tpu_custom_call.1} parent=71 // pred_region
          %569 = dma.done %s562, 1024
        $region76: #{tpu_custom_call.1} parent=71 // pred_fallthru
          _
        %s570 = sand.u32 %s38, 1
        %s571 = scalar_lea.sflag [#allocation6], %s570
        %s572 = sand.u32 %s88, 1
        %s573 = smul.addr %s572, 64
        %s574 = scalar_lea.vmem [#allocation5], %s573
        // Predicated region
        $region77: #{tpu_custom_call.1} parent=71 // pred_check
          %p575 = pneg %p101
        $region78: #{tpu_custom_call.1} parent=71 // pred_check_branch
          %577 = sbr.rel (%p575) target = $region80
        $region79: #{tpu_custom_call.1} parent=71 // pred_region
          %578 = dma.done %s571, 1024
        $region80: #{tpu_custom_call.1} parent=71 // pred_fallthru
          _
        // Predicated region
        $region81: #{tpu_custom_call.1} parent=71 // pred_check
          %p579 = pneg %p122
        $region82: #{tpu_custom_call.1} parent=71 // pred_check_branch
          %581 = sbr.rel (%p579) target = $region84
        $region83: #{tpu_custom_call.1} parent=71 // pred_region
          %582 = dma.done [#allocation6], 16
        $region84: #{tpu_custom_call.1} parent=71 // pred_fallthru
          _
        // Predicated region
        $region85: #{tpu_custom_call.1} parent=71 // pred_check
          %p583 = pneg %p143
        $region86: #{tpu_custom_call.1} parent=71 // pred_check_branch
          %585 = sbr.rel (%p583) target = $region88
        $region87: #{tpu_custom_call.1} parent=71 // pred_region
          %586 = dma.done [#allocation9], 16
        $region88: #{tpu_custom_call.1} parent=71 // pred_fallthru
          _
        // Predicated region
        $region89: #{tpu_custom_call.1} parent=71 // pred_check
          %p587 = pneg %p164
        $region90: #{tpu_custom_call.1} parent=71 // pred_check_branch
          %589 = sbr.rel (%p587) target = $region92
        $region91: #{tpu_custom_call.1} parent=71 // pred_region
          %590 = dma.done [#allocation9], 16
        $region92: #{tpu_custom_call.1} parent=71 // pred_fallthru
          _
        // Predicated region
        $region93: #{tpu_custom_call.1} parent=71 // pred_check
          %p591 = pneg %p185
        $region94: #{tpu_custom_call.1} parent=71 // pred_check_branch
          %593 = sbr.rel (%p591) target = $region96
        $region95: #{tpu_custom_call.1} parent=71 // pred_region
          %594 = dma.done [#allocation12], 16
        $region96: #{tpu_custom_call.1} parent=71 // pred_fallthru
          _
        // Predicated region
        $region97: #{tpu_custom_call.1} parent=71 // pred_check
          %p595 = pneg %p206
        $region98: #{tpu_custom_call.1} parent=71 // pred_check_branch
          %597 = sbr.rel (%p595) target = $region100
        $region99: #{tpu_custom_call.1} parent=71 // pred_region
          %598 = dma.done [#allocation12], 256
        $region100: #{tpu_custom_call.1} parent=71 // pred_fallthru
          _
        // Predicated region
        $region101: #{tpu_custom_call.1} parent=71 // pred_check
          %p599 = pneg %p227
        $region102: #{tpu_custom_call.1} parent=71 // pred_check_branch
          %601 = sbr.rel (%p599) target = $region104
        $region103: #{tpu_custom_call.1} parent=71 // pred_region
          %602 = dma.done [#allocation15], 16
        $region104: #{tpu_custom_call.1} parent=71 // pred_fallthru
          _
        // Predicated region
        $region105: #{tpu_custom_call.1} parent=71 // pred_check
          %p603 = pneg %p248
        $region106: #{tpu_custom_call.1} parent=71 // pred_check_branch
          %605 = sbr.rel (%p603) target = $region108
        $region107: #{tpu_custom_call.1} parent=71 // pred_region
          %606 = dma.done [#allocation15], 256
        $region108: #{tpu_custom_call.1} parent=71 // pred_fallthru
          _
        // Predicated region
        $region109: #{tpu_custom_call.1} parent=71 // pred_check
          %p607 = pneg %p269
        $region110: #{tpu_custom_call.1} parent=71 // pred_check_branch
          %609 = sbr.rel (%p607) target = $region112
        $region111: #{tpu_custom_call.1} parent=71 // pred_region
          %610 = dma.done [#allocation18], 16
        $region112: #{tpu_custom_call.1} parent=71 // pred_fallthru
          _
        // Predicated region
        $region113: #{tpu_custom_call.1} parent=71 // pred_check
          %p611 = pneg %p290
        $region114: #{tpu_custom_call.1} parent=71 // pred_check_branch
          %613 = sbr.rel (%p611) target = $region116
        $region115: #{tpu_custom_call.1} parent=71 // pred_region
          %614 = dma.done [#allocation18], 256
        $region116: #{tpu_custom_call.1} parent=71 // pred_fallthru
          _
        // Predicated region
        $region117: #{tpu_custom_call.1} parent=71 // pred_check
          %p615 = pneg %p311
        $region118: #{tpu_custom_call.1} parent=71 // pred_check_branch
          %617 = sbr.rel (%p615) target = $region120
        $region119: #{tpu_custom_call.1} parent=71 // pred_region
          %618 = dma.done [#allocation21], 16
        $region120: #{tpu_custom_call.1} parent=71 // pred_fallthru
          _
        // Predicated region
        $region121: #{tpu_custom_call.1} parent=71 // pred_check
          %p619 = pneg %p332
        $region122: #{tpu_custom_call.1} parent=71 // pred_check_branch
          %621 = sbr.rel (%p619) target = $region124
        $region123: #{tpu_custom_call.1} parent=71 // pred_region
          %622 = dma.done [#allocation21], 1024
        $region124: #{tpu_custom_call.1} parent=71 // pred_fallthru
          _
        %s623 = sand.u32 %s60, 1
        %s624 = scalar_lea.sflag [#allocation3], %s623
        %s625 = sand.u32 %s60, 1
        %s626 = smul.addr %s625, 64
        %s627 = scalar_lea.vmem [#allocation2], %s626
        %p628 = pneg %p73
        %p629 = pneg %p70
        %s630 = sand.u32 %s38, 1
        %s631 = scalar_lea.sflag [#allocation6], %s630
        %s632 = sand.u32 %s88, 1
        %s633 = smul.addr %s632, 64
        %s634 = scalar_lea.vmem [#allocation5], %s633
        %p635 = pneg %p101
        %p636 = pneg %p98
        %p637 = pneg %p122
        %p638 = pneg %p119
        %p639 = pneg %p143
        %p640 = pneg %p140
        %p641 = pneg %p164
        %p642 = pneg %p161
        %p643 = pneg %p185
        %p644 = pneg %p182
        %p645 = pneg %p206
        %p646 = pneg %p203
        %p647 = pneg %p227
        %p648 = pneg %p224
        %p649 = pneg %p248
        %p650 = pneg %p245
        %p651 = pneg %p269
        %p652 = pneg %p266
        %p653 = pneg %p290
        %p654 = pneg %p287
        %p655 = pneg %p311
        %p656 = pneg %p308
        %p657 = pneg %p332
        %p658 = pneg %p329
        %p659 = pneg %p360
        %p660 = pneg %p357
        %s661 = sand.u32 %s347, 1
        %s662 = scalar_lea.sflag [#allocation4], %s661
        %s663 = sand.u32 %s347, 1
        %s664 = smul.addr %s663, 32
        %s665 = scalar_lea.vmem [#allocation23], %s664
        %s666 = smul.u32 8, %s43
        %s667 = smul.u32 8, %s43
        %s668 = smul.u32 8, %s43
        %v670 = vld [vmem:[%s565] sm:$0xff]
        %v671 = vld [vmem:[%s565 + $0x8] sm:$0xff]
        %v672 = vld [vmem:[%s565 + $0x10] sm:$0xff]
        %v673 = vld [vmem:[%s565 + $0x18] sm:$0xff]
        %v674 = vld [vmem:[%s565 + $0x20] sm:$0xff]
        %v675 = vld [vmem:[%s565 + $0x28] sm:$0xff]
        %v676 = vld [vmem:[%s565 + $0x30] sm:$0xff]
        %v677 = vld [vmem:[%s565 + $0x38] sm:$0xff]
        %vm678 = vcmask 261120
        %v679 = vsel %vm678, %v670, 0.0
        %680 = vadd.xlane.f32.xlu0 %v679
        %v681 = vpop.xlane.xlu0 %680
        %v682 = vsel %vm678, %v671, 0.0
        %683 = vadd.xlane.f32.xlu0 %v682
        %v684 = vpop.xlane.xlu0 %683
        %v685 = vsel %vm678, %v672, 0.0
        %686 = vadd.xlane.f32.xlu0 %v685
        %v687 = vpop.xlane.xlu0 %686
        %v688 = vsel %vm678, %v673, 0.0
        %689 = vadd.xlane.f32.xlu0 %v688
        %v690 = vpop.xlane.xlu0 %689
        %v691 = vsel %vm678, %v674, 0.0
        %692 = vadd.xlane.f32.xlu0 %v691
        %v693 = vpop.xlane.xlu0 %692
        %v694 = vsel %vm678, %v675, 0.0
        %695 = vadd.xlane.f32.xlu0 %v694
        %v696 = vpop.xlane.xlu0 %695
        %v697 = vsel %vm678, %v676, 0.0
        %698 = vadd.xlane.f32.xlu0 %v697
        %v699 = vpop.xlane.xlu0 %698
        %v700 = vsel %vm678, %v677, 0.0
        %701 = vadd.xlane.f32.xlu0 %v700
        %v702 = vpop.xlane.xlu0 %701
        %v703 = vrcp.pop 32.0
        %v704 = vmul.f32 %v681, %v703
        %v705 = vmul.f32 %v684, %v703
        %v706 = vmul.f32 %v687, %v703
        %v707 = vmul.f32 %v690, %v703
        %v708 = vmul.f32 %v693, %v703
        %v709 = vmul.f32 %v696, %v703
        %v710 = vmul.f32 %v699, %v703
        %v711 = vmul.f32 %v702, %v703
        %v712 = vsub.f32 %v670, %v704
        %v713 = vsub.f32 %v671, %v705
        %v714 = vsub.f32 %v672, %v706
        %v715 = vsub.f32 %v673, %v707
        %v716 = vsub.f32 %v674, %v708
        %v717 = vsub.f32 %v675, %v709
        %v718 = vsub.f32 %v676, %v710
        %v719 = vsub.f32 %v677, %v711
        %v720 = vmul.f32 %v712, %v712
        %v721 = vmul.f32 %v713, %v713
        %v722 = vmul.f32 %v714, %v714
        %v723 = vmul.f32 %v715, %v715
        %v724 = vmul.f32 %v716, %v716
        %v725 = vmul.f32 %v717, %v717
        %v726 = vmul.f32 %v718, %v718
        %v727 = vmul.f32 %v719, %v719
        %v728 = vsel %vm678, %v720, 0.0
        %729 = vadd.xlane.f32.xlu0 %v728
        %v730 = vpop.xlane.xlu0 %729
        %v731 = vsel %vm678, %v721, 0.0
        %732 = vadd.xlane.f32.xlu0 %v731
        %v733 = vpop.xlane.xlu0 %732
        %v734 = vsel %vm678, %v722, 0.0
        %735 = vadd.xlane.f32.xlu0 %v734
        %v736 = vpop.xlane.xlu0 %735
        %v737 = vsel %vm678, %v723, 0.0
        %738 = vadd.xlane.f32.xlu0 %v737
        %v739 = vpop.xlane.xlu0 %738
        %v740 = vsel %vm678, %v724, 0.0
        %741 = vadd.xlane.f32.xlu0 %v740
        %v742 = vpop.xlane.xlu0 %741
        %v743 = vsel %vm678, %v725, 0.0
        %744 = vadd.xlane.f32.xlu0 %v743
        %v745 = vpop.xlane.xlu0 %744
        %v746 = vsel %vm678, %v726, 0.0
        %747 = vadd.xlane.f32.xlu0 %v746
        %v748 = vpop.xlane.xlu0 %747
        %v749 = vsel %vm678, %v727, 0.0
        %750 = vadd.xlane.f32.xlu0 %v749
        %v751 = vpop.xlane.xlu0 %750
        %v752 = vmul.f32 %v730, %v703
        %v753 = vmul.f32 %v733, %v703
        %v754 = vmul.f32 %v736, %v703
        %v755 = vmul.f32 %v739, %v703
        %v756 = vmul.f32 %v742, %v703
        %v757 = vmul.f32 %v745, %v703
        %v758 = vmul.f32 %v748, %v703
        %v759 = vmul.f32 %v751, %v703
        %v760 = vadd.f32 %v752, 1e-05
        %v761 = vadd.f32 %v753, 1e-05
        %v762 = vadd.f32 %v754, 1e-05
        %v763 = vadd.f32 %v755, 1e-05
        %v764 = vadd.f32 %v756, 1e-05
        %v765 = vadd.f32 %v757, 1e-05
        %v766 = vadd.f32 %v758, 1e-05
        %v767 = vadd.f32 %v759, 1e-05
        %v768 = vrsqrt.pop %v760
        %v769 = vrsqrt.pop %v761
        %v770 = vrsqrt.pop %v762
        %v771 = vrsqrt.pop %v763
        %v772 = vrsqrt.pop %v764
        %v773 = vrsqrt.pop %v765
        %v774 = vrsqrt.pop %v766
        %v775 = vrsqrt.pop %v767
        %v776 = vmul.f32 %v712, %v768
        %v777 = vmul.f32 %v713, %v769
        %v778 = vmul.f32 %v714, %v770
        %v779 = vmul.f32 %v715, %v771
        %v780 = vmul.f32 %v716, %v772
        %v781 = vmul.f32 %v717, %v773
        %v782 = vmul.f32 %v718, %v774
        %v783 = vmul.f32 %v719, %v775
        %v784 = vld [vmem:[#allocation7] sm:$0x1]
        %v786 = vlaneseq
        %v787 = vshrl.u32 %v786, 7
        %v788 = vsub.s32 0, %v787
        %v789 = vrot.slane %v784, %v788
        %v791 = vmul.f32 %v776, %v789
        %v792 = vmul.f32 %v777, %v789
        %v793 = vmul.f32 %v778, %v789
        %v794 = vmul.f32 %v779, %v789
        %v795 = vmul.f32 %v780, %v789
        %v796 = vmul.f32 %v781, %v789
        %v797 = vmul.f32 %v782, %v789
        %v798 = vmul.f32 %v783, %v789
        %v799 = vld [vmem:[#allocation8] sm:$0x1]
        %v801 = vlaneseq
        %v802 = vshrl.u32 %v801, 7
        %v803 = vsub.s32 0, %v802
        %v804 = vrot.slane %v799, %v803
        %v806 = vadd.f32 %v791, %v804
        %v807 = vadd.f32 %v792, %v804
        %v808 = vadd.f32 %v793, %v804
        %v809 = vadd.f32 %v794, %v804
        %v810 = vadd.f32 %v795, %v804
        %v811 = vadd.f32 %v796, %v804
        %v812 = vadd.f32 %v797, %v804
        %v813 = vadd.f32 %v798, %v804
        %v814 = vld [vmem:[%s574] sm:$0xff]
        %v815 = vld [vmem:[%s574 + $0x8] sm:$0xff]
        %v816 = vld [vmem:[%s574 + $0x10] sm:$0xff]
        %v817 = vld [vmem:[%s574 + $0x18] sm:$0xff]
        %v818 = vld [vmem:[%s574 + $0x20] sm:$0xff]
        %v819 = vld [vmem:[%s574 + $0x28] sm:$0xff]
        %v820 = vld [vmem:[%s574 + $0x30] sm:$0xff]
        %v821 = vld [vmem:[%s574 + $0x38] sm:$0xff]
        %v822 = vsel %vm678, %v814, 0.0
        %823 = vadd.xlane.f32.xlu0 %v822
        %v824 = vpop.xlane.xlu0 %823
        %v825 = vsel %vm678, %v815, 0.0
        %826 = vadd.xlane.f32.xlu0 %v825
        %v827 = vpop.xlane.xlu0 %826
        %v828 = vsel %vm678, %v816, 0.0
        %829 = vadd.xlane.f32.xlu0 %v828
        %v830 = vpop.xlane.xlu0 %829
        %v831 = vsel %vm678, %v817, 0.0
        %832 = vadd.xlane.f32.xlu0 %v831
        %v833 = vpop.xlane.xlu0 %832
        %v834 = vsel %vm678, %v818, 0.0
        %835 = vadd.xlane.f32.xlu0 %v834
        %v836 = vpop.xlane.xlu0 %835
        %v837 = vsel %vm678, %v819, 0.0
        %838 = vadd.xlane.f32.xlu0 %v837
        %v839 = vpop.xlane.xlu0 %838
        %v840 = vsel %vm678, %v820, 0.0
        %841 = vadd.xlane.f32.xlu0 %v840
        %v842 = vpop.xlane.xlu0 %841
        %v843 = vsel %vm678, %v821, 0.0
        %844 = vadd.xlane.f32.xlu0 %v843
        %v845 = vpop.xlane.xlu0 %844
        %v846 = vmul.f32 %v824, %v703
        %v847 = vmul.f32 %v827, %v703
        %v848 = vmul.f32 %v830, %v703
        %v849 = vmul.f32 %v833, %v703
        %v850 = vmul.f32 %v836, %v703
        %v851 = vmul.f32 %v839, %v703
        %v852 = vmul.f32 %v842, %v703
        %v853 = vmul.f32 %v845, %v703
        %v854 = vsub.f32 %v814, %v846
        %v855 = vsub.f32 %v815, %v847
        %v856 = vsub.f32 %v816, %v848
        %v857 = vsub.f32 %v817, %v849
        %v858 = vsub.f32 %v818, %v850
        %v859 = vsub.f32 %v819, %v851
        %v860 = vsub.f32 %v820, %v852
        %v861 = vsub.f32 %v821, %v853
        %v862 = vmul.f32 %v854, %v854
        %v863 = vmul.f32 %v855, %v855
        %v864 = vmul.f32 %v856, %v856
        %v865 = vmul.f32 %v857, %v857
        %v866 = vmul.f32 %v858, %v858
        %v867 = vmul.f32 %v859, %v859
        %v868 = vmul.f32 %v860, %v860
        %v869 = vmul.f32 %v861, %v861
        %v870 = vsel %vm678, %v862, 0.0
        %871 = vadd.xlane.f32.xlu0 %v870
        %v872 = vpop.xlane.xlu0 %871
        %v873 = vsel %vm678, %v863, 0.0
        %874 = vadd.xlane.f32.xlu0 %v873
        %v875 = vpop.xlane.xlu0 %874
        %v876 = vsel %vm678, %v864, 0.0
        %877 = vadd.xlane.f32.xlu0 %v876
        %v878 = vpop.xlane.xlu0 %877
        %v879 = vsel %vm678, %v865, 0.0
        %880 = vadd.xlane.f32.xlu0 %v879
        %v881 = vpop.xlane.xlu0 %880
        %v882 = vsel %vm678, %v866, 0.0
        %883 = vadd.xlane.f32.xlu0 %v882
        %v884 = vpop.xlane.xlu0 %883
        %v885 = vsel %vm678, %v867, 0.0
        %886 = vadd.xlane.f32.xlu0 %v885
        %v887 = vpop.xlane.xlu0 %886
        %v888 = vsel %vm678, %v868, 0.0
        %889 = vadd.xlane.f32.xlu0 %v888
        %v890 = vpop.xlane.xlu0 %889
        %v891 = vsel %vm678, %v869, 0.0
        %892 = vadd.xlane.f32.xlu0 %v891
        %v893 = vpop.xlane.xlu0 %892
        %v894 = vmul.f32 %v872, %v703
        %v895 = vmul.f32 %v875, %v703
        %v896 = vmul.f32 %v878, %v703
        %v897 = vmul.f32 %v881, %v703
        %v898 = vmul.f32 %v884, %v703
        %v899 = vmul.f32 %v887, %v703
        %v900 = vmul.f32 %v890, %v703
        %v901 = vmul.f32 %v893, %v703
        %v902 = vadd.f32 %v894, 1e-05
        %v903 = vadd.f32 %v895, 1e-05
        %v904 = vadd.f32 %v896, 1e-05
        %v905 = vadd.f32 %v897, 1e-05
        %v906 = vadd.f32 %v898, 1e-05
        %v907 = vadd.f32 %v899, 1e-05
        %v908 = vadd.f32 %v900, 1e-05
        %v909 = vadd.f32 %v901, 1e-05
        %v910 = vrsqrt.pop %v902
        %v911 = vrsqrt.pop %v903
        %v912 = vrsqrt.pop %v904
        %v913 = vrsqrt.pop %v905
        %v914 = vrsqrt.pop %v906
        %v915 = vrsqrt.pop %v907
        %v916 = vrsqrt.pop %v908
        %v917 = vrsqrt.pop %v909
        %v918 = vmul.f32 %v854, %v910
        %v919 = vmul.f32 %v855, %v911
        %v920 = vmul.f32 %v856, %v912
        %v921 = vmul.f32 %v857, %v913
        %v922 = vmul.f32 %v858, %v914
        %v923 = vmul.f32 %v859, %v915
        %v924 = vmul.f32 %v860, %v916
        %v925 = vmul.f32 %v861, %v917
        %v926 = vld [vmem:[#allocation10] sm:$0x1]
        %v928 = vlaneseq
        %v929 = vshrl.u32 %v928, 7
        %v930 = vsub.s32 0, %v929
        %v931 = vrot.slane %v926, %v930
        %v933 = vmul.f32 %v918, %v931
        %v934 = vmul.f32 %v919, %v931
        %v935 = vmul.f32 %v920, %v931
        %v936 = vmul.f32 %v921, %v931
        %v937 = vmul.f32 %v922, %v931
        %v938 = vmul.f32 %v923, %v931
        %v939 = vmul.f32 %v924, %v931
        %v940 = vmul.f32 %v925, %v931
        %v941 = vld [vmem:[#allocation11] sm:$0x1]
        %v943 = vlaneseq
        %v944 = vshrl.u32 %v943, 7
        %v945 = vsub.s32 0, %v944
        %v946 = vrot.slane %v941, %v945
        %v948 = vadd.f32 %v933, %v946
        %v949 = vadd.f32 %v934, %v946
        %v950 = vadd.f32 %v935, %v946
        %v951 = vadd.f32 %v936, %v946
        %v952 = vadd.f32 %v937, %v946
        %v953 = vadd.f32 %v938, %v946
        %v954 = vadd.f32 %v939, %v946
        %v955 = vadd.f32 %v940, %v946
        %v956 = vpack.c.bf16 %v806, %v806
        %v957 = vpack.c.bf16 %v807, %v807
        %v958 = vpack.c.bf16 %v808, %v808
        %v959 = vpack.c.bf16 %v809, %v809
        %v960 = vpack.c.bf16 %v810, %v810
        %v961 = vpack.c.bf16 %v811, %v811
        %v962 = vpack.c.bf16 %v812, %v812
        %v963 = vpack.c.bf16 %v813, %v813
        %v964 = vpack.c.bf16 %v948, %v948
        %v965 = vpack.c.bf16 %v949, %v949
        %v966 = vpack.c.bf16 %v950, %v950
        %v967 = vpack.c.bf16 %v951, %v951
        %v968 = vpack.c.bf16 %v952, %v952
        %v969 = vpack.c.bf16 %v953, %v953
        %v970 = vpack.c.bf16 %v954, %v954
        %v971 = vpack.c.bf16 %v955, %v955
        %v977 = vunpack.c.l.s4 1983009808
        %v978 = vunpack.c.0.s8 %v977
        %v979 = vlaneseq
        %v980 = vshrl.u32 %v979, 7
        %v981 = vsub.s32 %v978, %v980
        %v982 = vrot.slane %v956, %v981
        %v983 = vcombine.high %v982, %v982
        %v985 = vunpack.c.l.s4 1983009808
        %v986 = vunpack.c.0.s8 %v985
        %v987 = vlaneseq
        %v988 = vshrl.u32 %v987, 7
        %v989 = vsub.s32 %v986, %v988
        %v990 = vrot.slane %v957, %v989
        %v991 = vcombine.high %v990, %v990
        %v993 = vunpack.c.l.s4 1983009808
        %v994 = vunpack.c.0.s8 %v993
        %v995 = vlaneseq
        %v996 = vshrl.u32 %v995, 7
        %v997 = vsub.s32 %v994, %v996
        %v998 = vrot.slane %v958, %v997
        %v999 = vcombine.high %v998, %v998
        %v1001 = vunpack.c.l.s4 1983009808
        %v1002 = vunpack.c.0.s8 %v1001
        %v1003 = vlaneseq
        %v1004 = vshrl.u32 %v1003, 7
        %v1005 = vsub.s32 %v1002, %v1004
        %v1006 = vrot.slane %v959, %v1005
        %v1007 = vcombine.high %v1006, %v1006
        %v1013 = vunpack.c.l.s4 1983009808
        %v1014 = vunpack.c.0.s8 %v1013
        %v1015 = vlaneseq
        %v1016 = vshrl.u32 %v1015, 7
        %v1017 = vsub.s32 %v1014, %v1016
        %v1018 = vrot.slane %v960, %v1017
        %v1019 = vcombine.high %v1018, %v1018
        %v1021 = vunpack.c.l.s4 1983009808
        %v1022 = vunpack.c.0.s8 %v1021
        %v1023 = vlaneseq
        %v1024 = vshrl.u32 %v1023, 7
        %v1025 = vsub.s32 %v1022, %v1024
        %v1026 = vrot.slane %v961, %v1025
        %v1027 = vcombine.high %v1026, %v1026
        %v1029 = vunpack.c.l.s4 1983009808
        %v1030 = vunpack.c.0.s8 %v1029
        %v1031 = vlaneseq
        %v1032 = vshrl.u32 %v1031, 7
        %v1033 = vsub.s32 %v1030, %v1032
        %v1034 = vrot.slane %v962, %v1033
        %v1035 = vcombine.high %v1034, %v1034
        %v1037 = vunpack.c.l.s4 1983009808
        %v1038 = vunpack.c.0.s8 %v1037
        %v1039 = vlaneseq
        %v1040 = vshrl.u32 %v1039, 7
        %v1041 = vsub.s32 %v1038, %v1040
        %v1042 = vrot.slane %v963, %v1041
        %v1043 = vcombine.high %v1042, %v1042
        %v1044 = vcombine.low %v956, %v957
        %v1045 = vcombine.low %v958, %v959
        %v1047 = vunpack.c.l.s4 1983009808
        %v1048 = vunpack.c.0.s8 %v1047
        %v1049 = vlaneseq
        %v1050 = vshrl.u32 %v1049, 7
        %v1051 = vsub.s32 %v1048, %v1050
        %v1052 = vrot.slane %v1044, %v1051
        %v1054 = vunpack.c.l.s4 1983009808
        %v1055 = vunpack.c.0.s8 %v1054
        %v1056 = vlaneseq
        %v1057 = vshrl.u32 %v1056, 7
        %v1058 = vsub.s32 %v1055, %v1057
        %v1059 = vrot.slane %v1045, %v1058
        %v1060 = vcombine.low %v1052, %v1059
        %v1061 = vcombine.low %v983, %v991
        %v1062 = vcombine.low %v999, %v1007
        %v1064 = vunpack.c.l.s4 1983009808
        %v1065 = vunpack.c.0.s8 %v1064
        %v1066 = vlaneseq
        %v1067 = vshrl.u32 %v1066, 7
        %v1068 = vsub.s32 %v1065, %v1067
        %v1069 = vrot.slane %v1061, %v1068
        %v1071 = vunpack.c.l.s4 1983009808
        %v1072 = vunpack.c.0.s8 %v1071
        %v1073 = vlaneseq
        %v1074 = vshrl.u32 %v1073, 7
        %v1075 = vsub.s32 %v1072, %v1074
        %v1076 = vrot.slane %v1062, %v1075
        %v1077 = vcombine.low %v1069, %v1076
        %v1078 = vcombine.low %v960, %v961
        %v1079 = vcombine.low %v962, %v963
        %v1081 = vunpack.c.l.s4 1983009808
        %v1082 = vunpack.c.0.s8 %v1081
        %v1083 = vlaneseq
        %v1084 = vshrl.u32 %v1083, 7
        %v1085 = vsub.s32 %v1082, %v1084
        %v1086 = vrot.slane %v1078, %v1085
        %v1088 = vunpack.c.l.s4 1983009808
        %v1089 = vunpack.c.0.s8 %v1088
        %v1090 = vlaneseq
        %v1091 = vshrl.u32 %v1090, 7
        %v1092 = vsub.s32 %v1089, %v1091
        %v1093 = vrot.slane %v1079, %v1092
        %v1094 = vcombine.low %v1086, %v1093
        %v1095 = vcombine.low %v1019, %v1027
        %v1096 = vcombine.low %v1035, %v1043
        %v1098 = vunpack.c.l.s4 1983009808
        %v1099 = vunpack.c.0.s8 %v1098
        %v1100 = vlaneseq
        %v1101 = vshrl.u32 %v1100, 7
        %v1102 = vsub.s32 %v1099, %v1101
        %v1103 = vrot.slane %v1095, %v1102
        %v1105 = vunpack.c.l.s4 1983009808
        %v1106 = vunpack.c.0.s8 %v1105
        %v1107 = vlaneseq
        %v1108 = vshrl.u32 %v1107, 7
        %v1109 = vsub.s32 %v1106, %v1108
        %v1110 = vrot.slane %v1096, %v1109
        %v1111 = vcombine.low %v1103, %v1110
        %v1117 = vunpack.c.l.s4 1983009808
        %v1118 = vunpack.c.0.s8 %v1117
        %v1119 = vlaneseq
        %v1120 = vshrl.u32 %v1119, 7
        %v1121 = vsub.s32 %v1118, %v1120
        %v1122 = vrot.slane %v964, %v1121
        %v1123 = vcombine.high %v1122, %v1122
        %v1125 = vunpack.c.l.s4 1983009808
        %v1126 = vunpack.c.0.s8 %v1125
        %v1127 = vlaneseq
        %v1128 = vshrl.u32 %v1127, 7
        %v1129 = vsub.s32 %v1126, %v1128
        %v1130 = vrot.slane %v965, %v1129
        %v1131 = vcombine.high %v1130, %v1130
        %v1133 = vunpack.c.l.s4 1983009808
        %v1134 = vunpack.c.0.s8 %v1133
        %v1135 = vlaneseq
        %v1136 = vshrl.u32 %v1135, 7
        %v1137 = vsub.s32 %v1134, %v1136
        %v1138 = vrot.slane %v966, %v1137
        %v1139 = vcombine.high %v1138, %v1138
        %v1141 = vunpack.c.l.s4 1983009808
        %v1142 = vunpack.c.0.s8 %v1141
        %v1143 = vlaneseq
        %v1144 = vshrl.u32 %v1143, 7
        %v1145 = vsub.s32 %v1142, %v1144
        %v1146 = vrot.slane %v967, %v1145
        %v1147 = vcombine.high %v1146, %v1146
        %v1153 = vunpack.c.l.s4 1983009808
        %v1154 = vunpack.c.0.s8 %v1153
        %v1155 = vlaneseq
        %v1156 = vshrl.u32 %v1155, 7
        %v1157 = vsub.s32 %v1154, %v1156
        %v1158 = vrot.slane %v968, %v1157
        %v1159 = vcombine.high %v1158, %v1158
        %v1161 = vunpack.c.l.s4 1983009808
        %v1162 = vunpack.c.0.s8 %v1161
        %v1163 = vlaneseq
        %v1164 = vshrl.u32 %v1163, 7
        %v1165 = vsub.s32 %v1162, %v1164
        %v1166 = vrot.slane %v969, %v1165
        %v1167 = vcombine.high %v1166, %v1166
        %v1169 = vunpack.c.l.s4 1983009808
        %v1170 = vunpack.c.0.s8 %v1169
        %v1171 = vlaneseq
        %v1172 = vshrl.u32 %v1171, 7
        %v1173 = vsub.s32 %v1170, %v1172
        %v1174 = vrot.slane %v970, %v1173
        %v1175 = vcombine.high %v1174, %v1174
        %v1177 = vunpack.c.l.s4 1983009808
        %v1178 = vunpack.c.0.s8 %v1177
        %v1179 = vlaneseq
        %v1180 = vshrl.u32 %v1179, 7
        %v1181 = vsub.s32 %v1178, %v1180
        %v1182 = vrot.slane %v971, %v1181
        %v1183 = vcombine.high %v1182, %v1182
        %v1184 = vcombine.low %v964, %v965
        %v1185 = vcombine.low %v966, %v967
        %v1187 = vunpack.c.l.s4 1983009808
        %v1188 = vunpack.c.0.s8 %v1187
        %v1189 = vlaneseq
        %v1190 = vshrl.u32 %v1189, 7
        %v1191 = vsub.s32 %v1188, %v1190
        %v1192 = vrot.slane %v1184, %v1191
        %v1194 = vunpack.c.l.s4 1983009808
        %v1195 = vunpack.c.0.s8 %v1194
        %v1196 = vlaneseq
        %v1197 = vshrl.u32 %v1196, 7
        %v1198 = vsub.s32 %v1195, %v1197
        %v1199 = vrot.slane %v1185, %v1198
        %v1200 = vcombine.low %v1192, %v1199
        %v1201 = vcombine.low %v1123, %v1131
        %v1202 = vcombine.low %v1139, %v1147
        %v1204 = vunpack.c.l.s4 1983009808
        %v1205 = vunpack.c.0.s8 %v1204
        %v1206 = vlaneseq
        %v1207 = vshrl.u32 %v1206, 7
        %v1208 = vsub.s32 %v1205, %v1207
        %v1209 = vrot.slane %v1201, %v1208
        %v1211 = vunpack.c.l.s4 1983009808
        %v1212 = vunpack.c.0.s8 %v1211
        %v1213 = vlaneseq
        %v1214 = vshrl.u32 %v1213, 7
        %v1215 = vsub.s32 %v1212, %v1214
        %v1216 = vrot.slane %v1202, %v1215
        %v1217 = vcombine.low %v1209, %v1216
        %v1218 = vcombine.low %v968, %v969
        %v1219 = vcombine.low %v970, %v971
        %v1221 = vunpack.c.l.s4 1983009808
        %v1222 = vunpack.c.0.s8 %v1221
        %v1223 = vlaneseq
        %v1224 = vshrl.u32 %v1223, 7
        %v1225 = vsub.s32 %v1222, %v1224
        %v1226 = vrot.slane %v1218, %v1225
        %v1228 = vunpack.c.l.s4 1983009808
        %v1229 = vunpack.c.0.s8 %v1228
        %v1230 = vlaneseq
        %v1231 = vshrl.u32 %v1230, 7
        %v1232 = vsub.s32 %v1229, %v1231
        %v1233 = vrot.slane %v1219, %v1232
        %v1234 = vcombine.low %v1226, %v1233
        %v1235 = vcombine.low %v1159, %v1167
        %v1236 = vcombine.low %v1175, %v1183
        %v1238 = vunpack.c.l.s4 1983009808
        %v1239 = vunpack.c.0.s8 %v1238
        %v1240 = vlaneseq
        %v1241 = vshrl.u32 %v1240, 7
        %v1242 = vsub.s32 %v1239, %v1241
        %v1243 = vrot.slane %v1235, %v1242
        %v1245 = vunpack.c.l.s4 1983009808
        %v1246 = vunpack.c.0.s8 %v1245
        %v1247 = vlaneseq
        %v1248 = vshrl.u32 %v1247, 7
        %v1249 = vsub.s32 %v1246, %v1248
        %v1250 = vrot.slane %v1236, %v1249
        %v1251 = vcombine.low %v1243, %v1250
        %v1252 = vld [vmem:[#allocation13] sm:$0xf]
        %v1253 = vld [vmem:[#allocation13 + $0x4] sm:$0xf]
        %v1254 = vld [vmem:[#allocation13 + $0x8] sm:$0xf]
        %v1255 = vld [vmem:[#allocation13 + $0xc] sm:$0xf]
        %v1256 = vld [vmem:[#allocation14] sm:$0x1]
        %v1258 = vlaneseq
        %v1259 = vshrl.u32 %v1258, 7
        %v1260 = vsub.s32 0, %v1259
        %v1261 = vrot.slane %v1256, %v1260
        %v1267 = vunpack.c.l.b16 %v1252
        %v1268 = vunpack.c.l.b16 %v1253
        %v1269 = vunpack.c.l.b16 %v1254
        %v1270 = vunpack.c.l.b16 %v1255
        %v1271 = vpack.c.b16 %v1268, %v1267
        %v1272 = vpack.c.b16 %v1270, %v1269
        %v1276 = vsel %vm678, %v1060, 0
        %v1279 = vsel %vm678, %v1077, 0
        %v1282 = vsel %vm678, %v1094, 0
        %v1285 = vsel %vm678, %v1111, 0
        %1287 = vmatprep.subr.bf16.mxu0 0
        %1288 = vmatpush1.bf16.msra.mxu0 %v1271
        %1289 = vmatprep.subr.bf16.mxu0 0
        %1290 = vmatpush1.bf16.msra.mxu0 %v1272
        %1291 = vmatprep.subr.bf16.mxu0 0
        %1292 = vmatpush1.bf16.msra.mxu0 0
        %1293 = vmatprep.subr.bf16.mxu0 0
        %1294 = vmatpush1.bf16.msra.mxu0 0
        %1295 = vmatprep.subr.bf16.mxu0 0
        %1296 = vmatpush1.bf16.msra.mxu0 0
        %1297 = vmatprep.subr.bf16.mxu0 0
        %1298 = vmatpush1.bf16.msra.mxu0 0
        %1299 = vmatprep.subr.bf16.mxu0 0
        %1300 = vmatpush1.bf16.msra.mxu0 0
        %1301 = vmatprep.subr.bf16.mxu0 0
        %1302 = vmatpush1.bf16.msra.mxu0 0
        %1303 = vmatprep.subr.bf16.mxu0 0
        %1304 = vmatpush1.bf16.msra.mxu0 0
        %1305 = vmatprep.subr.bf16.mxu0 0
        %1306 = vmatpush1.bf16.msra.mxu0 0
        %1307 = vmatprep.subr.bf16.mxu0 0
        %1308 = vmatpush1.bf16.msra.mxu0 0
        %1309 = vmatprep.subr.bf16.mxu0 0
        %1310 = vmatpush1.bf16.msra.mxu0 0
        %1311 = vmatprep.subr.bf16.mxu0 0
        %1312 = vmatpush1.bf16.msra.mxu0 0
        %1313 = vmatprep.subr.bf16.mxu0 0
        %1314 = vmatpush1.bf16.msra.mxu0 0
        %1315 = vmatprep.subr.bf16.mxu0 0
        %1316 = vmatpush1.bf16.msra.mxu0 0
        %1317 = vmatprep.subr.bf16.mxu0 0
        %1318 = vmatpush1.bf16.msra.mxu0 0
        %1319 = vmatprep.mubr.bf16.mxu0 0
        %1320 = vmatmul.mubr.bf16.gmra.mrb[0].mxu0 %v1276
        %v1321 = vpop.f32.mrb[0].mxu0
        %v1322 = vadd.f32 %v1261, %v1321
        %v1323 = vpop.f32.mrb[0].mxu0
        %v1324 = vpop.f32.mrb[0].mxu0
        %v1325 = vadd.f32 %v1261, %v1324
        %v1326 = vpop.f32.mrb[0].mxu0
        %1327 = vmatprep.mubr.bf16.mxu0 0
        %1328 = vmatmul.mubr.bf16.gmra.mrb[0].mxu0 %v1279
        %v1329 = vpop.f32.mrb[0].mxu0
        %v1330 = vadd.f32 %v1261, %v1329
        %v1331 = vpop.f32.mrb[0].mxu0
        %v1332 = vpop.f32.mrb[0].mxu0
        %v1333 = vadd.f32 %v1261, %v1332
        %v1334 = vpop.f32.mrb[0].mxu0
        %1335 = vmatprep.mubr.bf16.mxu0 0
        %1336 = vmatmul.mubr.bf16.gmra.mrb[0].mxu0 %v1282
        %v1337 = vpop.f32.mrb[0].mxu0
        %v1338 = vadd.f32 %v1261, %v1337
        %v1339 = vpop.f32.mrb[0].mxu0
        %v1340 = vpop.f32.mrb[0].mxu0
        %v1341 = vadd.f32 %v1261, %v1340
        %v1342 = vpop.f32.mrb[0].mxu0
        %1343 = vmatprep.mubr.bf16.mxu0 0
        %1344 = vmatmul.mubr.bf16.gmra.mrb[0].mxu0 %v1285
        %v1345 = vpop.f32.mrb[0].mxu0
        %v1346 = vadd.f32 %v1261, %v1345
        %v1347 = vpop.f32.mrb[0].mxu0
        %v1348 = vpop.f32.mrb[0].mxu0
        %v1349 = vadd.f32 %v1261, %v1348
        %v1350 = vpop.f32.mrb[0].mxu0
        %1351 = vdwg.mxu0
        %v1352 = vld [vmem:[#allocation16] sm:$0xf]
        %v1353 = vld [vmem:[#allocation16 + $0x4] sm:$0xf]
        %v1354 = vld [vmem:[#allocation16 + $0x8] sm:$0xf]
        %v1355 = vld [vmem:[#allocation16 + $0xc] sm:$0xf]
        %v1356 = vld [vmem:[#allocation17] sm:$0x1]
        %v1358 = vlaneseq
        %v1359 = vshrl.u32 %v1358, 7
        %v1360 = vsub.s32 0, %v1359
        %v1361 = vrot.slane %v1356, %v1360
        %v1367 = vunpack.c.l.b16 %v1352
        %v1368 = vunpack.c.l.b16 %v1353
        %v1369 = vunpack.c.l.b16 %v1354
        %v1370 = vunpack.c.l.b16 %v1355
        %v1371 = vpack.c.b16 %v1368, %v1367
        %v1372 = vpack.c.b16 %v1370, %v1369
        %v1376 = vsel %vm678, %v1200, 0
        %v1379 = vsel %vm678, %v1217, 0
        %v1382 = vsel %vm678, %v1234, 0
        %v1385 = vsel %vm678, %v1251, 0
        %1387 = vmatprep.subr.bf16.mxu0 0
        %1388 = vmatpush1.bf16.msra.mxu0 %v1371
        %1389 = vmatprep.subr.bf16.mxu0 0
        %1390 = vmatpush1.bf16.msra.mxu0 %v1372
        %1391 = vmatprep.subr.bf16.mxu0 0
        %1392 = vmatpush1.bf16.msra.mxu0 0
        %1393 = vmatprep.subr.bf16.mxu0 0
        %1394 = vmatpush1.bf16.msra.mxu0 0
        %1395 = vmatprep.subr.bf16.mxu0 0
        %1396 = vmatpush1.bf16.msra.mxu0 0
        %1397 = vmatprep.subr.bf16.mxu0 0
        %1398 = vmatpush1.bf16.msra.mxu0 0
        %1399 = vmatprep.subr.bf16.mxu0 0
        %1400 = vmatpush1.bf16.msra.mxu0 0
        %1401 = vmatprep.subr.bf16.mxu0 0
        %1402 = vmatpush1.bf16.msra.mxu0 0
        %1403 = vmatprep.subr.bf16.mxu0 0
        %1404 = vmatpush1.bf16.msra.mxu0 0
        %1405 = vmatprep.subr.bf16.mxu0 0
        %1406 = vmatpush1.bf16.msra.mxu0 0
        %1407 = vmatprep.subr.bf16.mxu0 0
        %1408 = vmatpush1.bf16.msra.mxu0 0
        %1409 = vmatprep.subr.bf16.mxu0 0
        %1410 = vmatpush1.bf16.msra.mxu0 0
        %1411 = vmatprep.subr.bf16.mxu0 0
        %1412 = vmatpush1.bf16.msra.mxu0 0
        %1413 = vmatprep.subr.bf16.mxu0 0
        %1414 = vmatpush1.bf16.msra.mxu0 0
        %1415 = vmatprep.subr.bf16.mxu0 0
        %1416 = vmatpush1.bf16.msra.mxu0 0
        %1417 = vmatprep.subr.bf16.mxu0 0
        %1418 = vmatpush1.bf16.msra.mxu0 0
        %1419 = vmatprep.mubr.bf16.mxu0 0
        %1420 = vmatmul.mubr.bf16.gmra.mrb[0].mxu0 %v1376
        %v1421 = vpop.f32.mrb[0].mxu0
        %v1422 = vadd.f32 %v1361, %v1421
        %v1423 = vpop.f32.mrb[0].mxu0
        %v1424 = vpop.f32.mrb[0].mxu0
        %v1425 = vadd.f32 %v1361, %v1424
        %v1426 = vpop.f32.mrb[0].mxu0
        %1427 = vmatprep.mubr.bf16.mxu0 0
        %1428 = vmatmul.mubr.bf16.gmra.mrb[0].mxu0 %v1379
        %v1429 = vpop.f32.mrb[0].mxu0
        %v1430 = vadd.f32 %v1361, %v1429
        %v1431 = vpop.f32.mrb[0].mxu0
        %v1432 = vpop.f32.mrb[0].mxu0
        %v1433 = vadd.f32 %v1361, %v1432
        %v1434 = vpop.f32.mrb[0].mxu0
        %1435 = vmatprep.mubr.bf16.mxu0 0
        %1436 = vmatmul.mubr.bf16.gmra.mrb[0].mxu0 %v1382
        %v1437 = vpop.f32.mrb[0].mxu0
        %v1438 = vadd.f32 %v1361, %v1437
        %v1439 = vpop.f32.mrb[0].mxu0
        %v1440 = vpop.f32.mrb[0].mxu0
        %v1441 = vadd.f32 %v1361, %v1440
        %v1442 = vpop.f32.mrb[0].mxu0
        %1443 = vmatprep.mubr.bf16.mxu0 0
        %1444 = vmatmul.mubr.bf16.gmra.mrb[0].mxu0 %v1385
        %v1445 = vpop.f32.mrb[0].mxu0
        %v1446 = vadd.f32 %v1361, %v1445
        %v1447 = vpop.f32.mrb[0].mxu0
        %v1448 = vpop.f32.mrb[0].mxu0
        %v1449 = vadd.f32 %v1361, %v1448
        %v1450 = vpop.f32.mrb[0].mxu0
        %1451 = vdwg.mxu0
        %v1452 = vpack.c.bf16 %v1325, %v1322
        %v1453 = vpack.c.bf16 %v1333, %v1330
        %v1454 = vpack.c.bf16 %v1341, %v1338
        %v1455 = vpack.c.bf16 %v1349, %v1346
        %v1456 = vpack.c.bf16 %v1425, %v1422
        %v1457 = vpack.c.bf16 %v1433, %v1430
        %v1458 = vpack.c.bf16 %v1441, %v1438
        %v1459 = vpack.c.bf16 %v1449, %v1446
        %vm1460 = vcmask 64512
        %v1462 = vsel %vm1460, %v1452, 0
        %v1465 = vsel %vm1460, %v1456, 0
        %1467 = vmatprep.subr.bf16.mxu0 0
        %1468 = vmatpush1.bf16.xpose.msra.mxu0 %v1465
        %1469 = vmatprep.subr.bf16.mxu0 0
        %1470 = vmatpush1.bf16.xpose.msra.mxu0 0
        %1471 = vmatprep.subr.bf16.mxu0 0
        %1472 = vmatpush1.bf16.xpose.msra.mxu0 0
        %1473 = vmatprep.subr.bf16.mxu0 0
        %1474 = vmatpush1.bf16.xpose.msra.mxu0 0
        %1475 = vmatprep.subr.bf16.mxu0 0
        %1476 = vmatpush1.bf16.xpose.msra.mxu0 0
        %1477 = vmatprep.subr.bf16.mxu0 0
        %1478 = vmatpush1.bf16.xpose.msra.mxu0 0
        %1479 = vmatprep.subr.bf16.mxu0 0
        %1480 = vmatpush1.bf16.xpose.msra.mxu0 0
        %1481 = vmatprep.subr.bf16.mxu0 0
        %1482 = vmatpush1.bf16.xpose.msra.mxu0 0
        %1483 = vmatprep.subr.bf16.mxu0 0
        %1484 = vmatpush1.bf16.xpose.msra.mxu0 0
        %1485 = vmatprep.subr.bf16.mxu0 0
        %1486 = vmatpush1.bf16.xpose.msra.mxu0 0
        %1487 = vmatprep.subr.bf16.mxu0 0
        %1488 = vmatpush1.bf16.xpose.msra.mxu0 0
        %1489 = vmatprep.subr.bf16.mxu0 0
        %1490 = vmatpush1.bf16.xpose.msra.mxu0 0
        %1491 = vmatprep.subr.bf16.mxu0 0
        %1492 = vmatpush1.bf16.xpose.msra.mxu0 0
        %1493 = vmatprep.subr.bf16.mxu0 0
        %1494 = vmatpush1.bf16.xpose.msra.mxu0 0
        %1495 = vmatprep.subr.bf16.mxu0 0
        %1496 = vmatpush1.bf16.xpose.msra.mxu0 0
        %1497 = vmatprep.subr.bf16.mxu0 0
        %1498 = vmatpush1.bf16.xpose.msra.mxu0 0
        %1499 = vmatprep.mubr.bf16.mxu0 0
        %1500 = vmatmul.mubr.bf16.gmra.mrb[0].mxu0 %v1462
        %v1501 = vpop.f32.mrb[0].mxu0
        %v1502 = vadd.f32 0.0, %v1501
        %v1503 = vpop.f32.mrb[0].mxu0
        %v1504 = vpop.f32.mrb[0].mxu0
        %v1505 = vadd.f32 0.0, %v1504
        %v1506 = vpop.f32.mrb[0].mxu0
        %1507 = vdwg.mxu0
        %v1509 = vsel %vm1460, %v1453, 0
        %v1512 = vsel %vm1460, %v1457, 0
        %1514 = vmatprep.subr.bf16.mxu0 0
        %1515 = vmatpush1.bf16.xpose.msra.mxu0 %v1512
        %1516 = vmatprep.subr.bf16.mxu0 0
        %1517 = vmatpush1.bf16.xpose.msra.mxu0 0
        %1518 = vmatprep.subr.bf16.mxu0 0
        %1519 = vmatpush1.bf16.xpose.msra.mxu0 0
        %1520 = vmatprep.subr.bf16.mxu0 0
        %1521 = vmatpush1.bf16.xpose.msra.mxu0 0
        %1522 = vmatprep.subr.bf16.mxu0 0
        %1523 = vmatpush1.bf16.xpose.msra.mxu0 0
        %1524 = vmatprep.subr.bf16.mxu0 0
        %1525 = vmatpush1.bf16.xpose.msra.mxu0 0
        %1526 = vmatprep.subr.bf16.mxu0 0
        %1527 = vmatpush1.bf16.xpose.msra.mxu0 0
        %1528 = vmatprep.subr.bf16.mxu0 0
        %1529 = vmatpush1.bf16.xpose.msra.mxu0 0
        %1530 = vmatprep.subr.bf16.mxu0 0
        %1531 = vmatpush1.bf16.xpose.msra.mxu0 0
        %1532 = vmatprep.subr.bf16.mxu0 0
        %1533 = vmatpush1.bf16.xpose.msra.mxu0 0
        %1534 = vmatprep.subr.bf16.mxu0 0
        %1535 = vmatpush1.bf16.xpose.msra.mxu0 0
        %1536 = vmatprep.subr.bf16.mxu0 0
        %1537 = vmatpush1.bf16.xpose.msra.mxu0 0
        %1538 = vmatprep.subr.bf16.mxu0 0
        %1539 = vmatpush1.bf16.xpose.msra.mxu0 0
        %1540 = vmatprep.subr.bf16.mxu0 0
        %1541 = vmatpush1.bf16.xpose.msra.mxu0 0
        %1542 = vmatprep.subr.bf16.mxu0 0
        %1543 = vmatpush1.bf16.xpose.msra.mxu0 0
        %1544 = vmatprep.subr.bf16.mxu0 0
        %1545 = vmatpush1.bf16.xpose.msra.mxu0 0
        %1546 = vmatprep.mubr.bf16.mxu0 0
        %1547 = vmatmul.mubr.bf16.gmra.mrb[0].mxu0 %v1509
        %v1548 = vpop.f32.mrb[0].mxu0
        %v1549 = vadd.f32 0.0, %v1548
        %v1550 = vpop.f32.mrb[0].mxu0
        %v1551 = vpop.f32.mrb[0].mxu0
        %v1552 = vadd.f32 0.0, %v1551
        %v1553 = vpop.f32.mrb[0].mxu0
        %1554 = vdwg.mxu0
        %v1556 = vsel %vm1460, %v1454, 0
        %v1559 = vsel %vm1460, %v1458, 0
        %1561 = vmatprep.subr.bf16.mxu0 0
        %1562 = vmatpush1.bf16.xpose.msra.mxu0 %v1559
        %1563 = vmatprep.subr.bf16.mxu0 0
        %1564 = vmatpush1.bf16.xpose.msra.mxu0 0
        %1565 = vmatprep.subr.bf16.mxu0 0
        %1566 = vmatpush1.bf16.xpose.msra.mxu0 0
        %1567 = vmatprep.subr.bf16.mxu0 0
        %1568 = vmatpush1.bf16.xpose.msra.mxu0 0
        %1569 = vmatprep.subr.bf16.mxu0 0
        %1570 = vmatpush1.bf16.xpose.msra.mxu0 0
        %1571 = vmatprep.subr.bf16.mxu0 0
        %1572 = vmatpush1.bf16.xpose.msra.mxu0 0
        %1573 = vmatprep.subr.bf16.mxu0 0
        %1574 = vmatpush1.bf16.xpose.msra.mxu0 0
        %1575 = vmatprep.subr.bf16.mxu0 0
        %1576 = vmatpush1.bf16.xpose.msra.mxu0 0
        %1577 = vmatprep.subr.bf16.mxu0 0
        %1578 = vmatpush1.bf16.xpose.msra.mxu0 0
        %1579 = vmatprep.subr.bf16.mxu0 0
        %1580 = vmatpush1.bf16.xpose.msra.mxu0 0
        %1581 = vmatprep.subr.bf16.mxu0 0
        %1582 = vmatpush1.bf16.xpose.msra.mxu0 0
        %1583 = vmatprep.subr.bf16.mxu0 0
        %1584 = vmatpush1.bf16.xpose.msra.mxu0 0
        %1585 = vmatprep.subr.bf16.mxu0 0
        %1586 = vmatpush1.bf16.xpose.msra.mxu0 0
        %1587 = vmatprep.subr.bf16.mxu0 0
        %1588 = vmatpush1.bf16.xpose.msra.mxu0 0
        %1589 = vmatprep.subr.bf16.mxu0 0
        %1590 = vmatpush1.bf16.xpose.msra.mxu0 0
        %1591 = vmatprep.subr.bf16.mxu0 0
        %1592 = vmatpush1.bf16.xpose.msra.mxu0 0
        %1593 = vmatprep.mubr.bf16.mxu0 0
        %1594 = vmatmul.mubr.bf16.gmra.mrb[0].mxu0 %v1556
        %v1595 = vpop.f32.mrb[0].mxu0
        %v1596 = vadd.f32 0.0, %v1595
        %v1597 = vpop.f32.mrb[0].mxu0
        %v1598 = vpop.f32.mrb[0].mxu0
        %v1599 = vadd.f32 0.0, %v1598
        %v1600 = vpop.f32.mrb[0].mxu0
        %1601 = vdwg.mxu0
        %v1603 = vsel %vm1460, %v1455, 0
        %v1606 = vsel %vm1460, %v1459, 0
        %1608 = vmatprep.subr.bf16.mxu0 0
        %1609 = vmatpush1.bf16.xpose.msra.mxu0 %v1606
        %1610 = vmatprep.subr.bf16.mxu0 0
        %1611 = vmatpush1.bf16.xpose.msra.mxu0 0
        %1612 = vmatprep.subr.bf16.mxu0 0
        %1613 = vmatpush1.bf16.xpose.msra.mxu0 0
        %1614 = vmatprep.subr.bf16.mxu0 0
        %1615 = vmatpush1.bf16.xpose.msra.mxu0 0
        %1616 = vmatprep.subr.bf16.mxu0 0
        %1617 = vmatpush1.bf16.xpose.msra.mxu0 0
        %1618 = vmatprep.subr.bf16.mxu0 0
        %1619 = vmatpush1.bf16.xpose.msra.mxu0 0
        %1620 = vmatprep.subr.bf16.mxu0 0
        %1621 = vmatpush1.bf16.xpose.msra.mxu0 0
        %1622 = vmatprep.subr.bf16.mxu0 0
        %1623 = vmatpush1.bf16.xpose.msra.mxu0 0
        %1624 = vmatprep.subr.bf16.mxu0 0
        %1625 = vmatpush1.bf16.xpose.msra.mxu0 0
        %1626 = vmatprep.subr.bf16.mxu0 0
        %1627 = vmatpush1.bf16.xpose.msra.mxu0 0
        %1628 = vmatprep.subr.bf16.mxu0 0
        %1629 = vmatpush1.bf16.xpose.msra.mxu0 0
        %1630 = vmatprep.subr.bf16.mxu0 0
        %1631 = vmatpush1.bf16.xpose.msra.mxu0 0
        %1632 = vmatprep.subr.bf16.mxu0 0
        %1633 = vmatpush1.bf16.xpose.msra.mxu0 0
        %1634 = vmatprep.subr.bf16.mxu0 0
        %1635 = vmatpush1.bf16.xpose.msra.mxu0 0
        %1636 = vmatprep.subr.bf16.mxu0 0
        %1637 = vmatpush1.bf16.xpose.msra.mxu0 0
        %1638 = vmatprep.subr.bf16.mxu0 0
        %1639 = vmatpush1.bf16.xpose.msra.mxu0 0
        %1640 = vmatprep.mubr.bf16.mxu0 0
        %1641 = vmatmul.mubr.bf16.gmra.mrb[0].mxu0 %v1603
        %v1642 = vpop.f32.mrb[0].mxu0
        %v1643 = vadd.f32 0.0, %v1642
        %v1644 = vpop.f32.mrb[0].mxu0
        %v1645 = vpop.f32.mrb[0].mxu0
        %v1646 = vadd.f32 0.0, %v1645
        %v1647 = vpop.f32.mrb[0].mxu0
        %1648 = vdwg.mxu0
        %v1649 = vmul.f32 %v1502, 0.35355338
        %v1650 = vmul.f32 %v1505, 0.35355338
        %v1651 = vmul.f32 %v1549, 0.35355338
        %v1652 = vmul.f32 %v1552, 0.35355338
        %v1653 = vmul.f32 %v1596, 0.35355338
        %v1654 = vmul.f32 %v1599, 0.35355338
        %v1655 = vmul.f32 %v1643, 0.35355338
        %v1656 = vmul.f32 %v1646, 0.35355338
        %v1657 = vld [vmem:[#allocation22] sm:$0xff]
        %v1658 = vld [vmem:[#allocation22 + $0x8] sm:$0xff]
        %v1659 = vadd.f32 %v1649, %v1657
        %v1660 = vadd.f32 %v1650, %v1658
        %v1661 = vadd.f32 %v1651, %v1657
        %v1662 = vadd.f32 %v1652, %v1658
        %v1663 = vadd.f32 %v1653, %v1657
        %v1664 = vadd.f32 %v1654, %v1658
        %v1665 = vadd.f32 %v1655, %v1657
        %v1666 = vadd.f32 %v1656, %v1658
        %vm1667 = vcmask 130048
        %v1668 = vsel %vm1667, %v1659, -inf
        %1669 = vmax.xlane.f32.xlu0 %v1668
        %v1670 = vpop.xlane.xlu0 %1669
        %v1671 = vsel %vm1667, %v1660, -inf
        %1672 = vmax.xlane.f32.xlu0 %v1671
        %v1673 = vpop.xlane.xlu0 %1672
        %v1674 = vsel %vm1667, %v1661, -inf
        %1675 = vmax.xlane.f32.xlu0 %v1674
        %v1676 = vpop.xlane.xlu0 %1675
        %v1677 = vsel %vm1667, %v1662, -inf
        %1678 = vmax.xlane.f32.xlu0 %v1677
        %v1679 = vpop.xlane.xlu0 %1678
        %v1680 = vsel %vm1667, %v1663, -inf
        %1681 = vmax.xlane.f32.xlu0 %v1680
        %v1682 = vpop.xlane.xlu0 %1681
        %v1683 = vsel %vm1667, %v1664, -inf
        %1684 = vmax.xlane.f32.xlu0 %v1683
        %v1685 = vpop.xlane.xlu0 %1684
        %v1686 = vsel %vm1667, %v1665, -inf
        %1687 = vmax.xlane.f32.xlu0 %v1686
        %v1688 = vpop.xlane.xlu0 %1687
        %v1689 = vsel %vm1667, %v1666, -inf
        %1690 = vmax.xlane.f32.xlu0 %v1689
        %v1691 = vpop.xlane.xlu0 %1690
        %v1692 = vsub.f32 %v1659, %v1670
        %v1693 = vsub.f32 %v1660, %v1673
        %v1694 = vsub.f32 %v1661, %v1676
        %v1695 = vsub.f32 %v1662, %v1679
        %v1696 = vsub.f32 %v1663, %v1682
        %v1697 = vsub.f32 %v1664, %v1685
        %v1698 = vsub.f32 %v1665, %v1688
        %v1699 = vsub.f32 %v1666, %v1691
        %v1700 = vmul.f32 %v1692, 1.442695
        %v1701 = vpow.pop %v1700
        %v1702 = vmul.f32 %v1693, 1.442695
        %v1703 = vpow.pop %v1702
        %v1704 = vmul.f32 %v1694, 1.442695
        %v1705 = vpow.pop %v1704
        %v1706 = vmul.f32 %v1695, 1.442695
        %v1707 = vpow.pop %v1706
        %v1708 = vmul.f32 %v1696, 1.442695
        %v1709 = vpow.pop %v1708
        %v1710 = vmul.f32 %v1697, 1.442695
        %v1711 = vpow.pop %v1710
        %v1712 = vmul.f32 %v1698, 1.442695
        %v1713 = vpow.pop %v1712
        %v1714 = vmul.f32 %v1699, 1.442695
        %v1715 = vpow.pop %v1714
        %v1716 = vsel %vm1667, %v1701, 0.0
        %1717 = vadd.xlane.f32.xlu0 %v1716
        %v1718 = vpop.xlane.xlu0 %1717
        %v1719 = vsel %vm1667, %v1703, 0.0
        %1720 = vadd.xlane.f32.xlu0 %v1719
        %v1721 = vpop.xlane.xlu0 %1720
        %v1722 = vsel %vm1667, %v1705, 0.0
        %1723 = vadd.xlane.f32.xlu0 %v1722
        %v1724 = vpop.xlane.xlu0 %1723
        %v1725 = vsel %vm1667, %v1707, 0.0
        %1726 = vadd.xlane.f32.xlu0 %v1725
        %v1727 = vpop.xlane.xlu0 %1726
        %v1728 = vsel %vm1667, %v1709, 0.0
        %1729 = vadd.xlane.f32.xlu0 %v1728
        %v1730 = vpop.xlane.xlu0 %1729
        %v1731 = vsel %vm1667, %v1711, 0.0
        %1732 = vadd.xlane.f32.xlu0 %v1731
        %v1733 = vpop.xlane.xlu0 %1732
        %v1734 = vsel %vm1667, %v1713, 0.0
        %1735 = vadd.xlane.f32.xlu0 %v1734
        %v1736 = vpop.xlane.xlu0 %1735
        %v1737 = vsel %vm1667, %v1715, 0.0
        %1738 = vadd.xlane.f32.xlu0 %v1737
        %v1739 = vpop.xlane.xlu0 %1738
        %v1740 = vrcp.pop %v1718
        %v1741 = vrcp.pop %v1721
        %v1742 = vrcp.pop %v1724
        %v1743 = vrcp.pop %v1727
        %v1744 = vrcp.pop %v1730
        %v1745 = vrcp.pop %v1733
        %v1746 = vrcp.pop %v1736
        %v1747 = vrcp.pop %v1739
        %v1748 = vmul.f32 %v1701, %v1740
        %v1749 = vmul.f32 %v1703, %v1741
        %v1750 = vmul.f32 %v1705, %v1742
        %v1751 = vmul.f32 %v1707, %v1743
        %v1752 = vmul.f32 %v1709, %v1744
        %v1753 = vmul.f32 %v1711, %v1745
        %v1754 = vmul.f32 %v1713, %v1746
        %v1755 = vmul.f32 %v1715, %v1747
        %v1756 = vpack.c.bf16 %v1749, %v1748
        %v1757 = vpack.c.bf16 %v1751, %v1750
        %v1758 = vpack.c.bf16 %v1753, %v1752
        %v1759 = vpack.c.bf16 %v1755, %v1754
        %1761 = vrot.lane.b32.xlu0 %v1456, 96
        %v1762 = vpop.permute.xlu0 %1761
        %v1765 = vsel %vm1667, %v1756, 0
        %1767 = vmatprep.subr.bf16.mxu0 0
        %1768 = vmatpush1.bf16.msra.mxu0 %v1762
        %1769 = vmatprep.subr.bf16.mxu0 0
        %1770 = vmatpush1.bf16.msra.mxu0 0
        %1771 = vmatprep.subr.bf16.mxu0 0
        %1772 = vmatpush1.bf16.msra.mxu0 0
        %1773 = vmatprep.subr.bf16.mxu0 0
        %1774 = vmatpush1.bf16.msra.mxu0 0
        %1775 = vmatprep.subr.bf16.mxu0 0
        %1776 = vmatpush1.bf16.msra.mxu0 0
        %1777 = vmatprep.subr.bf16.mxu0 0
        %1778 = vmatpush1.bf16.msra.mxu0 0
        %1779 = vmatprep.subr.bf16.mxu0 0
        %1780 = vmatpush1.bf16.msra.mxu0 0
        %1781 = vmatprep.subr.bf16.mxu0 0
        %1782 = vmatpush1.bf16.msra.mxu0 0
        %1783 = vmatprep.subr.bf16.mxu0 0
        %1784 = vmatpush1.bf16.msra.mxu0 0
        %1785 = vmatprep.subr.bf16.mxu0 0
        %1786 = vmatpush1.bf16.msra.mxu0 0
        %1787 = vmatprep.subr.bf16.mxu0 0
        %1788 = vmatpush1.bf16.msra.mxu0 0
        %1789 = vmatprep.subr.bf16.mxu0 0
        %1790 = vmatpush1.bf16.msra.mxu0 0
        %1791 = vmatprep.subr.bf16.mxu0 0
        %1792 = vmatpush1.bf16.msra.mxu0 0
        %1793 = vmatprep.subr.bf16.mxu0 0
        %1794 = vmatpush1.bf16.msra.mxu0 0
        %1795 = vmatprep.subr.bf16.mxu0 0
        %1796 = vmatpush1.bf16.msra.mxu0 0
        %1797 = vmatprep.subr.bf16.mxu0 0
        %1798 = vmatpush1.bf16.msra.mxu0 0
        %1799 = vmatprep.mubr.bf16.mxu0 0
        %1800 = vmatmul.mubr.bf16.gmra.mrb[0].mxu0 %v1765
        %v1801 = vpop.f32.mrb[0].mxu0
        %v1802 = vadd.f32 0.0, %v1801
        %v1803 = vpop.f32.mrb[0].mxu0
        %v1804 = vpop.f32.mrb[0].mxu0
        %v1805 = vadd.f32 0.0, %v1804
        %v1806 = vpop.f32.mrb[0].mxu0
        %1807 = vdwg.mxu0
        %1809 = vrot.lane.b32.xlu0 %v1457, 96
        %v1810 = vpop.permute.xlu0 %1809
        %v1813 = vsel %vm1667, %v1757, 0
        %1815 = vmatprep.subr.bf16.mxu0 0
        %1816 = vmatpush1.bf16.msra.mxu0 %v1810
        %1817 = vmatprep.subr.bf16.mxu0 0
        %1818 = vmatpush1.bf16.msra.mxu0 0
        %1819 = vmatprep.subr.bf16.mxu0 0
        %1820 = vmatpush1.bf16.msra.mxu0 0
        %1821 = vmatprep.subr.bf16.mxu0 0
        %1822 = vmatpush1.bf16.msra.mxu0 0
        %1823 = vmatprep.subr.bf16.mxu0 0
        %1824 = vmatpush1.bf16.msra.mxu0 0
        %1825 = vmatprep.subr.bf16.mxu0 0
        %1826 = vmatpush1.bf16.msra.mxu0 0
        %1827 = vmatprep.subr.bf16.mxu0 0
        %1828 = vmatpush1.bf16.msra.mxu0 0
        %1829 = vmatprep.subr.bf16.mxu0 0
        %1830 = vmatpush1.bf16.msra.mxu0 0
        %1831 = vmatprep.subr.bf16.mxu0 0
        %1832 = vmatpush1.bf16.msra.mxu0 0
        %1833 = vmatprep.subr.bf16.mxu0 0
        %1834 = vmatpush1.bf16.msra.mxu0 0
        %1835 = vmatprep.subr.bf16.mxu0 0
        %1836 = vmatpush1.bf16.msra.mxu0 0
        %1837 = vmatprep.subr.bf16.mxu0 0
        %1838 = vmatpush1.bf16.msra.mxu0 0
        %1839 = vmatprep.subr.bf16.mxu0 0
        %1840 = vmatpush1.bf16.msra.mxu0 0
        %1841 = vmatprep.subr.bf16.mxu0 0
        %1842 = vmatpush1.bf16.msra.mxu0 0
        %1843 = vmatprep.subr.bf16.mxu0 0
        %1844 = vmatpush1.bf16.msra.mxu0 0
        %1845 = vmatprep.subr.bf16.mxu0 0
        %1846 = vmatpush1.bf16.msra.mxu0 0
        %1847 = vmatprep.mubr.bf16.mxu0 0
        %1848 = vmatmul.mubr.bf16.gmra.mrb[0].mxu0 %v1813
        %v1849 = vpop.f32.mrb[0].mxu0
        %v1850 = vadd.f32 0.0, %v1849
        %v1851 = vpop.f32.mrb[0].mxu0
        %v1852 = vpop.f32.mrb[0].mxu0
        %v1853 = vadd.f32 0.0, %v1852
        %v1854 = vpop.f32.mrb[0].mxu0
        %1855 = vdwg.mxu0
        %1857 = vrot.lane.b32.xlu0 %v1458, 96
        %v1858 = vpop.permute.xlu0 %1857
        %v1861 = vsel %vm1667, %v1758, 0
        %1863 = vmatprep.subr.bf16.mxu0 0
        %1864 = vmatpush1.bf16.msra.mxu0 %v1858
        %1865 = vmatprep.subr.bf16.mxu0 0
        %1866 = vmatpush1.bf16.msra.mxu0 0
        %1867 = vmatprep.subr.bf16.mxu0 0
        %1868 = vmatpush1.bf16.msra.mxu0 0
        %1869 = vmatprep.subr.bf16.mxu0 0
        %1870 = vmatpush1.bf16.msra.mxu0 0
        %1871 = vmatprep.subr.bf16.mxu0 0
        %1872 = vmatpush1.bf16.msra.mxu0 0
        %1873 = vmatprep.subr.bf16.mxu0 0
        %1874 = vmatpush1.bf16.msra.mxu0 0
        %1875 = vmatprep.subr.bf16.mxu0 0
        %1876 = vmatpush1.bf16.msra.mxu0 0
        %1877 = vmatprep.subr.bf16.mxu0 0
        %1878 = vmatpush1.bf16.msra.mxu0 0
        %1879 = vmatprep.subr.bf16.mxu0 0
        %1880 = vmatpush1.bf16.msra.mxu0 0
        %1881 = vmatprep.subr.bf16.mxu0 0
        %1882 = vmatpush1.bf16.msra.mxu0 0
        %1883 = vmatprep.subr.bf16.mxu0 0
        %1884 = vmatpush1.bf16.msra.mxu0 0
        %1885 = vmatprep.subr.bf16.mxu0 0
        %1886 = vmatpush1.bf16.msra.mxu0 0
        %1887 = vmatprep.subr.bf16.mxu0 0
        %1888 = vmatpush1.bf16.msra.mxu0 0
        %1889 = vmatprep.subr.bf16.mxu0 0
        %1890 = vmatpush1.bf16.msra.mxu0 0
        %1891 = vmatprep.subr.bf16.mxu0 0
        %1892 = vmatpush1.bf16.msra.mxu0 0
        %1893 = vmatprep.subr.bf16.mxu0 0
        %1894 = vmatpush1.bf16.msra.mxu0 0
        %1895 = vmatprep.mubr.bf16.mxu0 0
        %1896 = vmatmul.mubr.bf16.gmra.mrb[0].mxu0 %v1861
        %v1897 = vpop.f32.mrb[0].mxu0
        %v1898 = vadd.f32 0.0, %v1897
        %v1899 = vpop.f32.mrb[0].mxu0
        %v1900 = vpop.f32.mrb[0].mxu0
        %v1901 = vadd.f32 0.0, %v1900
        %v1902 = vpop.f32.mrb[0].mxu0
        %1903 = vdwg.mxu0
        %1905 = vrot.lane.b32.xlu0 %v1459, 96
        %v1906 = vpop.permute.xlu0 %1905
        %v1909 = vsel %vm1667, %v1759, 0
        %1911 = vmatprep.subr.bf16.mxu0 0
        %1912 = vmatpush1.bf16.msra.mxu0 %v1906
        %1913 = vmatprep.subr.bf16.mxu0 0
        %1914 = vmatpush1.bf16.msra.mxu0 0
        %1915 = vmatprep.subr.bf16.mxu0 0
        %1916 = vmatpush1.bf16.msra.mxu0 0
        %1917 = vmatprep.subr.bf16.mxu0 0
        %1918 = vmatpush1.bf16.msra.mxu0 0
        %1919 = vmatprep.subr.bf16.mxu0 0
        %1920 = vmatpush1.bf16.msra.mxu0 0
        %1921 = vmatprep.subr.bf16.mxu0 0
        %1922 = vmatpush1.bf16.msra.mxu0 0
        %1923 = vmatprep.subr.bf16.mxu0 0
        %1924 = vmatpush1.bf16.msra.mxu0 0
        %1925 = vmatprep.subr.bf16.mxu0 0
        %1926 = vmatpush1.bf16.msra.mxu0 0
        %1927 = vmatprep.subr.bf16.mxu0 0
        %1928 = vmatpush1.bf16.msra.mxu0 0
        %1929 = vmatprep.subr.bf16.mxu0 0
        %1930 = vmatpush1.bf16.msra.mxu0 0
        %1931 = vmatprep.subr.bf16.mxu0 0
        %1932 = vmatpush1.bf16.msra.mxu0 0
        %1933 = vmatprep.subr.bf16.mxu0 0
        %1934 = vmatpush1.bf16.msra.mxu0 0
        %1935 = vmatprep.subr.bf16.mxu0 0
        %1936 = vmatpush1.bf16.msra.mxu0 0
        %1937 = vmatprep.subr.bf16.mxu0 0
        %1938 = vmatpush1.bf16.msra.mxu0 0
        %1939 = vmatprep.subr.bf16.mxu0 0
        %1940 = vmatpush1.bf16.msra.mxu0 0
        %1941 = vmatprep.subr.bf16.mxu0 0
        %1942 = vmatpush1.bf16.msra.mxu0 0
        %1943 = vmatprep.mubr.bf16.mxu0 0
        %1944 = vmatmul.mubr.bf16.gmra.mrb[0].mxu0 %v1909
        %v1945 = vpop.f32.mrb[0].mxu0
        %v1946 = vadd.f32 0.0, %v1945
        %v1947 = vpop.f32.mrb[0].mxu0
        %v1948 = vpop.f32.mrb[0].mxu0
        %v1949 = vadd.f32 0.0, %v1948
        %v1950 = vpop.f32.mrb[0].mxu0
        %1951 = vdwg.mxu0
        %1953 = vrot.lane.b32.xlu0 %v1452, 120
        %v1954 = vpop.permute.xlu0 %1953
        %1955 = vrot.lane.b32.xlu0 %v1456, 120
        %v1956 = vpop.permute.xlu0 %1955
        %v1958 = vsel %vm1460, %v1954, 0
        %v1961 = vsel %vm1460, %v1956, 0
        %1963 = vmatprep.subr.bf16.mxu0 0
        %1964 = vmatpush1.bf16.xpose.msra.mxu0 %v1961
        %1965 = vmatprep.subr.bf16.mxu0 0
        %1966 = vmatpush1.bf16.xpose.msra.mxu0 0
        %1967 = vmatprep.subr.bf16.mxu0 0
        %1968 = vmatpush1.bf16.xpose.msra.mxu0 0
        %1969 = vmatprep.subr.bf16.mxu0 0
        %1970 = vmatpush1.bf16.xpose.msra.mxu0 0
        %1971 = vmatprep.subr.bf16.mxu0 0
        %1972 = vmatpush1.bf16.xpose.msra.mxu0 0
        %1973 = vmatprep.subr.bf16.mxu0 0
        %1974 = vmatpush1.bf16.xpose.msra.mxu0 0
        %1975 = vmatprep.subr.bf16.mxu0 0
        %1976 = vmatpush1.bf16.xpose.msra.mxu0 0
        %1977 = vmatprep.subr.bf16.mxu0 0
        %1978 = vmatpush1.bf16.xpose.msra.mxu0 0
        %1979 = vmatprep.subr.bf16.mxu0 0
        %1980 = vmatpush1.bf16.xpose.msra.mxu0 0
        %1981 = vmatprep.subr.bf16.mxu0 0
        %1982 = vmatpush1.bf16.xpose.msra.mxu0 0
        %1983 = vmatprep.subr.bf16.mxu0 0
        %1984 = vmatpush1.bf16.xpose.msra.mxu0 0
        %1985 = vmatprep.subr.bf16.mxu0 0
        %1986 = vmatpush1.bf16.xpose.msra.mxu0 0
        %1987 = vmatprep.subr.bf16.mxu0 0
        %1988 = vmatpush1.bf16.xpose.msra.mxu0 0
        %1989 = vmatprep.subr.bf16.mxu0 0
        %1990 = vmatpush1.bf16.xpose.msra.mxu0 0
        %1991 = vmatprep.subr.bf16.mxu0 0
        %1992 = vmatpush1.bf16.xpose.msra.mxu0 0
        %1993 = vmatprep.subr.bf16.mxu0 0
        %1994 = vmatpush1.bf16.xpose.msra.mxu0 0
        %1995 = vmatprep.mubr.bf16.mxu0 0
        %1996 = vmatmul.mubr.bf16.gmra.mrb[0].mxu0 %v1958
        %v1997 = vpop.f32.mrb[0].mxu0
        %v1998 = vadd.f32 0.0, %v1997
        %v1999 = vpop.f32.mrb[0].mxu0
        %v2000 = vpop.f32.mrb[0].mxu0
        %v2001 = vadd.f32 0.0, %v2000
        %v2002 = vpop.f32.mrb[0].mxu0
        %2003 = vdwg.mxu0
        %2005 = vrot.lane.b32.xlu0 %v1453, 120
        %v2006 = vpop.permute.xlu0 %2005
        %2007 = vrot.lane.b32.xlu0 %v1457, 120
        %v2008 = vpop.permute.xlu0 %2007
        %v2010 = vsel %vm1460, %v2006, 0
        %v2013 = vsel %vm1460, %v2008, 0
        %2015 = vmatprep.subr.bf16.mxu0 0
        %2016 = vmatpush1.bf16.xpose.msra.mxu0 %v2013
        %2017 = vmatprep.subr.bf16.mxu0 0
        %2018 = vmatpush1.bf16.xpose.msra.mxu0 0
        %2019 = vmatprep.subr.bf16.mxu0 0
        %2020 = vmatpush1.bf16.xpose.msra.mxu0 0
        %2021 = vmatprep.subr.bf16.mxu0 0
        %2022 = vmatpush1.bf16.xpose.msra.mxu0 0
        %2023 = vmatprep.subr.bf16.mxu0 0
        %2024 = vmatpush1.bf16.xpose.msra.mxu0 0
        %2025 = vmatprep.subr.bf16.mxu0 0
        %2026 = vmatpush1.bf16.xpose.msra.mxu0 0
        %2027 = vmatprep.subr.bf16.mxu0 0
        %2028 = vmatpush1.bf16.xpose.msra.mxu0 0
        %2029 = vmatprep.subr.bf16.mxu0 0
        %2030 = vmatpush1.bf16.xpose.msra.mxu0 0
        %2031 = vmatprep.subr.bf16.mxu0 0
        %2032 = vmatpush1.bf16.xpose.msra.mxu0 0
        %2033 = vmatprep.subr.bf16.mxu0 0
        %2034 = vmatpush1.bf16.xpose.msra.mxu0 0
        %2035 = vmatprep.subr.bf16.mxu0 0
        %2036 = vmatpush1.bf16.xpose.msra.mxu0 0
        %2037 = vmatprep.subr.bf16.mxu0 0
        %2038 = vmatpush1.bf16.xpose.msra.mxu0 0
        %2039 = vmatprep.subr.bf16.mxu0 0
        %2040 = vmatpush1.bf16.xpose.msra.mxu0 0
        %2041 = vmatprep.subr.bf16.mxu0 0
        %2042 = vmatpush1.bf16.xpose.msra.mxu0 0
        %2043 = vmatprep.subr.bf16.mxu0 0
        %2044 = vmatpush1.bf16.xpose.msra.mxu0 0
        %2045 = vmatprep.subr.bf16.mxu0 0
        %2046 = vmatpush1.bf16.xpose.msra.mxu0 0
        %2047 = vmatprep.mubr.bf16.mxu0 0
        %2048 = vmatmul.mubr.bf16.gmra.mrb[0].mxu0 %v2010
        %v2049 = vpop.f32.mrb[0].mxu0
        %v2050 = vadd.f32 0.0, %v2049
        %v2051 = vpop.f32.mrb[0].mxu0
        %v2052 = vpop.f32.mrb[0].mxu0
        %v2053 = vadd.f32 0.0, %v2052
        %v2054 = vpop.f32.mrb[0].mxu0
        %2055 = vdwg.mxu0
        %2057 = vrot.lane.b32.xlu0 %v1454, 120
        %v2058 = vpop.permute.xlu0 %2057
        %2059 = vrot.lane.b32.xlu0 %v1458, 120
        %v2060 = vpop.permute.xlu0 %2059
        %v2062 = vsel %vm1460, %v2058, 0
        %v2065 = vsel %vm1460, %v2060, 0
        %2067 = vmatprep.subr.bf16.mxu0 0
        %2068 = vmatpush1.bf16.xpose.msra.mxu0 %v2065
        %2069 = vmatprep.subr.bf16.mxu0 0
        %2070 = vmatpush1.bf16.xpose.msra.mxu0 0
        %2071 = vmatprep.subr.bf16.mxu0 0
        %2072 = vmatpush1.bf16.xpose.msra.mxu0 0
        %2073 = vmatprep.subr.bf16.mxu0 0
        %2074 = vmatpush1.bf16.xpose.msra.mxu0 0
        %2075 = vmatprep.subr.bf16.mxu0 0
        %2076 = vmatpush1.bf16.xpose.msra.mxu0 0
        %2077 = vmatprep.subr.bf16.mxu0 0
        %2078 = vmatpush1.bf16.xpose.msra.mxu0 0
        %2079 = vmatprep.subr.bf16.mxu0 0
        %2080 = vmatpush1.bf16.xpose.msra.mxu0 0
        %2081 = vmatprep.subr.bf16.mxu0 0
        %2082 = vmatpush1.bf16.xpose.msra.mxu0 0
        %2083 = vmatprep.subr.bf16.mxu0 0
        %2084 = vmatpush1.bf16.xpose.msra.mxu0 0
        %2085 = vmatprep.subr.bf16.mxu0 0
        %2086 = vmatpush1.bf16.xpose.msra.mxu0 0
        %2087 = vmatprep.subr.bf16.mxu0 0
        %2088 = vmatpush1.bf16.xpose.msra.mxu0 0
        %2089 = vmatprep.subr.bf16.mxu0 0
        %2090 = vmatpush1.bf16.xpose.msra.mxu0 0
        %2091 = vmatprep.subr.bf16.mxu0 0
        %2092 = vmatpush1.bf16.xpose.msra.mxu0 0
        %2093 = vmatprep.subr.bf16.mxu0 0
        %2094 = vmatpush1.bf16.xpose.msra.mxu0 0
        %2095 = vmatprep.subr.bf16.mxu0 0
        %2096 = vmatpush1.bf16.xpose.msra.mxu0 0
        %2097 = vmatprep.subr.bf16.mxu0 0
        %2098 = vmatpush1.bf16.xpose.msra.mxu0 0
        %2099 = vmatprep.mubr.bf16.mxu0 0
        %2100 = vmatmul.mubr.bf16.gmra.mrb[0].mxu0 %v2062
        %v2101 = vpop.f32.mrb[0].mxu0
        %v2102 = vadd.f32 0.0, %v2101
        %v2103 = vpop.f32.mrb[0].mxu0
        %v2104 = vpop.f32.mrb[0].mxu0
        %v2105 = vadd.f32 0.0, %v2104
        %v2106 = vpop.f32.mrb[0].mxu0
        %2107 = vdwg.mxu0
        %2109 = vrot.lane.b32.xlu0 %v1455, 120
        %v2110 = vpop.permute.xlu0 %2109
        %2111 = vrot.lane.b32.xlu0 %v1459, 120
        %v2112 = vpop.permute.xlu0 %2111
        %v2114 = vsel %vm1460, %v2110, 0
        %v2117 = vsel %vm1460, %v2112, 0
        %2119 = vmatprep.subr.bf16.mxu0 0
        %2120 = vmatpush1.bf16.xpose.msra.mxu0 %v2117
        %2121 = vmatprep.subr.bf16.mxu0 0
        %2122 = vmatpush1.bf16.xpose.msra.mxu0 0
        %2123 = vmatprep.subr.bf16.mxu0 0
        %2124 = vmatpush1.bf16.xpose.msra.mxu0 0
        %2125 = vmatprep.subr.bf16.mxu0 0
        %2126 = vmatpush1.bf16.xpose.msra.mxu0 0
        %2127 = vmatprep.subr.bf16.mxu0 0
        %2128 = vmatpush1.bf16.xpose.msra.mxu0 0
        %2129 = vmatprep.subr.bf16.mxu0 0
        %2130 = vmatpush1.bf16.xpose.msra.mxu0 0
        %2131 = vmatprep.subr.bf16.mxu0 0
        %2132 = vmatpush1.bf16.xpose.msra.mxu0 0
        %2133 = vmatprep.subr.bf16.mxu0 0
        %2134 = vmatpush1.bf16.xpose.msra.mxu0 0
        %2135 = vmatprep.subr.bf16.mxu0 0
        %2136 = vmatpush1.bf16.xpose.msra.mxu0 0
        %2137 = vmatprep.subr.bf16.mxu0 0
        %2138 = vmatpush1.bf16.xpose.msra.mxu0 0
        %2139 = vmatprep.subr.bf16.mxu0 0
        %2140 = vmatpush1.bf16.xpose.msra.mxu0 0
        %2141 = vmatprep.subr.bf16.mxu0 0
        %2142 = vmatpush1.bf16.xpose.msra.mxu0 0
        %2143 = vmatprep.subr.bf16.mxu0 0
        %2144 = vmatpush1.bf16.xpose.msra.mxu0 0
        %2145 = vmatprep.subr.bf16.mxu0 0
        %2146 = vmatpush1.bf16.xpose.msra.mxu0 0
        %2147 = vmatprep.subr.bf16.mxu0 0
        %2148 = vmatpush1.bf16.xpose.msra.mxu0 0
        %2149 = vmatprep.subr.bf16.mxu0 0
        %2150 = vmatpush1.bf16.xpose.msra.mxu0 0
        %2151 = vmatprep.mubr.bf16.mxu0 0
        %2152 = vmatmul.mubr.bf16.gmra.mrb[0].mxu0 %v2114
        %v2153 = vpop.f32.mrb[0].mxu0
        %v2154 = vadd.f32 0.0, %v2153
        %v2155 = vpop.f32.mrb[0].mxu0
        %v2156 = vpop.f32.mrb[0].mxu0
        %v2157 = vadd.f32 0.0, %v2156
        %v2158 = vpop.f32.mrb[0].mxu0
        %2159 = vdwg.mxu0
        %v2160 = vmul.f32 %v1998, 0.35355338
        %v2161 = vmul.f32 %v2001, 0.35355338
        %v2162 = vmul.f32 %v2050, 0.35355338
        %v2163 = vmul.f32 %v2053, 0.35355338
        %v2164 = vmul.f32 %v2102, 0.35355338
        %v2165 = vmul.f32 %v2105, 0.35355338
        %v2166 = vmul.f32 %v2154, 0.35355338
        %v2167 = vmul.f32 %v2157, 0.35355338
        %s2168 = scalar_lea.vmem [#allocation22], 16
        %v2169 = vld [vmem:[%s2168] sm:$0xff]
        %v2170 = vld [vmem:[%s2168 + $0x8] sm:$0xff]
        %v2171 = vadd.f32 %v2160, %v2169
        %v2172 = vadd.f32 %v2161, %v2170
        %v2173 = vadd.f32 %v2162, %v2169
        %v2174 = vadd.f32 %v2163, %v2170
        %v2175 = vadd.f32 %v2164, %v2169
        %v2176 = vadd.f32 %v2165, %v2170
        %v2177 = vadd.f32 %v2166, %v2169
        %v2178 = vadd.f32 %v2167, %v2170
        %v2179 = vsel %vm1667, %v2171, -inf
        %2180 = vmax.xlane.f32.xlu0 %v2179
        %v2181 = vpop.xlane.xlu0 %2180
        %v2182 = vsel %vm1667, %v2172, -inf
        %2183 = vmax.xlane.f32.xlu0 %v2182
        %v2184 = vpop.xlane.xlu0 %2183
        %v2185 = vsel %vm1667, %v2173, -inf
        %2186 = vmax.xlane.f32.xlu0 %v2185
        %v2187 = vpop.xlane.xlu0 %2186
        %v2188 = vsel %vm1667, %v2174, -inf
        %2189 = vmax.xlane.f32.xlu0 %v2188
        %v2190 = vpop.xlane.xlu0 %2189
        %v2191 = vsel %vm1667, %v2175, -inf
        %2192 = vmax.xlane.f32.xlu0 %v2191
        %v2193 = vpop.xlane.xlu0 %2192
        %v2194 = vsel %vm1667, %v2176, -inf
        %2195 = vmax.xlane.f32.xlu0 %v2194
        %v2196 = vpop.xlane.xlu0 %2195
        %v2197 = vsel %vm1667, %v2177, -inf
        %2198 = vmax.xlane.f32.xlu0 %v2197
        %v2199 = vpop.xlane.xlu0 %2198
        %v2200 = vsel %vm1667, %v2178, -inf
        %2201 = vmax.xlane.f32.xlu0 %v2200
        %v2202 = vpop.xlane.xlu0 %2201
        %v2203 = vsub.f32 %v2171, %v2181
        %v2204 = vsub.f32 %v2172, %v2184
        %v2205 = vsub.f32 %v2173, %v2187
        %v2206 = vsub.f32 %v2174, %v2190
        %v2207 = vsub.f32 %v2175, %v2193
        %v2208 = vsub.f32 %v2176, %v2196
        %v2209 = vsub.f32 %v2177, %v2199
        %v2210 = vsub.f32 %v2178, %v2202
        %v2211 = vmul.f32 %v2203, 1.442695
        %v2212 = vpow.pop %v2211
        %v2213 = vmul.f32 %v2204, 1.442695
        %v2214 = vpow.pop %v2213
        %v2215 = vmul.f32 %v2205, 1.442695
        %v2216 = vpow.pop %v2215
        %v2217 = vmul.f32 %v2206, 1.442695
        %v2218 = vpow.pop %v2217
        %v2219 = vmul.f32 %v2207, 1.442695
        %v2220 = vpow.pop %v2219
        %v2221 = vmul.f32 %v2208, 1.442695
        %v2222 = vpow.pop %v2221
        %v2223 = vmul.f32 %v2209, 1.442695
        %v2224 = vpow.pop %v2223
        %v2225 = vmul.f32 %v2210, 1.442695
        %v2226 = vpow.pop %v2225
        %v2227 = vsel %vm1667, %v2212, 0.0
        %2228 = vadd.xlane.f32.xlu0 %v2227
        %v2229 = vpop.xlane.xlu0 %2228
        %v2230 = vsel %vm1667, %v2214, 0.0
        %2231 = vadd.xlane.f32.xlu0 %v2230
        %v2232 = vpop.xlane.xlu0 %2231
        %v2233 = vsel %vm1667, %v2216, 0.0
        %2234 = vadd.xlane.f32.xlu0 %v2233
        %v2235 = vpop.xlane.xlu0 %2234
        %v2236 = vsel %vm1667, %v2218, 0.0
        %2237 = vadd.xlane.f32.xlu0 %v2236
        %v2238 = vpop.xlane.xlu0 %2237
        %v2239 = vsel %vm1667, %v2220, 0.0
        %2240 = vadd.xlane.f32.xlu0 %v2239
        %v2241 = vpop.xlane.xlu0 %2240
        %v2242 = vsel %vm1667, %v2222, 0.0
        %2243 = vadd.xlane.f32.xlu0 %v2242
        %v2244 = vpop.xlane.xlu0 %2243
        %v2245 = vsel %vm1667, %v2224, 0.0
        %2246 = vadd.xlane.f32.xlu0 %v2245
        %v2247 = vpop.xlane.xlu0 %2246
        %v2248 = vsel %vm1667, %v2226, 0.0
        %2249 = vadd.xlane.f32.xlu0 %v2248
        %v2250 = vpop.xlane.xlu0 %2249
        %v2251 = vrcp.pop %v2229
        %v2252 = vrcp.pop %v2232
        %v2253 = vrcp.pop %v2235
        %v2254 = vrcp.pop %v2238
        %v2255 = vrcp.pop %v2241
        %v2256 = vrcp.pop %v2244
        %v2257 = vrcp.pop %v2247
        %v2258 = vrcp.pop %v2250
        %v2259 = vmul.f32 %v2212, %v2251
        %v2260 = vmul.f32 %v2214, %v2252
        %v2261 = vmul.f32 %v2216, %v2253
        %v2262 = vmul.f32 %v2218, %v2254
        %v2263 = vmul.f32 %v2220, %v2255
        %v2264 = vmul.f32 %v2222, %v2256
        %v2265 = vmul.f32 %v2224, %v2257
        %v2266 = vmul.f32 %v2226, %v2258
        %v2267 = vpack.c.bf16 %v2260, %v2259
        %v2268 = vpack.c.bf16 %v2262, %v2261
        %v2269 = vpack.c.bf16 %v2264, %v2263
        %v2270 = vpack.c.bf16 %v2266, %v2265
        %2271 = vrot.lane.b32.xlu0 %v1456, 88
        %v2272 = vpop.permute.xlu0 %2271
        %v2275 = vsel %vm1667, %v2267, 0
        %2277 = vmatprep.subr.bf16.mxu0 0
        %2278 = vmatpush1.bf16.msra.mxu0 %v2272
        %2279 = vmatprep.subr.bf16.mxu0 0
        %2280 = vmatpush1.bf16.msra.mxu0 0
        %2281 = vmatprep.subr.bf16.mxu0 0
        %2282 = vmatpush1.bf16.msra.mxu0 0
        %2283 = vmatprep.subr.bf16.mxu0 0
        %2284 = vmatpush1.bf16.msra.mxu0 0
        %2285 = vmatprep.subr.bf16.mxu0 0
        %2286 = vmatpush1.bf16.msra.mxu0 0
        %2287 = vmatprep.subr.bf16.mxu0 0
        %2288 = vmatpush1.bf16.msra.mxu0 0
        %2289 = vmatprep.subr.bf16.mxu0 0
        %2290 = vmatpush1.bf16.msra.mxu0 0
        %2291 = vmatprep.subr.bf16.mxu0 0
        %2292 = vmatpush1.bf16.msra.mxu0 0
        %2293 = vmatprep.subr.bf16.mxu0 0
        %2294 = vmatpush1.bf16.msra.mxu0 0
        %2295 = vmatprep.subr.bf16.mxu0 0
        %2296 = vmatpush1.bf16.msra.mxu0 0
        %2297 = vmatprep.subr.bf16.mxu0 0
        %2298 = vmatpush1.bf16.msra.mxu0 0
        %2299 = vmatprep.subr.bf16.mxu0 0
        %2300 = vmatpush1.bf16.msra.mxu0 0
        %2301 = vmatprep.subr.bf16.mxu0 0
        %2302 = vmatpush1.bf16.msra.mxu0 0
        %2303 = vmatprep.subr.bf16.mxu0 0
        %2304 = vmatpush1.bf16.msra.mxu0 0
        %2305 = vmatprep.subr.bf16.mxu0 0
        %2306 = vmatpush1.bf16.msra.mxu0 0
        %2307 = vmatprep.subr.bf16.mxu0 0
        %2308 = vmatpush1.bf16.msra.mxu0 0
        %2309 = vmatprep.mubr.bf16.mxu0 0
        %2310 = vmatmul.mubr.bf16.gmra.mrb[0].mxu0 %v2275
        %v2311 = vpop.f32.mrb[0].mxu0
        %v2312 = vadd.f32 0.0, %v2311
        %v2313 = vpop.f32.mrb[0].mxu0
        %v2314 = vpop.f32.mrb[0].mxu0
        %v2315 = vadd.f32 0.0, %v2314
        %v2316 = vpop.f32.mrb[0].mxu0
        %2317 = vdwg.mxu0
        %2318 = vrot.lane.b32.xlu0 %v1457, 88
        %v2319 = vpop.permute.xlu0 %2318
        %v2322 = vsel %vm1667, %v2268, 0
        %2324 = vmatprep.subr.bf16.mxu0 0
        %2325 = vmatpush1.bf16.msra.mxu0 %v2319
        %2326 = vmatprep.subr.bf16.mxu0 0
        %2327 = vmatpush1.bf16.msra.mxu0 0
        %2328 = vmatprep.subr.bf16.mxu0 0
        %2329 = vmatpush1.bf16.msra.mxu0 0
        %2330 = vmatprep.subr.bf16.mxu0 0
        %2331 = vmatpush1.bf16.msra.mxu0 0
        %2332 = vmatprep.subr.bf16.mxu0 0
        %2333 = vmatpush1.bf16.msra.mxu0 0
        %2334 = vmatprep.subr.bf16.mxu0 0
        %2335 = vmatpush1.bf16.msra.mxu0 0
        %2336 = vmatprep.subr.bf16.mxu0 0
        %2337 = vmatpush1.bf16.msra.mxu0 0
        %2338 = vmatprep.subr.bf16.mxu0 0
        %2339 = vmatpush1.bf16.msra.mxu0 0
        %2340 = vmatprep.subr.bf16.mxu0 0
        %2341 = vmatpush1.bf16.msra.mxu0 0
        %2342 = vmatprep.subr.bf16.mxu0 0
        %2343 = vmatpush1.bf16.msra.mxu0 0
        %2344 = vmatprep.subr.bf16.mxu0 0
        %2345 = vmatpush1.bf16.msra.mxu0 0
        %2346 = vmatprep.subr.bf16.mxu0 0
        %2347 = vmatpush1.bf16.msra.mxu0 0
        %2348 = vmatprep.subr.bf16.mxu0 0
        %2349 = vmatpush1.bf16.msra.mxu0 0
        %2350 = vmatprep.subr.bf16.mxu0 0
        %2351 = vmatpush1.bf16.msra.mxu0 0
        %2352 = vmatprep.subr.bf16.mxu0 0
        %2353 = vmatpush1.bf16.msra.mxu0 0
        %2354 = vmatprep.subr.bf16.mxu0 0
        %2355 = vmatpush1.bf16.msra.mxu0 0
        %2356 = vmatprep.mubr.bf16.mxu0 0
        %2357 = vmatmul.mubr.bf16.gmra.mrb[0].mxu0 %v2322
        %v2358 = vpop.f32.mrb[0].mxu0
        %v2359 = vadd.f32 0.0, %v2358
        %v2360 = vpop.f32.mrb[0].mxu0
        %v2361 = vpop.f32.mrb[0].mxu0
        %v2362 = vadd.f32 0.0, %v2361
        %v2363 = vpop.f32.mrb[0].mxu0
        %2364 = vdwg.mxu0
        %2365 = vrot.lane.b32.xlu0 %v1458, 88
        %v2366 = vpop.permute.xlu0 %2365
        %v2369 = vsel %vm1667, %v2269, 0
        %2371 = vmatprep.subr.bf16.mxu0 0
        %2372 = vmatpush1.bf16.msra.mxu0 %v2366
        %2373 = vmatprep.subr.bf16.mxu0 0
        %2374 = vmatpush1.bf16.msra.mxu0 0
        %2375 = vmatprep.subr.bf16.mxu0 0
        %2376 = vmatpush1.bf16.msra.mxu0 0
        %2377 = vmatprep.subr.bf16.mxu0 0
        %2378 = vmatpush1.bf16.msra.mxu0 0
        %2379 = vmatprep.subr.bf16.mxu0 0
        %2380 = vmatpush1.bf16.msra.mxu0 0
        %2381 = vmatprep.subr.bf16.mxu0 0
        %2382 = vmatpush1.bf16.msra.mxu0 0
        %2383 = vmatprep.subr.bf16.mxu0 0
        %2384 = vmatpush1.bf16.msra.mxu0 0
        %2385 = vmatprep.subr.bf16.mxu0 0
        %2386 = vmatpush1.bf16.msra.mxu0 0
        %2387 = vmatprep.subr.bf16.mxu0 0
        %2388 = vmatpush1.bf16.msra.mxu0 0
        %2389 = vmatprep.subr.bf16.mxu0 0
        %2390 = vmatpush1.bf16.msra.mxu0 0
        %2391 = vmatprep.subr.bf16.mxu0 0
        %2392 = vmatpush1.bf16.msra.mxu0 0
        %2393 = vmatprep.subr.bf16.mxu0 0
        %2394 = vmatpush1.bf16.msra.mxu0 0
        %2395 = vmatprep.subr.bf16.mxu0 0
        %2396 = vmatpush1.bf16.msra.mxu0 0
        %2397 = vmatprep.subr.bf16.mxu0 0
        %2398 = vmatpush1.bf16.msra.mxu0 0
        %2399 = vmatprep.subr.bf16.mxu0 0
        %2400 = vmatpush1.bf16.msra.mxu0 0
        %2401 = vmatprep.subr.bf16.mxu0 0
        %2402 = vmatpush1.bf16.msra.mxu0 0
        %2403 = vmatprep.mubr.bf16.mxu0 0
        %2404 = vmatmul.mubr.bf16.gmra.mrb[0].mxu0 %v2369
        %v2405 = vpop.f32.mrb[0].mxu0
        %v2406 = vadd.f32 0.0, %v2405
        %v2407 = vpop.f32.mrb[0].mxu0
        %v2408 = vpop.f32.mrb[0].mxu0
        %v2409 = vadd.f32 0.0, %v2408
        %v2410 = vpop.f32.mrb[0].mxu0
        %2411 = vdwg.mxu0
        %2412 = vrot.lane.b32.xlu0 %v1459, 88
        %v2413 = vpop.permute.xlu0 %2412
        %v2416 = vsel %vm1667, %v2270, 0
        %2418 = vmatprep.subr.bf16.mxu0 0
        %2419 = vmatpush1.bf16.msra.mxu0 %v2413
        %2420 = vmatprep.subr.bf16.mxu0 0
        %2421 = vmatpush1.bf16.msra.mxu0 0
        %2422 = vmatprep.subr.bf16.mxu0 0
        %2423 = vmatpush1.bf16.msra.mxu0 0
        %2424 = vmatprep.subr.bf16.mxu0 0
        %2425 = vmatpush1.bf16.msra.mxu0 0
        %2426 = vmatprep.subr.bf16.mxu0 0
        %2427 = vmatpush1.bf16.msra.mxu0 0
        %2428 = vmatprep.subr.bf16.mxu0 0
        %2429 = vmatpush1.bf16.msra.mxu0 0
        %2430 = vmatprep.subr.bf16.mxu0 0
        %2431 = vmatpush1.bf16.msra.mxu0 0
        %2432 = vmatprep.subr.bf16.mxu0 0
        %2433 = vmatpush1.bf16.msra.mxu0 0
        %2434 = vmatprep.subr.bf16.mxu0 0
        %2435 = vmatpush1.bf16.msra.mxu0 0
        %2436 = vmatprep.subr.bf16.mxu0 0
        %2437 = vmatpush1.bf16.msra.mxu0 0
        %2438 = vmatprep.subr.bf16.mxu0 0
        %2439 = vmatpush1.bf16.msra.mxu0 0
        %2440 = vmatprep.subr.bf16.mxu0 0
        %2441 = vmatpush1.bf16.msra.mxu0 0
        %2442 = vmatprep.subr.bf16.mxu0 0
        %2443 = vmatpush1.bf16.msra.mxu0 0
        %2444 = vmatprep.subr.bf16.mxu0 0
        %2445 = vmatpush1.bf16.msra.mxu0 0
        %2446 = vmatprep.subr.bf16.mxu0 0
        %2447 = vmatpush1.bf16.msra.mxu0 0
        %2448 = vmatprep.subr.bf16.mxu0 0
        %2449 = vmatpush1.bf16.msra.mxu0 0
        %2450 = vmatprep.mubr.bf16.mxu0 0
        %2451 = vmatmul.mubr.bf16.gmra.mrb[0].mxu0 %v2416
        %v2452 = vpop.f32.mrb[0].mxu0
        %v2453 = vadd.f32 0.0, %v2452
        %v2454 = vpop.f32.mrb[0].mxu0
        %v2455 = vpop.f32.mrb[0].mxu0
        %v2456 = vadd.f32 0.0, %v2455
        %v2457 = vpop.f32.mrb[0].mxu0
        %2458 = vdwg.mxu0
        %2459 = vrot.lane.b32.xlu0 %v1452, 112
        %v2460 = vpop.permute.xlu0 %2459
        %2461 = vrot.lane.b32.xlu0 %v1456, 112
        %v2462 = vpop.permute.xlu0 %2461
        %v2464 = vsel %vm1460, %v2460, 0
        %v2467 = vsel %vm1460, %v2462, 0
        %2469 = vmatprep.subr.bf16.mxu0 0
        %2470 = vmatpush1.bf16.xpose.msra.mxu0 %v2467
        %2471 = vmatprep.subr.bf16.mxu0 0
        %2472 = vmatpush1.bf16.xpose.msra.mxu0 0
        %2473 = vmatprep.subr.bf16.mxu0 0
        %2474 = vmatpush1.bf16.xpose.msra.mxu0 0
        %2475 = vmatprep.subr.bf16.mxu0 0
        %2476 = vmatpush1.bf16.xpose.msra.mxu0 0
        %2477 = vmatprep.subr.bf16.mxu0 0
        %2478 = vmatpush1.bf16.xpose.msra.mxu0 0
        %2479 = vmatprep.subr.bf16.mxu0 0
        %2480 = vmatpush1.bf16.xpose.msra.mxu0 0
        %2481 = vmatprep.subr.bf16.mxu0 0
        %2482 = vmatpush1.bf16.xpose.msra.mxu0 0
        %2483 = vmatprep.subr.bf16.mxu0 0
        %2484 = vmatpush1.bf16.xpose.msra.mxu0 0
        %2485 = vmatprep.subr.bf16.mxu0 0
        %2486 = vmatpush1.bf16.xpose.msra.mxu0 0
        %2487 = vmatprep.subr.bf16.mxu0 0
        %2488 = vmatpush1.bf16.xpose.msra.mxu0 0
        %2489 = vmatprep.subr.bf16.mxu0 0
        %2490 = vmatpush1.bf16.xpose.msra.mxu0 0
        %2491 = vmatprep.subr.bf16.mxu0 0
        %2492 = vmatpush1.bf16.xpose.msra.mxu0 0
        %2493 = vmatprep.subr.bf16.mxu0 0
        %2494 = vmatpush1.bf16.xpose.msra.mxu0 0
        %2495 = vmatprep.subr.bf16.mxu0 0
        %2496 = vmatpush1.bf16.xpose.msra.mxu0 0
        %2497 = vmatprep.subr.bf16.mxu0 0
        %2498 = vmatpush1.bf16.xpose.msra.mxu0 0
        %2499 = vmatprep.subr.bf16.mxu0 0
        %2500 = vmatpush1.bf16.xpose.msra.mxu0 0
        %2501 = vmatprep.mubr.bf16.mxu0 0
        %2502 = vmatmul.mubr.bf16.gmra.mrb[0].mxu0 %v2464
        %v2503 = vpop.f32.mrb[0].mxu0
        %v2504 = vadd.f32 0.0, %v2503
        %v2505 = vpop.f32.mrb[0].mxu0
        %v2506 = vpop.f32.mrb[0].mxu0
        %v2507 = vadd.f32 0.0, %v2506
        %v2508 = vpop.f32.mrb[0].mxu0
        %2509 = vdwg.mxu0
        %2510 = vrot.lane.b32.xlu0 %v1453, 112
        %v2511 = vpop.permute.xlu0 %2510
        %2512 = vrot.lane.b32.xlu0 %v1457, 112
        %v2513 = vpop.permute.xlu0 %2512
        %v2515 = vsel %vm1460, %v2511, 0
        %v2518 = vsel %vm1460, %v2513, 0
        %2520 = vmatprep.subr.bf16.mxu0 0
        %2521 = vmatpush1.bf16.xpose.msra.mxu0 %v2518
        %2522 = vmatprep.subr.bf16.mxu0 0
        %2523 = vmatpush1.bf16.xpose.msra.mxu0 0
        %2524 = vmatprep.subr.bf16.mxu0 0
        %2525 = vmatpush1.bf16.xpose.msra.mxu0 0
        %2526 = vmatprep.subr.bf16.mxu0 0
        %2527 = vmatpush1.bf16.xpose.msra.mxu0 0
        %2528 = vmatprep.subr.bf16.mxu0 0
        %2529 = vmatpush1.bf16.xpose.msra.mxu0 0
        %2530 = vmatprep.subr.bf16.mxu0 0
        %2531 = vmatpush1.bf16.xpose.msra.mxu0 0
        %2532 = vmatprep.subr.bf16.mxu0 0
        %2533 = vmatpush1.bf16.xpose.msra.mxu0 0
        %2534 = vmatprep.subr.bf16.mxu0 0
        %2535 = vmatpush1.bf16.xpose.msra.mxu0 0
        %2536 = vmatprep.subr.bf16.mxu0 0
        %2537 = vmatpush1.bf16.xpose.msra.mxu0 0
        %2538 = vmatprep.subr.bf16.mxu0 0
        %2539 = vmatpush1.bf16.xpose.msra.mxu0 0
        %2540 = vmatprep.subr.bf16.mxu0 0
        %2541 = vmatpush1.bf16.xpose.msra.mxu0 0
        %2542 = vmatprep.subr.bf16.mxu0 0
        %2543 = vmatpush1.bf16.xpose.msra.mxu0 0
        %2544 = vmatprep.subr.bf16.mxu0 0
        %2545 = vmatpush1.bf16.xpose.msra.mxu0 0
        %2546 = vmatprep.subr.bf16.mxu0 0
        %2547 = vmatpush1.bf16.xpose.msra.mxu0 0
        %2548 = vmatprep.subr.bf16.mxu0 0
        %2549 = vmatpush1.bf16.xpose.msra.mxu0 0
        %2550 = vmatprep.subr.bf16.mxu0 0
        %2551 = vmatpush1.bf16.xpose.msra.mxu0 0
        %2552 = vmatprep.mubr.bf16.mxu0 0
        %2553 = vmatmul.mubr.bf16.gmra.mrb[0].mxu0 %v2515
        %v2554 = vpop.f32.mrb[0].mxu0
        %v2555 = vadd.f32 0.0, %v2554
        %v2556 = vpop.f32.mrb[0].mxu0
        %v2557 = vpop.f32.mrb[0].mxu0
        %v2558 = vadd.f32 0.0, %v2557
        %v2559 = vpop.f32.mrb[0].mxu0
        %2560 = vdwg.mxu0
        %2561 = vrot.lane.b32.xlu0 %v1454, 112
        %v2562 = vpop.permute.xlu0 %2561
        %2563 = vrot.lane.b32.xlu0 %v1458, 112
        %v2564 = vpop.permute.xlu0 %2563
        %v2566 = vsel %vm1460, %v2562, 0
        %v2569 = vsel %vm1460, %v2564, 0
        %2571 = vmatprep.subr.bf16.mxu0 0
        %2572 = vmatpush1.bf16.xpose.msra.mxu0 %v2569
        %2573 = vmatprep.subr.bf16.mxu0 0
        %2574 = vmatpush1.bf16.xpose.msra.mxu0 0
        %2575 = vmatprep.subr.bf16.mxu0 0
        %2576 = vmatpush1.bf16.xpose.msra.mxu0 0
        %2577 = vmatprep.subr.bf16.mxu0 0
        %2578 = vmatpush1.bf16.xpose.msra.mxu0 0
        %2579 = vmatprep.subr.bf16.mxu0 0
        %2580 = vmatpush1.bf16.xpose.msra.mxu0 0
        %2581 = vmatprep.subr.bf16.mxu0 0
        %2582 = vmatpush1.bf16.xpose.msra.mxu0 0
        %2583 = vmatprep.subr.bf16.mxu0 0
        %2584 = vmatpush1.bf16.xpose.msra.mxu0 0
        %2585 = vmatprep.subr.bf16.mxu0 0
        %2586 = vmatpush1.bf16.xpose.msra.mxu0 0
        %2587 = vmatprep.subr.bf16.mxu0 0
        %2588 = vmatpush1.bf16.xpose.msra.mxu0 0
        %2589 = vmatprep.subr.bf16.mxu0 0
        %2590 = vmatpush1.bf16.xpose.msra.mxu0 0
        %2591 = vmatprep.subr.bf16.mxu0 0
        %2592 = vmatpush1.bf16.xpose.msra.mxu0 0
        %2593 = vmatprep.subr.bf16.mxu0 0
        %2594 = vmatpush1.bf16.xpose.msra.mxu0 0
        %2595 = vmatprep.subr.bf16.mxu0 0
        %2596 = vmatpush1.bf16.xpose.msra.mxu0 0
        %2597 = vmatprep.subr.bf16.mxu0 0
        %2598 = vmatpush1.bf16.xpose.msra.mxu0 0
        %2599 = vmatprep.subr.bf16.mxu0 0
        %2600 = vmatpush1.bf16.xpose.msra.mxu0 0
        %2601 = vmatprep.subr.bf16.mxu0 0
        %2602 = vmatpush1.bf16.xpose.msra.mxu0 0
        %2603 = vmatprep.mubr.bf16.mxu0 0
        %2604 = vmatmul.mubr.bf16.gmra.mrb[0].mxu0 %v2566
        %v2605 = vpop.f32.mrb[0].mxu0
        %v2606 = vadd.f32 0.0, %v2605
        %v2607 = vpop.f32.mrb[0].mxu0
        %v2608 = vpop.f32.mrb[0].mxu0
        %v2609 = vadd.f32 0.0, %v2608
        %v2610 = vpop.f32.mrb[0].mxu0
        %2611 = vdwg.mxu0
        %2612 = vrot.lane.b32.xlu0 %v1455, 112
        %v2613 = vpop.permute.xlu0 %2612
        %2614 = vrot.lane.b32.xlu0 %v1459, 112
        %v2615 = vpop.permute.xlu0 %2614
        %v2617 = vsel %vm1460, %v2613, 0
        %v2620 = vsel %vm1460, %v2615, 0
        %2622 = vmatprep.subr.bf16.mxu0 0
        %2623 = vmatpush1.bf16.xpose.msra.mxu0 %v2620
        %2624 = vmatprep.subr.bf16.mxu0 0
        %2625 = vmatpush1.bf16.xpose.msra.mxu0 0
        %2626 = vmatprep.subr.bf16.mxu0 0
        %2627 = vmatpush1.bf16.xpose.msra.mxu0 0
        %2628 = vmatprep.subr.bf16.mxu0 0
        %2629 = vmatpush1.bf16.xpose.msra.mxu0 0
        %2630 = vmatprep.subr.bf16.mxu0 0
        %2631 = vmatpush1.bf16.xpose.msra.mxu0 0
        %2632 = vmatprep.subr.bf16.mxu0 0
        %2633 = vmatpush1.bf16.xpose.msra.mxu0 0
        %2634 = vmatprep.subr.bf16.mxu0 0
        %2635 = vmatpush1.bf16.xpose.msra.mxu0 0
        %2636 = vmatprep.subr.bf16.mxu0 0
        %2637 = vmatpush1.bf16.xpose.msra.mxu0 0
        %2638 = vmatprep.subr.bf16.mxu0 0
        %2639 = vmatpush1.bf16.xpose.msra.mxu0 0
        %2640 = vmatprep.subr.bf16.mxu0 0
        %2641 = vmatpush1.bf16.xpose.msra.mxu0 0
        %2642 = vmatprep.subr.bf16.mxu0 0
        %2643 = vmatpush1.bf16.xpose.msra.mxu0 0
        %2644 = vmatprep.subr.bf16.mxu0 0
        %2645 = vmatpush1.bf16.xpose.msra.mxu0 0
        %2646 = vmatprep.subr.bf16.mxu0 0
        %2647 = vmatpush1.bf16.xpose.msra.mxu0 0
        %2648 = vmatprep.subr.bf16.mxu0 0
        %2649 = vmatpush1.bf16.xpose.msra.mxu0 0
        %2650 = vmatprep.subr.bf16.mxu0 0
        %2651 = vmatpush1.bf16.xpose.msra.mxu0 0
        %2652 = vmatprep.subr.bf16.mxu0 0
        %2653 = vmatpush1.bf16.xpose.msra.mxu0 0
        %2654 = vmatprep.mubr.bf16.mxu0 0
        %2655 = vmatmul.mubr.bf16.gmra.mrb[0].mxu0 %v2617
        %v2656 = vpop.f32.mrb[0].mxu0
        %v2657 = vadd.f32 0.0, %v2656
        %v2658 = vpop.f32.mrb[0].mxu0
        %v2659 = vpop.f32.mrb[0].mxu0
        %v2660 = vadd.f32 0.0, %v2659
        %v2661 = vpop.f32.mrb[0].mxu0
        %2662 = vdwg.mxu0
        %v2663 = vmul.f32 %v2504, 0.35355338
        %v2664 = vmul.f32 %v2507, 0.35355338
        %v2665 = vmul.f32 %v2555, 0.35355338
        %v2666 = vmul.f32 %v2558, 0.35355338
        %v2667 = vmul.f32 %v2606, 0.35355338
        %v2668 = vmul.f32 %v2609, 0.35355338
        %v2669 = vmul.f32 %v2657, 0.35355338
        %v2670 = vmul.f32 %v2660, 0.35355338
        %s2671 = scalar_lea.vmem [#allocation22], 32
        %v2672 = vld [vmem:[%s2671] sm:$0xff]
        %v2673 = vld [vmem:[%s2671 + $0x8] sm:$0xff]
        %v2674 = vadd.f32 %v2663, %v2672
        %v2675 = vadd.f32 %v2664, %v2673
        %v2676 = vadd.f32 %v2665, %v2672
        %v2677 = vadd.f32 %v2666, %v2673
        %v2678 = vadd.f32 %v2667, %v2672
        %v2679 = vadd.f32 %v2668, %v2673
        %v2680 = vadd.f32 %v2669, %v2672
        %v2681 = vadd.f32 %v2670, %v2673
        %v2682 = vsel %vm1667, %v2674, -inf
        %2683 = vmax.xlane.f32.xlu0 %v2682
        %v2684 = vpop.xlane.xlu0 %2683
        %v2685 = vsel %vm1667, %v2675, -inf
        %2686 = vmax.xlane.f32.xlu0 %v2685
        %v2687 = vpop.xlane.xlu0 %2686
        %v2688 = vsel %vm1667, %v2676, -inf
        %2689 = vmax.xlane.f32.xlu0 %v2688
        %v2690 = vpop.xlane.xlu0 %2689
        %v2691 = vsel %vm1667, %v2677, -inf
        %2692 = vmax.xlane.f32.xlu0 %v2691
        %v2693 = vpop.xlane.xlu0 %2692
        %v2694 = vsel %vm1667, %v2678, -inf
        %2695 = vmax.xlane.f32.xlu0 %v2694
        %v2696 = vpop.xlane.xlu0 %2695
        %v2697 = vsel %vm1667, %v2679, -inf
        %2698 = vmax.xlane.f32.xlu0 %v2697
        %v2699 = vpop.xlane.xlu0 %2698
        %v2700 = vsel %vm1667, %v2680, -inf
        %2701 = vmax.xlane.f32.xlu0 %v2700
        %v2702 = vpop.xlane.xlu0 %2701
        %v2703 = vsel %vm1667, %v2681, -inf
        %2704 = vmax.xlane.f32.xlu0 %v2703
        %v2705 = vpop.xlane.xlu0 %2704
        %v2706 = vsub.f32 %v2674, %v2684
        %v2707 = vsub.f32 %v2675, %v2687
        %v2708 = vsub.f32 %v2676, %v2690
        %v2709 = vsub.f32 %v2677, %v2693
        %v2710 = vsub.f32 %v2678, %v2696
        %v2711 = vsub.f32 %v2679, %v2699
        %v2712 = vsub.f32 %v2680, %v2702
        %v2713 = vsub.f32 %v2681, %v2705
        %v2714 = vmul.f32 %v2706, 1.442695
        %v2715 = vpow.pop %v2714
        %v2716 = vmul.f32 %v2707, 1.442695
        %v2717 = vpow.pop %v2716
        %v2718 = vmul.f32 %v2708, 1.442695
        %v2719 = vpow.pop %v2718
        %v2720 = vmul.f32 %v2709, 1.442695
        %v2721 = vpow.pop %v2720
        %v2722 = vmul.f32 %v2710, 1.442695
        %v2723 = vpow.pop %v2722
        %v2724 = vmul.f32 %v2711, 1.442695
        %v2725 = vpow.pop %v2724
        %v2726 = vmul.f32 %v2712, 1.442695
        %v2727 = vpow.pop %v2726
        %v2728 = vmul.f32 %v2713, 1.442695
        %v2729 = vpow.pop %v2728
        %v2730 = vsel %vm1667, %v2715, 0.0
        %2731 = vadd.xlane.f32.xlu0 %v2730
        %v2732 = vpop.xlane.xlu0 %2731
        %v2733 = vsel %vm1667, %v2717, 0.0
        %2734 = vadd.xlane.f32.xlu0 %v2733
        %v2735 = vpop.xlane.xlu0 %2734
        %v2736 = vsel %vm1667, %v2719, 0.0
        %2737 = vadd.xlane.f32.xlu0 %v2736
        %v2738 = vpop.xlane.xlu0 %2737
        %v2739 = vsel %vm1667, %v2721, 0.0
        %2740 = vadd.xlane.f32.xlu0 %v2739
        %v2741 = vpop.xlane.xlu0 %2740
        %v2742 = vsel %vm1667, %v2723, 0.0
        %2743 = vadd.xlane.f32.xlu0 %v2742
        %v2744 = vpop.xlane.xlu0 %2743
        %v2745 = vsel %vm1667, %v2725, 0.0
        %2746 = vadd.xlane.f32.xlu0 %v2745
        %v2747 = vpop.xlane.xlu0 %2746
        %v2748 = vsel %vm1667, %v2727, 0.0
        %2749 = vadd.xlane.f32.xlu0 %v2748
        %v2750 = vpop.xlane.xlu0 %2749
        %v2751 = vsel %vm1667, %v2729, 0.0
        %2752 = vadd.xlane.f32.xlu0 %v2751
        %v2753 = vpop.xlane.xlu0 %2752
        %v2754 = vrcp.pop %v2732
        %v2755 = vrcp.pop %v2735
        %v2756 = vrcp.pop %v2738
        %v2757 = vrcp.pop %v2741
        %v2758 = vrcp.pop %v2744
        %v2759 = vrcp.pop %v2747
        %v2760 = vrcp.pop %v2750
        %v2761 = vrcp.pop %v2753
        %v2762 = vmul.f32 %v2715, %v2754
        %v2763 = vmul.f32 %v2717, %v2755
        %v2764 = vmul.f32 %v2719, %v2756
        %v2765 = vmul.f32 %v2721, %v2757
        %v2766 = vmul.f32 %v2723, %v2758
        %v2767 = vmul.f32 %v2725, %v2759
        %v2768 = vmul.f32 %v2727, %v2760
        %v2769 = vmul.f32 %v2729, %v2761
        %v2770 = vpack.c.bf16 %v2763, %v2762
        %v2771 = vpack.c.bf16 %v2765, %v2764
        %v2772 = vpack.c.bf16 %v2767, %v2766
        %v2773 = vpack.c.bf16 %v2769, %v2768
        %2774 = vrot.lane.b32.xlu0 %v1456, 80
        %v2775 = vpop.permute.xlu0 %2774
        %v2778 = vsel %vm1667, %v2770, 0
        %2780 = vmatprep.subr.bf16.mxu0 0
        %2781 = vmatpush1.bf16.msra.mxu0 %v2775
        %2782 = vmatprep.subr.bf16.mxu0 0
        %2783 = vmatpush1.bf16.msra.mxu0 0
        %2784 = vmatprep.subr.bf16.mxu0 0
        %2785 = vmatpush1.bf16.msra.mxu0 0
        %2786 = vmatprep.subr.bf16.mxu0 0
        %2787 = vmatpush1.bf16.msra.mxu0 0
        %2788 = vmatprep.subr.bf16.mxu0 0
        %2789 = vmatpush1.bf16.msra.mxu0 0
        %2790 = vmatprep.subr.bf16.mxu0 0
        %2791 = vmatpush1.bf16.msra.mxu0 0
        %2792 = vmatprep.subr.bf16.mxu0 0
        %2793 = vmatpush1.bf16.msra.mxu0 0
        %2794 = vmatprep.subr.bf16.mxu0 0
        %2795 = vmatpush1.bf16.msra.mxu0 0
        %2796 = vmatprep.subr.bf16.mxu0 0
        %2797 = vmatpush1.bf16.msra.mxu0 0
        %2798 = vmatprep.subr.bf16.mxu0 0
        %2799 = vmatpush1.bf16.msra.mxu0 0
        %2800 = vmatprep.subr.bf16.mxu0 0
        %2801 = vmatpush1.bf16.msra.mxu0 0
        %2802 = vmatprep.subr.bf16.mxu0 0
        %2803 = vmatpush1.bf16.msra.mxu0 0
        %2804 = vmatprep.subr.bf16.mxu0 0
        %2805 = vmatpush1.bf16.msra.mxu0 0
        %2806 = vmatprep.subr.bf16.mxu0 0
        %2807 = vmatpush1.bf16.msra.mxu0 0
        %2808 = vmatprep.subr.bf16.mxu0 0
        %2809 = vmatpush1.bf16.msra.mxu0 0
        %2810 = vmatprep.subr.bf16.mxu0 0
        %2811 = vmatpush1.bf16.msra.mxu0 0
        %2812 = vmatprep.mubr.bf16.mxu0 0
        %2813 = vmatmul.mubr.bf16.gmra.mrb[0].mxu0 %v2778
        %v2814 = vpop.f32.mrb[0].mxu0
        %v2815 = vadd.f32 0.0, %v2814
        %v2816 = vpop.f32.mrb[0].mxu0
        %v2817 = vpop.f32.mrb[0].mxu0
        %v2818 = vadd.f32 0.0, %v2817
        %v2819 = vpop.f32.mrb[0].mxu0
        %2820 = vdwg.mxu0
        %2821 = vrot.lane.b32.xlu0 %v1457, 80
        %v2822 = vpop.permute.xlu0 %2821
        %v2825 = vsel %vm1667, %v2771, 0
        %2827 = vmatprep.subr.bf16.mxu0 0
        %2828 = vmatpush1.bf16.msra.mxu0 %v2822
        %2829 = vmatprep.subr.bf16.mxu0 0
        %2830 = vmatpush1.bf16.msra.mxu0 0
        %2831 = vmatprep.subr.bf16.mxu0 0
        %2832 = vmatpush1.bf16.msra.mxu0 0
        %2833 = vmatprep.subr.bf16.mxu0 0
        %2834 = vmatpush1.bf16.msra.mxu0 0
        %2835 = vmatprep.subr.bf16.mxu0 0
        %2836 = vmatpush1.bf16.msra.mxu0 0
        %2837 = vmatprep.subr.bf16.mxu0 0
        %2838 = vmatpush1.bf16.msra.mxu0 0
        %2839 = vmatprep.subr.bf16.mxu0 0
        %2840 = vmatpush1.bf16.msra.mxu0 0
        %2841 = vmatprep.subr.bf16.mxu0 0
        %2842 = vmatpush1.bf16.msra.mxu0 0
        %2843 = vmatprep.subr.bf16.mxu0 0
        %2844 = vmatpush1.bf16.msra.mxu0 0
        %2845 = vmatprep.subr.bf16.mxu0 0
        %2846 = vmatpush1.bf16.msra.mxu0 0
        %2847 = vmatprep.subr.bf16.mxu0 0
        %2848 = vmatpush1.bf16.msra.mxu0 0
        %2849 = vmatprep.subr.bf16.mxu0 0
        %2850 = vmatpush1.bf16.msra.mxu0 0
        %2851 = vmatprep.subr.bf16.mxu0 0
        %2852 = vmatpush1.bf16.msra.mxu0 0
        %2853 = vmatprep.subr.bf16.mxu0 0
        %2854 = vmatpush1.bf16.msra.mxu0 0
        %2855 = vmatprep.subr.bf16.mxu0 0
        %2856 = vmatpush1.bf16.msra.mxu0 0
        %2857 = vmatprep.subr.bf16.mxu0 0
        %2858 = vmatpush1.bf16.msra.mxu0 0
        %2859 = vmatprep.mubr.bf16.mxu0 0
        %2860 = vmatmul.mubr.bf16.gmra.mrb[0].mxu0 %v2825
        %v2861 = vpop.f32.mrb[0].mxu0
        %v2862 = vadd.f32 0.0, %v2861
        %v2863 = vpop.f32.mrb[0].mxu0
        %v2864 = vpop.f32.mrb[0].mxu0
        %v2865 = vadd.f32 0.0, %v2864
        %v2866 = vpop.f32.mrb[0].mxu0
        %2867 = vdwg.mxu0
        %2868 = vrot.lane.b32.xlu0 %v1458, 80
        %v2869 = vpop.permute.xlu0 %2868
        %v2872 = vsel %vm1667, %v2772, 0
        %2874 = vmatprep.subr.bf16.mxu0 0
        %2875 = vmatpush1.bf16.msra.mxu0 %v2869
        %2876 = vmatprep.subr.bf16.mxu0 0
        %2877 = vmatpush1.bf16.msra.mxu0 0
        %2878 = vmatprep.subr.bf16.mxu0 0
        %2879 = vmatpush1.bf16.msra.mxu0 0
        %2880 = vmatprep.subr.bf16.mxu0 0
        %2881 = vmatpush1.bf16.msra.mxu0 0
        %2882 = vmatprep.subr.bf16.mxu0 0
        %2883 = vmatpush1.bf16.msra.mxu0 0
        %2884 = vmatprep.subr.bf16.mxu0 0
        %2885 = vmatpush1.bf16.msra.mxu0 0
        %2886 = vmatprep.subr.bf16.mxu0 0
        %2887 = vmatpush1.bf16.msra.mxu0 0
        %2888 = vmatprep.subr.bf16.mxu0 0
        %2889 = vmatpush1.bf16.msra.mxu0 0
        %2890 = vmatprep.subr.bf16.mxu0 0
        %2891 = vmatpush1.bf16.msra.mxu0 0
        %2892 = vmatprep.subr.bf16.mxu0 0
        %2893 = vmatpush1.bf16.msra.mxu0 0
        %2894 = vmatprep.subr.bf16.mxu0 0
        %2895 = vmatpush1.bf16.msra.mxu0 0
        %2896 = vmatprep.subr.bf16.mxu0 0
        %2897 = vmatpush1.bf16.msra.mxu0 0
        %2898 = vmatprep.subr.bf16.mxu0 0
        %2899 = vmatpush1.bf16.msra.mxu0 0
        %2900 = vmatprep.subr.bf16.mxu0 0
        %2901 = vmatpush1.bf16.msra.mxu0 0
        %2902 = vmatprep.subr.bf16.mxu0 0
        %2903 = vmatpush1.bf16.msra.mxu0 0
        %2904 = vmatprep.subr.bf16.mxu0 0
        %2905 = vmatpush1.bf16.msra.mxu0 0
        %2906 = vmatprep.mubr.bf16.mxu0 0
        %2907 = vmatmul.mubr.bf16.gmra.mrb[0].mxu0 %v2872
        %v2908 = vpop.f32.mrb[0].mxu0
        %v2909 = vadd.f32 0.0, %v2908
        %v2910 = vpop.f32.mrb[0].mxu0
        %v2911 = vpop.f32.mrb[0].mxu0
        %v2912 = vadd.f32 0.0, %v2911
        %v2913 = vpop.f32.mrb[0].mxu0
        %2914 = vdwg.mxu0
        %2915 = vrot.lane.b32.xlu0 %v1459, 80
        %v2916 = vpop.permute.xlu0 %2915
        %v2919 = vsel %vm1667, %v2773, 0
        %2921 = vmatprep.subr.bf16.mxu0 0
        %2922 = vmatpush1.bf16.msra.mxu0 %v2916
        %2923 = vmatprep.subr.bf16.mxu0 0
        %2924 = vmatpush1.bf16.msra.mxu0 0
        %2925 = vmatprep.subr.bf16.mxu0 0
        %2926 = vmatpush1.bf16.msra.mxu0 0
        %2927 = vmatprep.subr.bf16.mxu0 0
        %2928 = vmatpush1.bf16.msra.mxu0 0
        %2929 = vmatprep.subr.bf16.mxu0 0
        %2930 = vmatpush1.bf16.msra.mxu0 0
        %2931 = vmatprep.subr.bf16.mxu0 0
        %2932 = vmatpush1.bf16.msra.mxu0 0
        %2933 = vmatprep.subr.bf16.mxu0 0
        %2934 = vmatpush1.bf16.msra.mxu0 0
        %2935 = vmatprep.subr.bf16.mxu0 0
        %2936 = vmatpush1.bf16.msra.mxu0 0
        %2937 = vmatprep.subr.bf16.mxu0 0
        %2938 = vmatpush1.bf16.msra.mxu0 0
        %2939 = vmatprep.subr.bf16.mxu0 0
        %2940 = vmatpush1.bf16.msra.mxu0 0
        %2941 = vmatprep.subr.bf16.mxu0 0
        %2942 = vmatpush1.bf16.msra.mxu0 0
        %2943 = vmatprep.subr.bf16.mxu0 0
        %2944 = vmatpush1.bf16.msra.mxu0 0
        %2945 = vmatprep.subr.bf16.mxu0 0
        %2946 = vmatpush1.bf16.msra.mxu0 0
        %2947 = vmatprep.subr.bf16.mxu0 0
        %2948 = vmatpush1.bf16.msra.mxu0 0
        %2949 = vmatprep.subr.bf16.mxu0 0
        %2950 = vmatpush1.bf16.msra.mxu0 0
        %2951 = vmatprep.subr.bf16.mxu0 0
        %2952 = vmatpush1.bf16.msra.mxu0 0
        %2953 = vmatprep.mubr.bf16.mxu0 0
        %2954 = vmatmul.mubr.bf16.gmra.mrb[0].mxu0 %v2919
        %v2955 = vpop.f32.mrb[0].mxu0
        %v2956 = vadd.f32 0.0, %v2955
        %v2957 = vpop.f32.mrb[0].mxu0
        %v2958 = vpop.f32.mrb[0].mxu0
        %v2959 = vadd.f32 0.0, %v2958
        %v2960 = vpop.f32.mrb[0].mxu0
        %2961 = vdwg.mxu0
        %2962 = vrot.lane.b32.xlu0 %v1452, 104
        %v2963 = vpop.permute.xlu0 %2962
        %2964 = vrot.lane.b32.xlu0 %v1456, 104
        %v2965 = vpop.permute.xlu0 %2964
        %v2967 = vsel %vm1460, %v2963, 0
        %v2970 = vsel %vm1460, %v2965, 0
        %2972 = vmatprep.subr.bf16.mxu0 0
        %2973 = vmatpush1.bf16.xpose.msra.mxu0 %v2970
        %2974 = vmatprep.subr.bf16.mxu0 0
        %2975 = vmatpush1.bf16.xpose.msra.mxu0 0
        %2976 = vmatprep.subr.bf16.mxu0 0
        %2977 = vmatpush1.bf16.xpose.msra.mxu0 0
        %2978 = vmatprep.subr.bf16.mxu0 0
        %2979 = vmatpush1.bf16.xpose.msra.mxu0 0
        %2980 = vmatprep.subr.bf16.mxu0 0
        %2981 = vmatpush1.bf16.xpose.msra.mxu0 0
        %2982 = vmatprep.subr.bf16.mxu0 0
        %2983 = vmatpush1.bf16.xpose.msra.mxu0 0
        %2984 = vmatprep.subr.bf16.mxu0 0
        %2985 = vmatpush1.bf16.xpose.msra.mxu0 0
        %2986 = vmatprep.subr.bf16.mxu0 0
        %2987 = vmatpush1.bf16.xpose.msra.mxu0 0
        %2988 = vmatprep.subr.bf16.mxu0 0
        %2989 = vmatpush1.bf16.xpose.msra.mxu0 0
        %2990 = vmatprep.subr.bf16.mxu0 0
        %2991 = vmatpush1.bf16.xpose.msra.mxu0 0
        %2992 = vmatprep.subr.bf16.mxu0 0
        %2993 = vmatpush1.bf16.xpose.msra.mxu0 0
        %2994 = vmatprep.subr.bf16.mxu0 0
        %2995 = vmatpush1.bf16.xpose.msra.mxu0 0
        %2996 = vmatprep.subr.bf16.mxu0 0
        %2997 = vmatpush1.bf16.xpose.msra.mxu0 0
        %2998 = vmatprep.subr.bf16.mxu0 0
        %2999 = vmatpush1.bf16.xpose.msra.mxu0 0
        %3000 = vmatprep.subr.bf16.mxu0 0
        %3001 = vmatpush1.bf16.xpose.msra.mxu0 0
        %3002 = vmatprep.subr.bf16.mxu0 0
        %3003 = vmatpush1.bf16.xpose.msra.mxu0 0
        %3004 = vmatprep.mubr.bf16.mxu0 0
        %3005 = vmatmul.mubr.bf16.gmra.mrb[0].mxu0 %v2967
        %v3006 = vpop.f32.mrb[0].mxu0
        %v3007 = vadd.f32 0.0, %v3006
        %v3008 = vpop.f32.mrb[0].mxu0
        %v3009 = vpop.f32.mrb[0].mxu0
        %v3010 = vadd.f32 0.0, %v3009
        %v3011 = vpop.f32.mrb[0].mxu0
        %3012 = vdwg.mxu0
        %3013 = vrot.lane.b32.xlu0 %v1453, 104
        %v3014 = vpop.permute.xlu0 %3013
        %3015 = vrot.lane.b32.xlu0 %v1457, 104
        %v3016 = vpop.permute.xlu0 %3015
        %v3018 = vsel %vm1460, %v3014, 0
        %v3021 = vsel %vm1460, %v3016, 0
        %3023 = vmatprep.subr.bf16.mxu0 0
        %3024 = vmatpush1.bf16.xpose.msra.mxu0 %v3021
        %3025 = vmatprep.subr.bf16.mxu0 0
        %3026 = vmatpush1.bf16.xpose.msra.mxu0 0
        %3027 = vmatprep.subr.bf16.mxu0 0
        %3028 = vmatpush1.bf16.xpose.msra.mxu0 0
        %3029 = vmatprep.subr.bf16.mxu0 0
        %3030 = vmatpush1.bf16.xpose.msra.mxu0 0
        %3031 = vmatprep.subr.bf16.mxu0 0
        %3032 = vmatpush1.bf16.xpose.msra.mxu0 0
        %3033 = vmatprep.subr.bf16.mxu0 0
        %3034 = vmatpush1.bf16.xpose.msra.mxu0 0
        %3035 = vmatprep.subr.bf16.mxu0 0
        %3036 = vmatpush1.bf16.xpose.msra.mxu0 0
        %3037 = vmatprep.subr.bf16.mxu0 0
        %3038 = vmatpush1.bf16.xpose.msra.mxu0 0
        %3039 = vmatprep.subr.bf16.mxu0 0
        %3040 = vmatpush1.bf16.xpose.msra.mxu0 0
        %3041 = vmatprep.subr.bf16.mxu0 0
        %3042 = vmatpush1.bf16.xpose.msra.mxu0 0
        %3043 = vmatprep.subr.bf16.mxu0 0
        %3044 = vmatpush1.bf16.xpose.msra.mxu0 0
        %3045 = vmatprep.subr.bf16.mxu0 0
        %3046 = vmatpush1.bf16.xpose.msra.mxu0 0
        %3047 = vmatprep.subr.bf16.mxu0 0
        %3048 = vmatpush1.bf16.xpose.msra.mxu0 0
        %3049 = vmatprep.subr.bf16.mxu0 0
        %3050 = vmatpush1.bf16.xpose.msra.mxu0 0
        %3051 = vmatprep.subr.bf16.mxu0 0
        %3052 = vmatpush1.bf16.xpose.msra.mxu0 0
        %3053 = vmatprep.subr.bf16.mxu0 0
        %3054 = vmatpush1.bf16.xpose.msra.mxu0 0
        %3055 = vmatprep.mubr.bf16.mxu0 0
        %3056 = vmatmul.mubr.bf16.gmra.mrb[0].mxu0 %v3018
        %v3057 = vpop.f32.mrb[0].mxu0
        %v3058 = vadd.f32 0.0, %v3057
        %v3059 = vpop.f32.mrb[0].mxu0
        %v3060 = vpop.f32.mrb[0].mxu0
        %v3061 = vadd.f32 0.0, %v3060
        %v3062 = vpop.f32.mrb[0].mxu0
        %3063 = vdwg.mxu0
        %3064 = vrot.lane.b32.xlu0 %v1454, 104
        %v3065 = vpop.permute.xlu0 %3064
        %3066 = vrot.lane.b32.xlu0 %v1458, 104
        %v3067 = vpop.permute.xlu0 %3066
        %v3069 = vsel %vm1460, %v3065, 0
        %v3072 = vsel %vm1460, %v3067, 0
        %3074 = vmatprep.subr.bf16.mxu0 0
        %3075 = vmatpush1.bf16.xpose.msra.mxu0 %v3072
        %3076 = vmatprep.subr.bf16.mxu0 0
        %3077 = vmatpush1.bf16.xpose.msra.mxu0 0
        %3078 = vmatprep.subr.bf16.mxu0 0
        %3079 = vmatpush1.bf16.xpose.msra.mxu0 0
        %3080 = vmatprep.subr.bf16.mxu0 0
        %3081 = vmatpush1.bf16.xpose.msra.mxu0 0
        %3082 = vmatprep.subr.bf16.mxu0 0
        %3083 = vmatpush1.bf16.xpose.msra.mxu0 0
        %3084 = vmatprep.subr.bf16.mxu0 0
        %3085 = vmatpush1.bf16.xpose.msra.mxu0 0
        %3086 = vmatprep.subr.bf16.mxu0 0
        %3087 = vmatpush1.bf16.xpose.msra.mxu0 0
        %3088 = vmatprep.subr.bf16.mxu0 0
        %3089 = vmatpush1.bf16.xpose.msra.mxu0 0
        %3090 = vmatprep.subr.bf16.mxu0 0
        %3091 = vmatpush1.bf16.xpose.msra.mxu0 0
        %3092 = vmatprep.subr.bf16.mxu0 0
        %3093 = vmatpush1.bf16.xpose.msra.mxu0 0
        %3094 = vmatprep.subr.bf16.mxu0 0
        %3095 = vmatpush1.bf16.xpose.msra.mxu0 0
        %3096 = vmatprep.subr.bf16.mxu0 0
        %3097 = vmatpush1.bf16.xpose.msra.mxu0 0
        %3098 = vmatprep.subr.bf16.mxu0 0
        %3099 = vmatpush1.bf16.xpose.msra.mxu0 0
        %3100 = vmatprep.subr.bf16.mxu0 0
        %3101 = vmatpush1.bf16.xpose.msra.mxu0 0
        %3102 = vmatprep.subr.bf16.mxu0 0
        %3103 = vmatpush1.bf16.xpose.msra.mxu0 0
        %3104 = vmatprep.subr.bf16.mxu0 0
        %3105 = vmatpush1.bf16.xpose.msra.mxu0 0
        %3106 = vmatprep.mubr.bf16.mxu0 0
        %3107 = vmatmul.mubr.bf16.gmra.mrb[0].mxu0 %v3069
        %v3108 = vpop.f32.mrb[0].mxu0
        %v3109 = vadd.f32 0.0, %v3108
        %v3110 = vpop.f32.mrb[0].mxu0
        %v3111 = vpop.f32.mrb[0].mxu0
        %v3112 = vadd.f32 0.0, %v3111
        %v3113 = vpop.f32.mrb[0].mxu0
        %3114 = vdwg.mxu0
        %3115 = vrot.lane.b32.xlu0 %v1455, 104
        %v3116 = vpop.permute.xlu0 %3115
        %3117 = vrot.lane.b32.xlu0 %v1459, 104
        %v3118 = vpop.permute.xlu0 %3117
        %v3120 = vsel %vm1460, %v3116, 0
        %v3123 = vsel %vm1460, %v3118, 0
        %3125 = vmatprep.subr.bf16.mxu0 0
        %3126 = vmatpush1.bf16.xpose.msra.mxu0 %v3123
        %3127 = vmatprep.subr.bf16.mxu0 0
        %3128 = vmatpush1.bf16.xpose.msra.mxu0 0
        %3129 = vmatprep.subr.bf16.mxu0 0
        %3130 = vmatpush1.bf16.xpose.msra.mxu0 0
        %3131 = vmatprep.subr.bf16.mxu0 0
        %3132 = vmatpush1.bf16.xpose.msra.mxu0 0
        %3133 = vmatprep.subr.bf16.mxu0 0
        %3134 = vmatpush1.bf16.xpose.msra.mxu0 0
        %3135 = vmatprep.subr.bf16.mxu0 0
        %3136 = vmatpush1.bf16.xpose.msra.mxu0 0
        %3137 = vmatprep.subr.bf16.mxu0 0
        %3138 = vmatpush1.bf16.xpose.msra.mxu0 0
        %3139 = vmatprep.subr.bf16.mxu0 0
        %3140 = vmatpush1.bf16.xpose.msra.mxu0 0
        %3141 = vmatprep.subr.bf16.mxu0 0
        %3142 = vmatpush1.bf16.xpose.msra.mxu0 0
        %3143 = vmatprep.subr.bf16.mxu0 0
        %3144 = vmatpush1.bf16.xpose.msra.mxu0 0
        %3145 = vmatprep.subr.bf16.mxu0 0
        %3146 = vmatpush1.bf16.xpose.msra.mxu0 0
        %3147 = vmatprep.subr.bf16.mxu0 0
        %3148 = vmatpush1.bf16.xpose.msra.mxu0 0
        %3149 = vmatprep.subr.bf16.mxu0 0
        %3150 = vmatpush1.bf16.xpose.msra.mxu0 0
        %3151 = vmatprep.subr.bf16.mxu0 0
        %3152 = vmatpush1.bf16.xpose.msra.mxu0 0
        %3153 = vmatprep.subr.bf16.mxu0 0
        %3154 = vmatpush1.bf16.xpose.msra.mxu0 0
        %3155 = vmatprep.subr.bf16.mxu0 0
        %3156 = vmatpush1.bf16.xpose.msra.mxu0 0
        %3157 = vmatprep.mubr.bf16.mxu0 0
        %3158 = vmatmul.mubr.bf16.gmra.mrb[0].mxu0 %v3120
        %v3159 = vpop.f32.mrb[0].mxu0
        %v3160 = vadd.f32 0.0, %v3159
        %v3161 = vpop.f32.mrb[0].mxu0
        %v3162 = vpop.f32.mrb[0].mxu0
        %v3163 = vadd.f32 0.0, %v3162
        %v3164 = vpop.f32.mrb[0].mxu0
        %3165 = vdwg.mxu0
        %v3166 = vmul.f32 %v3007, 0.35355338
        %v3167 = vmul.f32 %v3010, 0.35355338
        %v3168 = vmul.f32 %v3058, 0.35355338
        %v3169 = vmul.f32 %v3061, 0.35355338
        %v3170 = vmul.f32 %v3109, 0.35355338
        %v3171 = vmul.f32 %v3112, 0.35355338
        %v3172 = vmul.f32 %v3160, 0.35355338
        %v3173 = vmul.f32 %v3163, 0.35355338
        %s3174 = scalar_lea.vmem [#allocation22], 48
        %v3175 = vld [vmem:[%s3174] sm:$0xff]
        %v3176 = vld [vmem:[%s3174 + $0x8] sm:$0xff]
        %v3177 = vadd.f32 %v3166, %v3175
        %v3178 = vadd.f32 %v3167, %v3176
        %v3179 = vadd.f32 %v3168, %v3175
        %v3180 = vadd.f32 %v3169, %v3176
        %v3181 = vadd.f32 %v3170, %v3175
        %v3182 = vadd.f32 %v3171, %v3176
        %v3183 = vadd.f32 %v3172, %v3175
        %v3184 = vadd.f32 %v3173, %v3176
        %v3185 = vsel %vm1667, %v3177, -inf
        %3186 = vmax.xlane.f32.xlu0 %v3185
        %v3187 = vpop.xlane.xlu0 %3186
        %v3188 = vsel %vm1667, %v3178, -inf
        %3189 = vmax.xlane.f32.xlu0 %v3188
        %v3190 = vpop.xlane.xlu0 %3189
        %v3191 = vsel %vm1667, %v3179, -inf
        %3192 = vmax.xlane.f32.xlu0 %v3191
        %v3193 = vpop.xlane.xlu0 %3192
        %v3194 = vsel %vm1667, %v3180, -inf
        %3195 = vmax.xlane.f32.xlu0 %v3194
        %v3196 = vpop.xlane.xlu0 %3195
        %v3197 = vsel %vm1667, %v3181, -inf
        %3198 = vmax.xlane.f32.xlu0 %v3197
        %v3199 = vpop.xlane.xlu0 %3198
        %v3200 = vsel %vm1667, %v3182, -inf
        %3201 = vmax.xlane.f32.xlu0 %v3200
        %v3202 = vpop.xlane.xlu0 %3201
        %v3203 = vsel %vm1667, %v3183, -inf
        %3204 = vmax.xlane.f32.xlu0 %v3203
        %v3205 = vpop.xlane.xlu0 %3204
        %v3206 = vsel %vm1667, %v3184, -inf
        %3207 = vmax.xlane.f32.xlu0 %v3206
        %v3208 = vpop.xlane.xlu0 %3207
        %v3209 = vsub.f32 %v3177, %v3187
        %v3210 = vsub.f32 %v3178, %v3190
        %v3211 = vsub.f32 %v3179, %v3193
        %v3212 = vsub.f32 %v3180, %v3196
        %v3213 = vsub.f32 %v3181, %v3199
        %v3214 = vsub.f32 %v3182, %v3202
        %v3215 = vsub.f32 %v3183, %v3205
        %v3216 = vsub.f32 %v3184, %v3208
        %v3217 = vmul.f32 %v3209, 1.442695
        %v3218 = vpow.pop %v3217
        %v3219 = vmul.f32 %v3210, 1.442695
        %v3220 = vpow.pop %v3219
        %v3221 = vmul.f32 %v3211, 1.442695
        %v3222 = vpow.pop %v3221
        %v3223 = vmul.f32 %v3212, 1.442695
        %v3224 = vpow.pop %v3223
        %v3225 = vmul.f32 %v3213, 1.442695
        %v3226 = vpow.pop %v3225
        %v3227 = vmul.f32 %v3214, 1.442695
        %v3228 = vpow.pop %v3227
        %v3229 = vmul.f32 %v3215, 1.442695
        %v3230 = vpow.pop %v3229
        %v3231 = vmul.f32 %v3216, 1.442695
        %v3232 = vpow.pop %v3231
        %v3233 = vsel %vm1667, %v3218, 0.0
        %3234 = vadd.xlane.f32.xlu0 %v3233
        %v3235 = vpop.xlane.xlu0 %3234
        %v3236 = vsel %vm1667, %v3220, 0.0
        %3237 = vadd.xlane.f32.xlu0 %v3236
        %v3238 = vpop.xlane.xlu0 %3237
        %v3239 = vsel %vm1667, %v3222, 0.0
        %3240 = vadd.xlane.f32.xlu0 %v3239
        %v3241 = vpop.xlane.xlu0 %3240
        %v3242 = vsel %vm1667, %v3224, 0.0
        %3243 = vadd.xlane.f32.xlu0 %v3242
        %v3244 = vpop.xlane.xlu0 %3243
        %v3245 = vsel %vm1667, %v3226, 0.0
        %3246 = vadd.xlane.f32.xlu0 %v3245
        %v3247 = vpop.xlane.xlu0 %3246
        %v3248 = vsel %vm1667, %v3228, 0.0
        %3249 = vadd.xlane.f32.xlu0 %v3248
        %v3250 = vpop.xlane.xlu0 %3249
        %v3251 = vsel %vm1667, %v3230, 0.0
        %3252 = vadd.xlane.f32.xlu0 %v3251
        %v3253 = vpop.xlane.xlu0 %3252
        %v3254 = vsel %vm1667, %v3232, 0.0
        %3255 = vadd.xlane.f32.xlu0 %v3254
        %v3256 = vpop.xlane.xlu0 %3255
        %v3257 = vrcp.pop %v3235
        %v3258 = vrcp.pop %v3238
        %v3259 = vrcp.pop %v3241
        %v3260 = vrcp.pop %v3244
        %v3261 = vrcp.pop %v3247
        %v3262 = vrcp.pop %v3250
        %v3263 = vrcp.pop %v3253
        %v3264 = vrcp.pop %v3256
        %v3265 = vmul.f32 %v3218, %v3257
        %v3266 = vmul.f32 %v3220, %v3258
        %v3267 = vmul.f32 %v3222, %v3259
        %v3268 = vmul.f32 %v3224, %v3260
        %v3269 = vmul.f32 %v3226, %v3261
        %v3270 = vmul.f32 %v3228, %v3262
        %v3271 = vmul.f32 %v3230, %v3263
        %v3272 = vmul.f32 %v3232, %v3264
        %v3273 = vpack.c.bf16 %v3266, %v3265
        %v3274 = vpack.c.bf16 %v3268, %v3267
        %v3275 = vpack.c.bf16 %v3270, %v3269
        %v3276 = vpack.c.bf16 %v3272, %v3271
        %3277 = vrot.lane.b32.xlu0 %v1456, 72
        %v3278 = vpop.permute.xlu0 %3277
        %v3281 = vsel %vm1667, %v3273, 0
        %3283 = vmatprep.subr.bf16.mxu0 0
        %3284 = vmatpush1.bf16.msra.mxu0 %v3278
        %3285 = vmatprep.subr.bf16.mxu0 0
        %3286 = vmatpush1.bf16.msra.mxu0 0
        %3287 = vmatprep.subr.bf16.mxu0 0
        %3288 = vmatpush1.bf16.msra.mxu0 0
        %3289 = vmatprep.subr.bf16.mxu0 0
        %3290 = vmatpush1.bf16.msra.mxu0 0
        %3291 = vmatprep.subr.bf16.mxu0 0
        %3292 = vmatpush1.bf16.msra.mxu0 0
        %3293 = vmatprep.subr.bf16.mxu0 0
        %3294 = vmatpush1.bf16.msra.mxu0 0
        %3295 = vmatprep.subr.bf16.mxu0 0
        %3296 = vmatpush1.bf16.msra.mxu0 0
        %3297 = vmatprep.subr.bf16.mxu0 0
        %3298 = vmatpush1.bf16.msra.mxu0 0
        %3299 = vmatprep.subr.bf16.mxu0 0
        %3300 = vmatpush1.bf16.msra.mxu0 0
        %3301 = vmatprep.subr.bf16.mxu0 0
        %3302 = vmatpush1.bf16.msra.mxu0 0
        %3303 = vmatprep.subr.bf16.mxu0 0
        %3304 = vmatpush1.bf16.msra.mxu0 0
        %3305 = vmatprep.subr.bf16.mxu0 0
        %3306 = vmatpush1.bf16.msra.mxu0 0
        %3307 = vmatprep.subr.bf16.mxu0 0
        %3308 = vmatpush1.bf16.msra.mxu0 0
        %3309 = vmatprep.subr.bf16.mxu0 0
        %3310 = vmatpush1.bf16.msra.mxu0 0
        %3311 = vmatprep.subr.bf16.mxu0 0
        %3312 = vmatpush1.bf16.msra.mxu0 0
        %3313 = vmatprep.subr.bf16.mxu0 0
        %3314 = vmatpush1.bf16.msra.mxu0 0
        %3315 = vmatprep.mubr.bf16.mxu0 0
        %3316 = vmatmul.mubr.bf16.gmra.mrb[0].mxu0 %v3281
        %v3317 = vpop.f32.mrb[0].mxu0
        %v3318 = vadd.f32 0.0, %v3317
        %v3319 = vpop.f32.mrb[0].mxu0
        %v3320 = vpop.f32.mrb[0].mxu0
        %v3321 = vadd.f32 0.0, %v3320
        %v3322 = vpop.f32.mrb[0].mxu0
        %3323 = vdwg.mxu0
        %3324 = vrot.lane.b32.xlu0 %v1457, 72
        %v3325 = vpop.permute.xlu0 %3324
        %v3328 = vsel %vm1667, %v3274, 0
        %3330 = vmatprep.subr.bf16.mxu0 0
        %3331 = vmatpush1.bf16.msra.mxu0 %v3325
        %3332 = vmatprep.subr.bf16.mxu0 0
        %3333 = vmatpush1.bf16.msra.mxu0 0
        %3334 = vmatprep.subr.bf16.mxu0 0
        %3335 = vmatpush1.bf16.msra.mxu0 0
        %3336 = vmatprep.subr.bf16.mxu0 0
        %3337 = vmatpush1.bf16.msra.mxu0 0
        %3338 = vmatprep.subr.bf16.mxu0 0
        %3339 = vmatpush1.bf16.msra.mxu0 0
        %3340 = vmatprep.subr.bf16.mxu0 0
        %3341 = vmatpush1.bf16.msra.mxu0 0
        %3342 = vmatprep.subr.bf16.mxu0 0
        %3343 = vmatpush1.bf16.msra.mxu0 0
        %3344 = vmatprep.subr.bf16.mxu0 0
        %3345 = vmatpush1.bf16.msra.mxu0 0
        %3346 = vmatprep.subr.bf16.mxu0 0
        %3347 = vmatpush1.bf16.msra.mxu0 0
        %3348 = vmatprep.subr.bf16.mxu0 0
        %3349 = vmatpush1.bf16.msra.mxu0 0
        %3350 = vmatprep.subr.bf16.mxu0 0
        %3351 = vmatpush1.bf16.msra.mxu0 0
        %3352 = vmatprep.subr.bf16.mxu0 0
        %3353 = vmatpush1.bf16.msra.mxu0 0
        %3354 = vmatprep.subr.bf16.mxu0 0
        %3355 = vmatpush1.bf16.msra.mxu0 0
        %3356 = vmatprep.subr.bf16.mxu0 0
        %3357 = vmatpush1.bf16.msra.mxu0 0
        %3358 = vmatprep.subr.bf16.mxu0 0
        %3359 = vmatpush1.bf16.msra.mxu0 0
        %3360 = vmatprep.subr.bf16.mxu0 0
        %3361 = vmatpush1.bf16.msra.mxu0 0
        %3362 = vmatprep.mubr.bf16.mxu0 0
        %3363 = vmatmul.mubr.bf16.gmra.mrb[0].mxu0 %v3328
        %v3364 = vpop.f32.mrb[0].mxu0
        %v3365 = vadd.f32 0.0, %v3364
        %v3366 = vpop.f32.mrb[0].mxu0
        %v3367 = vpop.f32.mrb[0].mxu0
        %v3368 = vadd.f32 0.0, %v3367
        %v3369 = vpop.f32.mrb[0].mxu0
        %3370 = vdwg.mxu0
        %3371 = vrot.lane.b32.xlu0 %v1458, 72
        %v3372 = vpop.permute.xlu0 %3371
        %v3375 = vsel %vm1667, %v3275, 0
        %3377 = vmatprep.subr.bf16.mxu0 0
        %3378 = vmatpush1.bf16.msra.mxu0 %v3372
        %3379 = vmatprep.subr.bf16.mxu0 0
        %3380 = vmatpush1.bf16.msra.mxu0 0
        %3381 = vmatprep.subr.bf16.mxu0 0
        %3382 = vmatpush1.bf16.msra.mxu0 0
        %3383 = vmatprep.subr.bf16.mxu0 0
        %3384 = vmatpush1.bf16.msra.mxu0 0
        %3385 = vmatprep.subr.bf16.mxu0 0
        %3386 = vmatpush1.bf16.msra.mxu0 0
        %3387 = vmatprep.subr.bf16.mxu0 0
        %3388 = vmatpush1.bf16.msra.mxu0 0
        %3389 = vmatprep.subr.bf16.mxu0 0
        %3390 = vmatpush1.bf16.msra.mxu0 0
        %3391 = vmatprep.subr.bf16.mxu0 0
        %3392 = vmatpush1.bf16.msra.mxu0 0
        %3393 = vmatprep.subr.bf16.mxu0 0
        %3394 = vmatpush1.bf16.msra.mxu0 0
        %3395 = vmatprep.subr.bf16.mxu0 0
        %3396 = vmatpush1.bf16.msra.mxu0 0
        %3397 = vmatprep.subr.bf16.mxu0 0
        %3398 = vmatpush1.bf16.msra.mxu0 0
        %3399 = vmatprep.subr.bf16.mxu0 0
        %3400 = vmatpush1.bf16.msra.mxu0 0
        %3401 = vmatprep.subr.bf16.mxu0 0
        %3402 = vmatpush1.bf16.msra.mxu0 0
        %3403 = vmatprep.subr.bf16.mxu0 0
        %3404 = vmatpush1.bf16.msra.mxu0 0
        %3405 = vmatprep.subr.bf16.mxu0 0
        %3406 = vmatpush1.bf16.msra.mxu0 0
        %3407 = vmatprep.subr.bf16.mxu0 0
        %3408 = vmatpush1.bf16.msra.mxu0 0
        %3409 = vmatprep.mubr.bf16.mxu0 0
        %3410 = vmatmul.mubr.bf16.gmra.mrb[0].mxu0 %v3375
        %v3411 = vpop.f32.mrb[0].mxu0
        %v3412 = vadd.f32 0.0, %v3411
        %v3413 = vpop.f32.mrb[0].mxu0
        %v3414 = vpop.f32.mrb[0].mxu0
        %v3415 = vadd.f32 0.0, %v3414
        %v3416 = vpop.f32.mrb[0].mxu0
        %3417 = vdwg.mxu0
        %3418 = vrot.lane.b32.xlu0 %v1459, 72
        %v3419 = vpop.permute.xlu0 %3418
        %v3422 = vsel %vm1667, %v3276, 0
        %3424 = vmatprep.subr.bf16.mxu0 0
        %3425 = vmatpush1.bf16.msra.mxu0 %v3419
        %3426 = vmatprep.subr.bf16.mxu0 0
        %3427 = vmatpush1.bf16.msra.mxu0 0
        %3428 = vmatprep.subr.bf16.mxu0 0
        %3429 = vmatpush1.bf16.msra.mxu0 0
        %3430 = vmatprep.subr.bf16.mxu0 0
        %3431 = vmatpush1.bf16.msra.mxu0 0
        %3432 = vmatprep.subr.bf16.mxu0 0
        %3433 = vmatpush1.bf16.msra.mxu0 0
        %3434 = vmatprep.subr.bf16.mxu0 0
        %3435 = vmatpush1.bf16.msra.mxu0 0
        %3436 = vmatprep.subr.bf16.mxu0 0
        %3437 = vmatpush1.bf16.msra.mxu0 0
        %3438 = vmatprep.subr.bf16.mxu0 0
        %3439 = vmatpush1.bf16.msra.mxu0 0
        %3440 = vmatprep.subr.bf16.mxu0 0
        %3441 = vmatpush1.bf16.msra.mxu0 0
        %3442 = vmatprep.subr.bf16.mxu0 0
        %3443 = vmatpush1.bf16.msra.mxu0 0
        %3444 = vmatprep.subr.bf16.mxu0 0
        %3445 = vmatpush1.bf16.msra.mxu0 0
        %3446 = vmatprep.subr.bf16.mxu0 0
        %3447 = vmatpush1.bf16.msra.mxu0 0
        %3448 = vmatprep.subr.bf16.mxu0 0
        %3449 = vmatpush1.bf16.msra.mxu0 0
        %3450 = vmatprep.subr.bf16.mxu0 0
        %3451 = vmatpush1.bf16.msra.mxu0 0
        %3452 = vmatprep.subr.bf16.mxu0 0
        %3453 = vmatpush1.bf16.msra.mxu0 0
        %3454 = vmatprep.subr.bf16.mxu0 0
        %3455 = vmatpush1.bf16.msra.mxu0 0
        %3456 = vmatprep.mubr.bf16.mxu0 0
        %3457 = vmatmul.mubr.bf16.gmra.mrb[0].mxu0 %v3422
        %v3458 = vpop.f32.mrb[0].mxu0
        %v3459 = vadd.f32 0.0, %v3458
        %v3460 = vpop.f32.mrb[0].mxu0
        %v3461 = vpop.f32.mrb[0].mxu0
        %v3462 = vadd.f32 0.0, %v3461
        %v3463 = vpop.f32.mrb[0].mxu0
        %3464 = vdwg.mxu0
        %3473 = vrot.lane.b32.xlu0 %v2312, 8
        %v3474 = vpop.permute.xlu0 %3473
        %3475 = vrot.lane.b32.xlu0 %v2315, 8
        %v3476 = vpop.permute.xlu0 %3475
        %3477 = vrot.lane.b32.xlu0 %v2359, 8
        %v3478 = vpop.permute.xlu0 %3477
        %3479 = vrot.lane.b32.xlu0 %v2362, 8
        %v3480 = vpop.permute.xlu0 %3479
        %3481 = vrot.lane.b32.xlu0 %v2406, 8
        %v3482 = vpop.permute.xlu0 %3481
        %3483 = vrot.lane.b32.xlu0 %v2409, 8
        %v3484 = vpop.permute.xlu0 %3483
        %3485 = vrot.lane.b32.xlu0 %v2453, 8
        %v3486 = vpop.permute.xlu0 %3485
        %3487 = vrot.lane.b32.xlu0 %v2456, 8
        %v3488 = vpop.permute.xlu0 %3487
        %3505 = vrot.lane.b32.xlu0 %v2815, 16
        %v3506 = vpop.permute.xlu0 %3505
        %3507 = vrot.lane.b32.xlu0 %v2818, 16
        %v3508 = vpop.permute.xlu0 %3507
        %3509 = vrot.lane.b32.xlu0 %v2862, 16
        %v3510 = vpop.permute.xlu0 %3509
        %3511 = vrot.lane.b32.xlu0 %v2865, 16
        %v3512 = vpop.permute.xlu0 %3511
        %3513 = vrot.lane.b32.xlu0 %v2909, 16
        %v3514 = vpop.permute.xlu0 %3513
        %3515 = vrot.lane.b32.xlu0 %v2912, 16
        %v3516 = vpop.permute.xlu0 %3515
        %3517 = vrot.lane.b32.xlu0 %v2956, 16
        %v3518 = vpop.permute.xlu0 %3517
        %3519 = vrot.lane.b32.xlu0 %v2959, 16
        %v3520 = vpop.permute.xlu0 %3519
        %3537 = vrot.lane.b32.xlu0 %v3318, 24
        %v3538 = vpop.permute.xlu0 %3537
        %3539 = vrot.lane.b32.xlu0 %v3321, 24
        %v3540 = vpop.permute.xlu0 %3539
        %3541 = vrot.lane.b32.xlu0 %v3365, 24
        %v3542 = vpop.permute.xlu0 %3541
        %3543 = vrot.lane.b32.xlu0 %v3368, 24
        %v3544 = vpop.permute.xlu0 %3543
        %3545 = vrot.lane.b32.xlu0 %v3412, 24
        %v3546 = vpop.permute.xlu0 %3545
        %3547 = vrot.lane.b32.xlu0 %v3415, 24
        %v3548 = vpop.permute.xlu0 %3547
        %3549 = vrot.lane.b32.xlu0 %v3459, 24
        %v3550 = vpop.permute.xlu0 %3549
        %3551 = vrot.lane.b32.xlu0 %v3462, 24
        %v3552 = vpop.permute.xlu0 %3551
        %v3561 = vsel %vm1460, %v1802, %v3474
        %v3562 = vsel %vm1460, %v1805, %v3476
        %v3563 = vsel %vm1460, %v1850, %v3478
        %v3564 = vsel %vm1460, %v1853, %v3480
        %v3565 = vsel %vm1460, %v1898, %v3482
        %v3566 = vsel %vm1460, %v1901, %v3484
        %v3567 = vsel %vm1460, %v1946, %v3486
        %v3568 = vsel %vm1460, %v1949, %v3488
        %v3569 = vsel %vm1667, %v3561, %v3506
        %v3570 = vsel %vm1667, %v3562, %v3508
        %v3571 = vsel %vm1667, %v3563, %v3510
        %v3572 = vsel %vm1667, %v3564, %v3512
        %v3573 = vsel %vm1667, %v3565, %v3514
        %v3574 = vsel %vm1667, %v3566, %v3516
        %v3575 = vsel %vm1667, %v3567, %v3518
        %v3576 = vsel %vm1667, %v3568, %v3520
        %vm3577 = vcmask 195584
        %v3578 = vsel %vm3577, %v3569, %v3538
        %v3579 = vsel %vm3577, %v3570, %v3540
        %v3580 = vsel %vm3577, %v3571, %v3542
        %v3581 = vsel %vm3577, %v3572, %v3544
        %v3582 = vsel %vm3577, %v3573, %v3546
        %v3583 = vsel %vm3577, %v3574, %v3548
        %v3584 = vsel %vm3577, %v3575, %v3550
        %v3585 = vsel %vm3577, %v3576, %v3552
        %v3586 = vpack.c.bf16 %v3579, %v3578
        %v3587 = vpack.c.bf16 %v3581, %v3580
        %v3588 = vpack.c.bf16 %v3583, %v3582
        %v3589 = vpack.c.bf16 %v3585, %v3584
        %v3590 = vld [vmem:[#allocation19] sm:$0xf]
        %v3591 = vld [vmem:[#allocation19 + $0x4] sm:$0xf]
        %v3592 = vld [vmem:[#allocation19 + $0x8] sm:$0xf]
        %v3593 = vld [vmem:[#allocation19 + $0xc] sm:$0xf]
        %v3594 = vld [vmem:[#allocation20] sm:$0x1]
        %v3596 = vlaneseq
        %v3597 = vshrl.u32 %v3596, 7
        %v3598 = vsub.s32 0, %v3597
        %v3599 = vrot.slane %v3594, %v3598
        %v3605 = vunpack.c.l.b16 %v3590
        %v3606 = vunpack.c.l.b16 %v3591
        %v3607 = vunpack.c.l.b16 %v3592
        %v3608 = vunpack.c.l.b16 %v3593
        %v3609 = vpack.c.b16 %v3606, %v3605
        %v3610 = vpack.c.b16 %v3608, %v3607
        %v3614 = vsel %vm678, %v3586, 0
        %v3617 = vsel %vm678, %v3587, 0
        %v3620 = vsel %vm678, %v3588, 0
        %v3623 = vsel %vm678, %v3589, 0
        %3625 = vmatprep.subr.bf16.mxu0 0
        %3626 = vmatpush1.bf16.msra.mxu0 %v3609
        %3627 = vmatprep.subr.bf16.mxu0 0
        %3628 = vmatpush1.bf16.msra.mxu0 %v3610
        %3629 = vmatprep.subr.bf16.mxu0 0
        %3630 = vmatpush1.bf16.msra.mxu0 0
        %3631 = vmatprep.subr.bf16.mxu0 0
        %3632 = vmatpush1.bf16.msra.mxu0 0
        %3633 = vmatprep.subr.bf16.mxu0 0
        %3634 = vmatpush1.bf16.msra.mxu0 0
        %3635 = vmatprep.subr.bf16.mxu0 0
        %3636 = vmatpush1.bf16.msra.mxu0 0
        %3637 = vmatprep.subr.bf16.mxu0 0
        %3638 = vmatpush1.bf16.msra.mxu0 0
        %3639 = vmatprep.subr.bf16.mxu0 0
        %3640 = vmatpush1.bf16.msra.mxu0 0
        %3641 = vmatprep.subr.bf16.mxu0 0
        %3642 = vmatpush1.bf16.msra.mxu0 0
        %3643 = vmatprep.subr.bf16.mxu0 0
        %3644 = vmatpush1.bf16.msra.mxu0 0
        %3645 = vmatprep.subr.bf16.mxu0 0
        %3646 = vmatpush1.bf16.msra.mxu0 0
        %3647 = vmatprep.subr.bf16.mxu0 0
        %3648 = vmatpush1.bf16.msra.mxu0 0
        %3649 = vmatprep.subr.bf16.mxu0 0
        %3650 = vmatpush1.bf16.msra.mxu0 0
        %3651 = vmatprep.subr.bf16.mxu0 0
        %3652 = vmatpush1.bf16.msra.mxu0 0
        %3653 = vmatprep.subr.bf16.mxu0 0
        %3654 = vmatpush1.bf16.msra.mxu0 0
        %3655 = vmatprep.subr.bf16.mxu0 0
        %3656 = vmatpush1.bf16.msra.mxu0 0
        %3657 = vmatprep.mubr.bf16.mxu0 0
        %3658 = vmatmul.mubr.bf16.gmra.mrb[0].mxu0 %v3614
        %v3659 = vpop.f32.mrb[0].mxu0
        %v3660 = vadd.f32 %v3599, %v3659
        %v3661 = vpop.f32.mrb[0].mxu0
        %v3662 = vpop.f32.mrb[0].mxu0
        %v3663 = vadd.f32 %v3599, %v3662
        %v3664 = vpop.f32.mrb[0].mxu0
        %3665 = vmatprep.mubr.bf16.mxu0 0
        %3666 = vmatmul.mubr.bf16.gmra.mrb[0].mxu0 %v3617
        %v3667 = vpop.f32.mrb[0].mxu0
        %v3668 = vadd.f32 %v3599, %v3667
        %v3669 = vpop.f32.mrb[0].mxu0
        %v3670 = vpop.f32.mrb[0].mxu0
        %v3671 = vadd.f32 %v3599, %v3670
        %v3672 = vpop.f32.mrb[0].mxu0
        %3673 = vmatprep.mubr.bf16.mxu0 0
        %3674 = vmatmul.mubr.bf16.gmra.mrb[0].mxu0 %v3620
        %v3675 = vpop.f32.mrb[0].mxu0
        %v3676 = vadd.f32 %v3599, %v3675
        %v3677 = vpop.f32.mrb[0].mxu0
        %v3678 = vpop.f32.mrb[0].mxu0
        %v3679 = vadd.f32 %v3599, %v3678
        %v3680 = vpop.f32.mrb[0].mxu0
        %3681 = vmatprep.mubr.bf16.mxu0 0
        %3682 = vmatmul.mubr.bf16.gmra.mrb[0].mxu0 %v3623
        %v3683 = vpop.f32.mrb[0].mxu0
        %v3684 = vadd.f32 %v3599, %v3683
        %v3685 = vpop.f32.mrb[0].mxu0
        %v3686 = vpop.f32.mrb[0].mxu0
        %v3687 = vadd.f32 %v3599, %v3686
        %v3688 = vpop.f32.mrb[0].mxu0
        %3689 = vdwg.mxu0
        %v3690 = vpack.c.bf16 %v3663, %v3660
        %v3691 = vpack.c.bf16 %v3671, %v3668
        %v3692 = vpack.c.bf16 %v3679, %v3676
        %v3693 = vpack.c.bf16 %v3687, %v3684
        %v3698 = vcombine.high %v3690, %v3690
        %v3700 = vunpack.c.l.s4 1983009808
        %v3701 = vunpack.c.0.s8 %v3700
        %v3702 = vlaneseq
        %v3703 = vshrl.u32 %v3702, 7
        %v3704 = vsub.s32 %v3701, %v3703
        %v3705 = vrot.slane %v3690, %v3704
        %v3707 = vunpack.c.l.s4 1983009808
        %v3708 = vunpack.c.0.s8 %v3707
        %v3709 = vlaneseq
        %v3710 = vshrl.u32 %v3709, 7
        %v3711 = vsub.s32 %v3708, %v3710
        %v3712 = vrot.slane %v3698, %v3711
        %v3713 = vcombine.high %v3705, %v3705
        %v3714 = vcombine.high %v3712, %v3712
        %v3715 = vcombine.high %v3691, %v3691
        %v3717 = vunpack.c.l.s4 1983009808
        %v3718 = vunpack.c.0.s8 %v3717
        %v3719 = vlaneseq
        %v3720 = vshrl.u32 %v3719, 7
        %v3721 = vsub.s32 %v3718, %v3720
        %v3722 = vrot.slane %v3691, %v3721
        %v3724 = vunpack.c.l.s4 1983009808
        %v3725 = vunpack.c.0.s8 %v3724
        %v3726 = vlaneseq
        %v3727 = vshrl.u32 %v3726, 7
        %v3728 = vsub.s32 %v3725, %v3727
        %v3729 = vrot.slane %v3715, %v3728
        %v3730 = vcombine.high %v3722, %v3722
        %v3731 = vcombine.high %v3729, %v3729
        %v3732 = vcombine.high %v3692, %v3692
        %v3734 = vunpack.c.l.s4 1983009808
        %v3735 = vunpack.c.0.s8 %v3734
        %v3736 = vlaneseq
        %v3737 = vshrl.u32 %v3736, 7
        %v3738 = vsub.s32 %v3735, %v3737
        %v3739 = vrot.slane %v3692, %v3738
        %v3741 = vunpack.c.l.s4 1983009808
        %v3742 = vunpack.c.0.s8 %v3741
        %v3743 = vlaneseq
        %v3744 = vshrl.u32 %v3743, 7
        %v3745 = vsub.s32 %v3742, %v3744
        %v3746 = vrot.slane %v3732, %v3745
        %v3747 = vcombine.high %v3739, %v3739
        %v3748 = vcombine.high %v3746, %v3746
        %v3749 = vcombine.high %v3693, %v3693
        %v3751 = vunpack.c.l.s4 1983009808
        %v3752 = vunpack.c.0.s8 %v3751
        %v3753 = vlaneseq
        %v3754 = vshrl.u32 %v3753, 7
        %v3755 = vsub.s32 %v3752, %v3754
        %v3756 = vrot.slane %v3693, %v3755
        %v3758 = vunpack.c.l.s4 1983009808
        %v3759 = vunpack.c.0.s8 %v3758
        %v3760 = vlaneseq
        %v3761 = vshrl.u32 %v3760, 7
        %v3762 = vsub.s32 %v3759, %v3761
        %v3763 = vrot.slane %v3749, %v3762
        %v3764 = vcombine.high %v3756, %v3756
        %v3765 = vcombine.high %v3763, %v3763
        %v3766 = vcombine.low %v3722, %v3722
        %v3768 = vunpack.c.l.s4 1983009808
        %v3769 = vunpack.c.0.s8 %v3768
        %v3770 = vlaneseq
        %v3771 = vshrl.u32 %v3770, 7
        %v3772 = vsub.s32 %v3769, %v3771
        %v3773 = vrot.slane %v3766, %v3772
        %v3774 = vcombine.low %v3730, %v3730
        %v3776 = vunpack.c.l.s4 1983009808
        %v3777 = vunpack.c.0.s8 %v3776
        %v3778 = vlaneseq
        %v3779 = vshrl.u32 %v3778, 7
        %v3780 = vsub.s32 %v3777, %v3779
        %v3781 = vrot.slane %v3774, %v3780
        %v3782 = vcombine.low %v3729, %v3729
        %v3784 = vunpack.c.l.s4 1983009808
        %v3785 = vunpack.c.0.s8 %v3784
        %v3786 = vlaneseq
        %v3787 = vshrl.u32 %v3786, 7
        %v3788 = vsub.s32 %v3785, %v3787
        %v3789 = vrot.slane %v3782, %v3788
        %v3790 = vcombine.low %v3731, %v3731
        %v3792 = vunpack.c.l.s4 1983009808
        %v3793 = vunpack.c.0.s8 %v3792
        %v3794 = vlaneseq
        %v3795 = vshrl.u32 %v3794, 7
        %v3796 = vsub.s32 %v3793, %v3795
        %v3797 = vrot.slane %v3790, %v3796
        %vm3798 = vcmask 1041408
        %v3801 = vsel %vm3798, %v3705, %v3773
        %v3805 = vsel %vm3798, %v3713, %v3781
        %v3809 = vsel %vm3798, %v3712, %v3789
        %v3813 = vsel %vm3798, %v3714, %v3797
        %v3815 = vcombine.low %v3756, %v3756
        %v3817 = vunpack.c.l.s4 1983009808
        %v3818 = vunpack.c.0.s8 %v3817
        %v3819 = vlaneseq
        %v3820 = vshrl.u32 %v3819, 7
        %v3821 = vsub.s32 %v3818, %v3820
        %v3822 = vrot.slane %v3815, %v3821
        %v3823 = vcombine.low %v3764, %v3764
        %v3825 = vunpack.c.l.s4 1983009808
        %v3826 = vunpack.c.0.s8 %v3825
        %v3827 = vlaneseq
        %v3828 = vshrl.u32 %v3827, 7
        %v3829 = vsub.s32 %v3826, %v3828
        %v3830 = vrot.slane %v3823, %v3829
        %v3831 = vcombine.low %v3763, %v3763
        %v3833 = vunpack.c.l.s4 1983009808
        %v3834 = vunpack.c.0.s8 %v3833
        %v3835 = vlaneseq
        %v3836 = vshrl.u32 %v3835, 7
        %v3837 = vsub.s32 %v3834, %v3836
        %v3838 = vrot.slane %v3831, %v3837
        %v3839 = vcombine.low %v3765, %v3765
        %v3841 = vunpack.c.l.s4 1983009808
        %v3842 = vunpack.c.0.s8 %v3841
        %v3843 = vlaneseq
        %v3844 = vshrl.u32 %v3843, 7
        %v3845 = vsub.s32 %v3842, %v3844
        %v3846 = vrot.slane %v3839, %v3845
        %v3849 = vsel %vm3798, %v3739, %v3822
        %v3853 = vsel %vm3798, %v3747, %v3830
        %v3857 = vsel %vm3798, %v3746, %v3838
        %v3861 = vsel %vm3798, %v3748, %v3846
        %v3863 = vld [vmem:[%s565] sm:$0xff]
        %v3864 = vld [vmem:[%s565 + $0x8] sm:$0xff]
        %v3865 = vld [vmem:[%s565 + $0x10] sm:$0xff]
        %v3866 = vld [vmem:[%s565 + $0x18] sm:$0xff]
        %v3867 = vld [vmem:[%s565 + $0x20] sm:$0xff]
        %v3868 = vld [vmem:[%s565 + $0x28] sm:$0xff]
        %v3869 = vld [vmem:[%s565 + $0x30] sm:$0xff]
        %v3870 = vld [vmem:[%s565 + $0x38] sm:$0xff]
        %v3871 = vunpack.c.l.bf16 %v3801
        %v3872 = vunpack.c.l.bf16 %v3805
        %v3873 = vunpack.c.l.bf16 %v3809
        %v3874 = vunpack.c.l.bf16 %v3813
        %v3875 = vunpack.c.l.bf16 %v3849
        %v3876 = vunpack.c.l.bf16 %v3853
        %v3877 = vunpack.c.l.bf16 %v3857
        %v3878 = vunpack.c.l.bf16 %v3861
        %v3879 = vadd.f32 %v3863, %v3871
        %v3880 = vadd.f32 %v3864, %v3872
        %v3881 = vadd.f32 %v3865, %v3873
        %v3882 = vadd.f32 %v3866, %v3874
        %v3883 = vadd.f32 %v3867, %v3875
        %v3884 = vadd.f32 %v3868, %v3876
        %v3885 = vadd.f32 %v3869, %v3877
        %v3886 = vadd.f32 %v3870, %v3878
        %v3887 = vpack.c.bf16 %v3879, %v3879
        %v3888 = vpack.c.bf16 %v3880, %v3880
        %v3889 = vpack.c.bf16 %v3881, %v3881
        %v3890 = vpack.c.bf16 %v3882, %v3882
        %v3891 = vpack.c.bf16 %v3883, %v3883
        %v3892 = vpack.c.bf16 %v3884, %v3884
        %v3893 = vpack.c.bf16 %v3885, %v3885
        %v3894 = vpack.c.bf16 %v3886, %v3886
        %vm3895 = vcmask 257024
        %3896 = vst.msk [vmem:[%s665] sm:$0xf] %vm3895, %v3887
        %3897 = vst.msk [vmem:[%s665 + $0x4] sm:$0xf] %vm3895, %v3888
        %3898 = vst.msk [vmem:[%s665 + $0x8] sm:$0xf] %vm3895, %v3889
        %3899 = vst.msk [vmem:[%s665 + $0xc] sm:$0xf] %vm3895, %v3890
        %3900 = vst.msk [vmem:[%s665 + $0x10] sm:$0xf] %vm3895, %v3891
        %3901 = vst.msk [vmem:[%s665 + $0x14] sm:$0xf] %vm3895, %v3892
        %3902 = vst.msk [vmem:[%s665 + $0x18] sm:$0xf] %vm3895, %v3893
        %3903 = vst.msk [vmem:[%s665 + $0x1c] sm:$0xf] %vm3895, %v3894
        %s3904 = sand.u32 %s347, 1
        %s3905 = scalar_lea.sflag [#allocation4], %s3904
        %s3906 = sand.u32 %s347, 1
        %s3907 = smul.addr %s3906, 32
        %s3908 = scalar_lea.vmem [#allocation23], %s3907
        // Predicated region
        $region125: #{tpu_custom_call.1} parent=71 // pred_check
          %p3909 = pneg %p357
        $region126: #{tpu_custom_call.1} parent=71 // pred_check_branch
          %3911 = sbr.rel (%p3909) target = $region128
        $region127: #{tpu_custom_call.1} parent=71 // pred_region
          %s3912 = smul.u32 8, %s43
          %s3914 = ssub.s32 512, 512
          %3915 = vsyncadd %s3905, %s3914
          %s3916 = smul.addr %s42, 8
          %s3917 = sadd.s32 %s3912, %s3916
          %s3918 = smul.addr %s3917, 64
          %s3919 = scalar_lea.hbm %s13, %s3918
          %s3920 = sshll.u32 %s3908, 4
          %s3921 = int_to_ptr.vmem [resolvable:$true] %s3920
          %3926 = dma.vmem_to_hbm [thread:$0]  %s3921, 512, %s3919, %s3905, 64, 64, 4
        $region128: #{tpu_custom_call.1} parent=71 // pred_fallthru
          _
      $region72: #{tpu_custom_call.1} parent=5 // pred_fallthru
        _
      %p3927 = scmp.le.s32.totalorder 2, %s33
      // Predicated region
      $region129: #{tpu_custom_call.1} parent=5 // pred_check
        %p3928 = pneg %p3927
      $region130: #{tpu_custom_call.1} parent=5 // pred_check_branch
        %3930 = sbr.rel (%p3928) target = $region132
      $region131: #{tpu_custom_call.1} parent=5 // pred_region
        %s3931 = ssub.s32 %s33, 2
        // Predicated region
        $region133: #{tpu_custom_call.1} parent=131 // pred_check
          %p3932 = pneg %p363
        $region134: #{tpu_custom_call.1} parent=131 // pred_check_branch
          %3934 = sbr.rel (%p3932) target = $region136
        $region135: #{tpu_custom_call.1} parent=131 // pred_region
          %s3935 = sand.u32 %s348, 1
          %s3936 = scalar_lea.sflag [#allocation4], %s3935
          %s3937 = sand.u32 %s348, 1
          %s3938 = smul.addr %s3937, 32
          %s3939 = scalar_lea.vmem [#allocation23], %s3938
          %3940 = dma.done %s3936, 512
        $region136: #{tpu_custom_call.1} parent=131 // pred_fallthru
          _
      $region132: #{tpu_custom_call.1} parent=5 // pred_fallthru
        _
    $region6: #{tpu_custom_call.1} parent=1 // loop_footer
      %s37 = sadd.s32 1, %s33
    $region7: #{tpu_custom_call.1} parent=1 // loop_footer_branch
      %32 = sbr.rel target = $region3
    $region8: #{tpu_custom_call.1} parent=1 // loop_exit
      _
    %3941 = vsyncpa [#allocation3], 1
    %s3942 = scalar_lea.sflag [#allocation3], 1
    %3943 = vsyncpa %s3942, 1
    %3944 = vsyncpa [#allocation6], 1
    %s3945 = scalar_lea.sflag [#allocation6], 1
    %3946 = vsyncpa %s3945, 1
    %3947 = vsyncpa [#allocation9], 1
    %3948 = vsyncpa [#allocation12], 1
    %3949 = vsyncpa [#allocation15], 1
    %3950 = vsyncpa [#allocation18], 1
    %3951 = vsyncpa [#allocation21], 1
    %3952 = vsyncpa [#allocation4], 1
    %s3953 = scalar_lea.sflag [#allocation4], 1
    %3954 = vsyncpa %s3953, 1

</llo_original>
